<compile_context>
chip_gen: v7x
topology: tpu7x:2x2x1
jax: 0.10.0
libtpu: 0.0.40
codegen_flags: <defaults>
</compile_context>

<pallas_src>
import functools

import jax
import jax.numpy as jnp
from jax.experimental import pallas as pl
from jax.experimental.pallas import tpu as pltpu

# ----- model hyper-parameters (small, GPT-2-shaped) -----
N_LAYER = 2
N_HEAD = 4
N_EMBD = 32
N_POS = 32
VOCAB = 128
LN_EPS = 1e-5


# ---------------- fused forward kernel ----------------

def _gpt2_fwd_kernel(
    emb_ref, mask_ref,
    ln1_g_ref, ln1_b_ref, c_attn_w_ref, c_attn_b_ref,
    c_proj_w_ref, c_proj_b_ref,
    ln2_g_ref, ln2_b_ref, fc_w_ref, fc_b_ref,
    proj_w_ref, proj_b_ref,
    lnf_g_ref, lnf_b_ref, wte_t_ref,
    hidden_ref, logits_ref,
    *, n_layer, n_head, eps,
):
    h = emb_ref[...].astype(jnp.float32)                     # (B*S, D)
    B, S = mask_ref.shape
    D = h.shape[-1]
    hd = D // n_head
    scale = 1.0 / (hd ** 0.5)

    # --- masks: built ONCE, reused across layers (and all heads) ---
    row = jax.lax.broadcasted_iota(jnp.int32, (S, S), 0)
    col = jax.lax.broadcasted_iota(jnp.int32, (S, S), 1)
    causal = row >= col                                      # (S, S)
    mask_f = mask_ref[...]                                   # (B, S) float
    allowed_parts = []
    for b in range(B):                                       # static
        pad_b = mask_f[b:b + 1, :] > 0.5                     # (1, S) key mask
        allowed_b = jnp.logical_and(causal, pad_b)           # (S, S)
        for _ in range(n_head):
            allowed_parts.append(allowed_b)
    allowed = jnp.stack(allowed_parts, axis=0)               # (B*n_head, S, S)
    neg = jnp.float32(-1e30)                                 # finite -> no -inf/NaN

    def layernorm(x, g, b):
        mu = jnp.mean(x, axis=-1, keepdims=True)
        var = jnp.mean(jnp.square(x - mu), axis=-1, keepdims=True)
        return (x - mu) * jax.lax.rsqrt(var + eps) * g + b

    for l in range(n_layer):                                 # unrolled (static)
        # --- self-attention block ---
        a = layernorm(h, ln1_g_ref[l], ln1_b_ref[l])
        qkv = jnp.dot(a, c_attn_w_ref[l],
                      preferred_element_type=jnp.float32) + c_attn_b_ref[l]   # (B*S, 3D)

        # batch + head batched attention: stack heads into (B*n_head, S, hd)
        q_parts, k_parts, v_parts = [], [], []
        for b in range(B):                                   # static slices only
            r0, r1 = b * S, (b + 1) * S
            for hh in range(n_head):
                c0 = hh * hd
                q_parts.append(qkv[r0:r1, c0:c0 + hd])
                k_parts.append(qkv[r0:r1, D + c0:D + c0 + hd])
                v_parts.append(qkv[r0:r1, 2 * D + c0:2 * D + c0 + hd])
        q = jnp.stack(q_parts, axis=0)                       # (B*n_head, S, hd)
        k = jnp.stack(k_parts, axis=0)
        v = jnp.stack(v_parts, axis=0)

        scores = jnp.einsum('bqd,bkd->bqk', q, k,
                            preferred_element_type=jnp.float32) * scale       # (BH, S, S)
        scores = jnp.where(allowed, scores, neg)             # single combined mask
        scores = scores - jnp.max(scores, axis=-1, keepdims=True)
        p = jnp.exp(scores)
        p = p * pl.reciprocal(jnp.sum(p, axis=-1, keepdims=True), approx=True)
        ctx = jnp.einsum('bqk,bkd->bqd', p, v,
                         preferred_element_type=jnp.float32)                  # (BH, S, hd)

        # rebuild (B*S, D): lane-concat heads per batch, sublane-concat batches
        attn_rows = []
        for b in range(B):
            heads = [ctx[b * n_head + hh] for hh in range(n_head)]            # (S, hd) each
            attn_rows.append(jnp.concatenate(heads, axis=-1))                 # (S, D)
        attn = jnp.concatenate(attn_rows, axis=0)                             # (B*S, D)

        attn = jnp.dot(attn, c_proj_w_ref[l],
                       preferred_element_type=jnp.float32) + c_proj_b_ref[l]
        h = h + attn

        # --- MLP block (gelu_new, tanh approximation) ---
        m = layernorm(h, ln2_g_ref[l], ln2_b_ref[l])
        u = jnp.dot(m, fc_w_ref[l],
                    preferred_element_type=jnp.float32) + fc_b_ref[l]          # (B*S, 4D)
        c = 0.7978845608028654                               # sqrt(2/pi)
        u = 0.5 * u * (1.0 + jnp.tanh(c * (u + 0.044715 * u * u * u)))
        m = jnp.dot(u, proj_w_ref[l],
                    preferred_element_type=jnp.float32) + proj_b_ref[l]
        h = h + m

    # --- final LN + tied lm_head (wte pre-transposed in wrapper -> plain dot) ---
    h = layernorm(h, lnf_g_ref[...], lnf_b_ref[...])
    hidden_ref[...] = h.astype(hidden_ref.dtype)
    logits = jnp.dot(h, wte_t_ref[...],
                     preferred_element_type=jnp.float32)                       # (B*S, VOCAB)
    logits_ref[...] = logits.astype(logits_ref.dtype)


# ---------------- pallas_call wrapper ----------------

def custom_gpt2_forward(params, input_ids, attention_mask=None):
    B, S = input_ids.shape
    D = N_EMBD

    # token + position embedding gather stays in plain JAX (scalar gather glue).
    # TODO(synk): could be fused via scalar-prefetched input_ids + in-kernel DMA
    # gather of wte rows, but at this size the win is negligible.
    emb = jnp.take(params["wte"], input_ids, axis=0) + params["wpe"][None, :S, :]
    emb = emb.astype(jnp.float32).reshape(B * S, D)          # batch folded into rows

    if attention_mask is None:
        mask = jnp.ones((B, S), jnp.float32)
    else:
        mask = attention_mask.astype(jnp.float32).reshape(B, S)

    wte_t = params["wte"].T                                  # (D, VOCAB), one-time transpose

    kernel = functools.partial(
        _gpt2_fwd_kernel, n_layer=N_LAYER, n_head=N_HEAD, eps=LN_EPS)

    n_inputs = 17
    hidden, logits = pl.pallas_call(
        kernel,
        out_shape=(jax.ShapeDtypeStruct((B * S, D), jnp.float32),
                   jax.ShapeDtypeStruct((B * S, VOCAB), jnp.float32)),
        # single invocation (no grid): every operand is a whole-array VMEM block
        in_specs=[pl.BlockSpec(memory_space=pltpu.MemorySpace.VMEM)
                  for _ in range(n_inputs)],
        out_specs=(pl.BlockSpec(memory_space=pltpu.MemorySpace.VMEM),
                   pl.BlockSpec(memory_space=pltpu.MemorySpace.VMEM)),
    )(emb, mask,
      params["ln1_g"], params["ln1_b"],
      params["c_attn_w"], params["c_attn_b"],
      params["c_proj_w"], params["c_proj_b"],
      params["ln2_g"], params["ln2_b"],
      params["fc_w"], params["fc_b"],
      params["proj_w"], params["proj_b"],
      params["lnf_g"], params["lnf_b"], wte_t)

    return hidden.reshape(B, S, D), logits.reshape(B, S, VOCAB)


# ---------------- parameters (per-layer weights stacked on axis 0) ----------------

def init_params(key):
    std = 0.02
    ks = jax.random.split(key, 6)

    def nrm(k, shape):
        return std * jax.random.normal(k, shape, jnp.float32)

    return {
        "wte": nrm(ks[0], (VOCAB, N_EMBD)),
        "wpe": nrm(ks[1], (N_POS, N_EMBD)),
        "lnf_g": jnp.ones((1, N_EMBD), jnp.float32),
        "lnf_b": jnp.zeros((1, N_EMBD), jnp.float32),
        "ln1_g": jnp.ones((N_LAYER, 1, N_EMBD), jnp.float32),
        "ln1_b": jnp.zeros((N_LAYER, 1, N_EMBD), jnp.float32),
        "c_attn_w": nrm(ks[2], (N_LAYER, N_EMBD, 3 * N_EMBD)),
        "c_attn_b": jnp.zeros((N_LAYER, 1, 3 * N_EMBD), jnp.float32),
        "c_proj_w": nrm(ks[3], (N_LAYER, N_EMBD, N_EMBD)),
        "c_proj_b": jnp.zeros((N_LAYER, 1, N_EMBD), jnp.float32),
        "ln2_g": jnp.ones((N_LAYER, 1, N_EMBD), jnp.float32),
        "ln2_b": jnp.zeros((N_LAYER, 1, N_EMBD), jnp.float32),
        "fc_w": nrm(ks[4], (N_LAYER, N_EMBD, 4 * N_EMBD)),
        "fc_b": jnp.zeros((N_LAYER, 1, 4 * N_EMBD), jnp.float32),
        "proj_w": nrm(ks[5], (N_LAYER, 4 * N_EMBD, N_EMBD)),
        "proj_b": jnp.zeros((N_LAYER, 1, N_EMBD), jnp.float32),
    }


if __name__ == "__main__":
    key = jax.random.PRNGKey(0)
    pkey, ikey = jax.random.split(key)
    params = init_params(pkey)

    B, S = 2, 8
    input_ids = jax.random.randint(ikey, (B, S), 0, VOCAB, dtype=jnp.int32)
    attention_mask = jnp.ones((B, S), jnp.int32)

    fwd = jax.jit(custom_gpt2_forward)
    last_hidden, logits = fwd(params, input_ids, attention_mask)
    jax.block_until_ready((last_hidden, logits))

    assert last_hidden.shape == (B, S, N_EMBD)
    assert logits.shape == (B, S, VOCAB)
    assert bool(jnp.all(jnp.isfinite(last_hidden)))
    assert bool(jnp.all(jnp.isfinite(logits)))
    print("KERNEL_OK")
</pallas_src>

<mosaic_0001>
module attributes {stable_mosaic.version = 11 : i64} {
  func.func @_gpt2_fwd_kernel(%arg0: memref<16x32xf32, #tpu.memory_space<vmem>>, %arg1: memref<2x8xf32, #tpu.memory_space<vmem>>, %arg2: memref<2x1x32xf32, #tpu.memory_space<vmem>>, %arg3: memref<2x1x32xf32, #tpu.memory_space<vmem>>, %arg4: memref<2x32x96xf32, #tpu.memory_space<vmem>>, %arg5: memref<2x1x96xf32, #tpu.memory_space<vmem>>, %arg6: memref<2x32x32xf32, #tpu.memory_space<vmem>>, %arg7: memref<2x1x32xf32, #tpu.memory_space<vmem>>, %arg8: memref<2x1x32xf32, #tpu.memory_space<vmem>>, %arg9: memref<2x1x32xf32, #tpu.memory_space<vmem>>, %arg10: memref<2x32x128xf32, #tpu.memory_space<vmem>>, %arg11: memref<2x1x128xf32, #tpu.memory_space<vmem>>, %arg12: memref<2x128x32xf32, #tpu.memory_space<vmem>>, %arg13: memref<2x1x32xf32, #tpu.memory_space<vmem>>, %arg14: memref<1x32xf32, #tpu.memory_space<vmem>>, %arg15: memref<1x32xf32, #tpu.memory_space<vmem>>, %arg16: memref<32x128xf32, #tpu.memory_space<vmem>>, %arg17: memref<16x32xf32, #tpu.memory_space<vmem>>, %arg18: memref<16x128xf32, #tpu.memory_space<vmem>>) attributes {dimension_semantics = [], scalar_prefetch = 0 : i64, scratch_operands = 0 : i64, tpu.core_type = #tpu.core_type<tc>} {
    %c0 = arith.constant 0 : index
    %c0_0 = arith.constant 0 : index
    %0 = vector.load %arg0[%c0, %c0_0] : memref<16x32xf32, #tpu.memory_space<vmem>>, vector<16x32xf32>
    %1 = tpu.iota {dimensions = array<i32: 0>} : vector<8x8xi32>
    %2 = tpu.iota {dimensions = array<i32: 1>} : vector<8x8xi32>
    %3 = arith.cmpi sge, %1, %2 : vector<8x8xi32>
    %c0_1 = arith.constant 0 : index
    %c0_2 = arith.constant 0 : index
    %4 = vector.load %arg1[%c0_1, %c0_2] : memref<2x8xf32, #tpu.memory_space<vmem>>, vector<2x8xf32>
    %5 = vector.extract_strided_slice %4 {offsets = [0, 0], sizes = [1, 8], strides = [1, 1]} : vector<2x8xf32> to vector<1x8xf32>
    %cst = arith.constant 5.000000e-01 : f32
    %6 = vector.broadcast %cst : f32 to vector<1x8xf32>
    %7 = arith.cmpf ogt, %5, %6 : vector<1x8xf32>
    %8 = vector.broadcast %7 : vector<1x8xi1> to vector<8x8xi1>
    %9 = arith.andi %3, %8 : vector<8x8xi1>
    %10 = vector.extract_strided_slice %4 {offsets = [1, 0], sizes = [1, 8], strides = [1, 1]} : vector<2x8xf32> to vector<1x8xf32>
    %cst_3 = arith.constant 5.000000e-01 : f32
    %11 = vector.broadcast %cst_3 : f32 to vector<1x8xf32>
    %12 = arith.cmpf ogt, %10, %11 : vector<1x8xf32>
    %13 = vector.broadcast %12 : vector<1x8xi1> to vector<8x8xi1>
    %14 = arith.andi %3, %13 : vector<8x8xi1>
    %15 = vector.shape_cast %9 : vector<8x8xi1> to vector<1x8x8xi1>
    %16 = vector.shape_cast %9 : vector<8x8xi1> to vector<1x8x8xi1>
    %17 = vector.shape_cast %9 : vector<8x8xi1> to vector<1x8x8xi1>
    %18 = vector.shape_cast %9 : vector<8x8xi1> to vector<1x8x8xi1>
    %19 = vector.shape_cast %14 : vector<8x8xi1> to vector<1x8x8xi1>
    %20 = vector.shape_cast %14 : vector<8x8xi1> to vector<1x8x8xi1>
    %21 = vector.shape_cast %14 : vector<8x8xi1> to vector<1x8x8xi1>
    %22 = vector.shape_cast %14 : vector<8x8xi1> to vector<1x8x8xi1>
    %23 = tpu.concatenate %15, %16, %17, %18, %19, %20, %21, %22 in 0 : vector<1x8x8xi1>, vector<1x8x8xi1>, vector<1x8x8xi1>, vector<1x8x8xi1>, vector<1x8x8xi1>, vector<1x8x8xi1>, vector<1x8x8xi1>, vector<1x8x8xi1> -> vector<8x8x8xi1>
    %c0_4 = arith.constant 0 : index
    %c0_5 = arith.constant 0 : index
    %c0_6 = arith.constant 0 : index
    %24 = vector.load %arg2[%c0_4, %c0_5, %c0_6] : memref<2x1x32xf32, #tpu.memory_space<vmem>>, vector<1x1x32xf32>
    %25 = vector.shape_cast %24 : vector<1x1x32xf32> to vector<1x32xf32>
    %c0_7 = arith.constant 0 : index
    %c0_8 = arith.constant 0 : index
    %c0_9 = arith.constant 0 : index
    %26 = vector.load %arg3[%c0_7, %c0_8, %c0_9] : memref<2x1x32xf32, #tpu.memory_space<vmem>>, vector<1x1x32xf32>
    %27 = vector.shape_cast %26 : vector<1x1x32xf32> to vector<1x32xf32>
    %cst_10 = arith.constant dense<0.000000e+00> : vector<16xf32>
    %28 = vector.multi_reduction <add>, %0, %cst_10 [1] : vector<16x32xf32> to vector<16xf32>
    %29 = vector.shape_cast %28 : vector<16xf32> to vector<16x1xf32>
    %cst_11 = arith.constant 3.200000e+01 : f32
    %30 = vector.broadcast %cst_11 : f32 to vector<16x1xf32>
    %31 = arith.divf %29, %30 : vector<16x1xf32>
    %32 = vector.broadcast %31 : vector<16x1xf32> to vector<16x32xf32>
    %33 = arith.subf %0, %32 : vector<16x32xf32>
    %34 = arith.mulf %33, %33 : vector<16x32xf32>
    %cst_12 = arith.constant dense<0.000000e+00> : vector<16xf32>
    %35 = vector.multi_reduction <add>, %34, %cst_12 [1] : vector<16x32xf32> to vector<16xf32>
    %36 = vector.shape_cast %35 : vector<16xf32> to vector<16x1xf32>
    %cst_13 = arith.constant 3.200000e+01 : f32
    %37 = vector.broadcast %cst_13 : f32 to vector<16x1xf32>
    %38 = arith.divf %36, %37 : vector<16x1xf32>
    %39 = vector.broadcast %31 : vector<16x1xf32> to vector<16x32xf32>
    %40 = arith.subf %0, %39 : vector<16x32xf32>
    %cst_14 = arith.constant 9.99999974E-6 : f32
    %41 = vector.broadcast %cst_14 : f32 to vector<16x1xf32>
    %42 = arith.addf %38, %41 : vector<16x1xf32>
    %43 = math.rsqrt %42 : vector<16x1xf32>
    %44 = vector.broadcast %43 : vector<16x1xf32> to vector<16x32xf32>
    %45 = arith.mulf %40, %44 : vector<16x32xf32>
    %46 = vector.broadcast %25 : vector<1x32xf32> to vector<16x32xf32>
    %47 = arith.mulf %45, %46 : vector<16x32xf32>
    %48 = vector.broadcast %27 : vector<1x32xf32> to vector<16x32xf32>
    %49 = arith.addf %47, %48 : vector<16x32xf32>
    %c0_15 = arith.constant 0 : index
    %c0_16 = arith.constant 0 : index
    %c0_17 = arith.constant 0 : index
    %50 = vector.load %arg4[%c0_15, %c0_16, %c0_17] : memref<2x32x96xf32, #tpu.memory_space<vmem>>, vector<1x32x96xf32>
    %51 = vector.shape_cast %50 : vector<1x32x96xf32> to vector<32x96xf32>
    %cst_18 = arith.constant dense<0.000000e+00> : vector<16x96xf32>
    %52 = tpu.matmul %49, %51, %cst_18 {dimension_numbers = #tpu.dot_dimension_numbers<[1], [0], [0], [1], [0, 0, 1, 1], [], []>} : vector<16x32xf32>, vector<32x96xf32>, vector<16x96xf32> -> vector<16x96xf32>
    %c0_19 = arith.constant 0 : index
    %c0_20 = arith.constant 0 : index
    %c0_21 = arith.constant 0 : index
    %53 = vector.load %arg5[%c0_19, %c0_20, %c0_21] : memref<2x1x96xf32, #tpu.memory_space<vmem>>, vector<1x1x96xf32>
    %54 = vector.shape_cast %53 : vector<1x1x96xf32> to vector<1x96xf32>
    %55 = vector.broadcast %54 : vector<1x96xf32> to vector<16x96xf32>
    %56 = arith.addf %52, %55 : vector<16x96xf32>
    %57 = vector.extract_strided_slice %56 {offsets = [0, 0], sizes = [8, 8], strides = [1, 1]} : vector<16x96xf32> to vector<8x8xf32>
    %58 = vector.extract_strided_slice %56 {offsets = [0, 32], sizes = [8, 8], strides = [1, 1]} : vector<16x96xf32> to vector<8x8xf32>
    %59 = vector.extract_strided_slice %56 {offsets = [0, 64], sizes = [8, 8], strides = [1, 1]} : vector<16x96xf32> to vector<8x8xf32>
    %60 = vector.extract_strided_slice %56 {offsets = [0, 8], sizes = [8, 8], strides = [1, 1]} : vector<16x96xf32> to vector<8x8xf32>
    %61 = vector.extract_strided_slice %56 {offsets = [0, 40], sizes = [8, 8], strides = [1, 1]} : vector<16x96xf32> to vector<8x8xf32>
    %62 = vector.extract_strided_slice %56 {offsets = [0, 72], sizes = [8, 8], strides = [1, 1]} : vector<16x96xf32> to vector<8x8xf32>
    %63 = vector.extract_strided_slice %56 {offsets = [0, 16], sizes = [8, 8], strides = [1, 1]} : vector<16x96xf32> to vector<8x8xf32>
    %64 = vector.extract_strided_slice %56 {offsets = [0, 48], sizes = [8, 8], strides = [1, 1]} : vector<16x96xf32> to vector<8x8xf32>
    %65 = vector.extract_strided_slice %56 {offsets = [0, 80], sizes = [8, 8], strides = [1, 1]} : vector<16x96xf32> to vector<8x8xf32>
    %66 = vector.extract_strided_slice %56 {offsets = [0, 24], sizes = [8, 8], strides = [1, 1]} : vector<16x96xf32> to vector<8x8xf32>
    %67 = vector.extract_strided_slice %56 {offsets = [0, 56], sizes = [8, 8], strides = [1, 1]} : vector<16x96xf32> to vector<8x8xf32>
    %68 = vector.extract_strided_slice %56 {offsets = [0, 88], sizes = [8, 8], strides = [1, 1]} : vector<16x96xf32> to vector<8x8xf32>
    %69 = vector.extract_strided_slice %56 {offsets = [8, 0], sizes = [8, 8], strides = [1, 1]} : vector<16x96xf32> to vector<8x8xf32>
    %70 = vector.extract_strided_slice %56 {offsets = [8, 32], sizes = [8, 8], strides = [1, 1]} : vector<16x96xf32> to vector<8x8xf32>
    %71 = vector.extract_strided_slice %56 {offsets = [8, 64], sizes = [8, 8], strides = [1, 1]} : vector<16x96xf32> to vector<8x8xf32>
    %72 = vector.extract_strided_slice %56 {offsets = [8, 8], sizes = [8, 8], strides = [1, 1]} : vector<16x96xf32> to vector<8x8xf32>
    %73 = vector.extract_strided_slice %56 {offsets = [8, 40], sizes = [8, 8], strides = [1, 1]} : vector<16x96xf32> to vector<8x8xf32>
    %74 = vector.extract_strided_slice %56 {offsets = [8, 72], sizes = [8, 8], strides = [1, 1]} : vector<16x96xf32> to vector<8x8xf32>
    %75 = vector.extract_strided_slice %56 {offsets = [8, 16], sizes = [8, 8], strides = [1, 1]} : vector<16x96xf32> to vector<8x8xf32>
    %76 = vector.extract_strided_slice %56 {offsets = [8, 48], sizes = [8, 8], strides = [1, 1]} : vector<16x96xf32> to vector<8x8xf32>
    %77 = vector.extract_strided_slice %56 {offsets = [8, 80], sizes = [8, 8], strides = [1, 1]} : vector<16x96xf32> to vector<8x8xf32>
    %78 = vector.extract_strided_slice %56 {offsets = [8, 24], sizes = [8, 8], strides = [1, 1]} : vector<16x96xf32> to vector<8x8xf32>
    %79 = vector.extract_strided_slice %56 {offsets = [8, 56], sizes = [8, 8], strides = [1, 1]} : vector<16x96xf32> to vector<8x8xf32>
    %80 = vector.extract_strided_slice %56 {offsets = [8, 88], sizes = [8, 8], strides = [1, 1]} : vector<16x96xf32> to vector<8x8xf32>
    %81 = vector.shape_cast %57 : vector<8x8xf32> to vector<1x8x8xf32>
    %82 = vector.shape_cast %60 : vector<8x8xf32> to vector<1x8x8xf32>
    %83 = vector.shape_cast %63 : vector<8x8xf32> to vector<1x8x8xf32>
    %84 = vector.shape_cast %66 : vector<8x8xf32> to vector<1x8x8xf32>
    %85 = vector.shape_cast %69 : vector<8x8xf32> to vector<1x8x8xf32>
    %86 = vector.shape_cast %72 : vector<8x8xf32> to vector<1x8x8xf32>
    %87 = vector.shape_cast %75 : vector<8x8xf32> to vector<1x8x8xf32>
    %88 = vector.shape_cast %78 : vector<8x8xf32> to vector<1x8x8xf32>
    %89 = tpu.concatenate %81, %82, %83, %84, %85, %86, %87, %88 in 0 : vector<1x8x8xf32>, vector<1x8x8xf32>, vector<1x8x8xf32>, vector<1x8x8xf32>, vector<1x8x8xf32>, vector<1x8x8xf32>, vector<1x8x8xf32>, vector<1x8x8xf32> -> vector<8x8x8xf32>
    %90 = vector.shape_cast %58 : vector<8x8xf32> to vector<1x8x8xf32>
    %91 = vector.shape_cast %61 : vector<8x8xf32> to vector<1x8x8xf32>
    %92 = vector.shape_cast %64 : vector<8x8xf32> to vector<1x8x8xf32>
    %93 = vector.shape_cast %67 : vector<8x8xf32> to vector<1x8x8xf32>
    %94 = vector.shape_cast %70 : vector<8x8xf32> to vector<1x8x8xf32>
    %95 = vector.shape_cast %73 : vector<8x8xf32> to vector<1x8x8xf32>
    %96 = vector.shape_cast %76 : vector<8x8xf32> to vector<1x8x8xf32>
    %97 = vector.shape_cast %79 : vector<8x8xf32> to vector<1x8x8xf32>
    %98 = tpu.concatenate %90, %91, %92, %93, %94, %95, %96, %97 in 0 : vector<1x8x8xf32>, vector<1x8x8xf32>, vector<1x8x8xf32>, vector<1x8x8xf32>, vector<1x8x8xf32>, vector<1x8x8xf32>, vector<1x8x8xf32>, vector<1x8x8xf32> -> vector<8x8x8xf32>
    %99 = vector.shape_cast %59 : vector<8x8xf32> to vector<1x8x8xf32>
    %100 = vector.shape_cast %62 : vector<8x8xf32> to vector<1x8x8xf32>
    %101 = vector.shape_cast %65 : vector<8x8xf32> to vector<1x8x8xf32>
    %102 = vector.shape_cast %68 : vector<8x8xf32> to vector<1x8x8xf32>
    %103 = vector.shape_cast %71 : vector<8x8xf32> to vector<1x8x8xf32>
    %104 = vector.shape_cast %74 : vector<8x8xf32> to vector<1x8x8xf32>
    %105 = vector.shape_cast %77 : vector<8x8xf32> to vector<1x8x8xf32>
    %106 = vector.shape_cast %80 : vector<8x8xf32> to vector<1x8x8xf32>
    %107 = tpu.concatenate %99, %100, %101, %102, %103, %104, %105, %106 in 0 : vector<1x8x8xf32>, vector<1x8x8xf32>, vector<1x8x8xf32>, vector<1x8x8xf32>, vector<1x8x8xf32>, vector<1x8x8xf32>, vector<1x8x8xf32>, vector<1x8x8xf32> -> vector<8x8x8xf32>
    "tpu.trace_start"() <{level = 10 : i32, message = "bqd,bkd->bqk"}> : () -> ()
    %cst_22 = arith.constant dense<0.000000e+00> : vector<8x8x8xf32>
    %108 = tpu.matmul %89, %98, %cst_22 {dimension_numbers = #tpu.dot_dimension_numbers<[2], [2], [1], [1], [0, 0, 0, 1, 1, 1], [0], [0]>} : vector<8x8x8xf32>, vector<8x8x8xf32>, vector<8x8x8xf32> -> vector<8x8x8xf32>
    "tpu.trace_stop"() : () -> ()
    %cst_23 = arith.constant 0.353553385 : f32
    %109 = vector.broadcast %cst_23 : f32 to vector<8x8x8xf32>
    %110 = arith.mulf %108, %109 : vector<8x8x8xf32>
    %cst_24 = arith.constant -1.000000e+30 : f32
    %111 = vector.broadcast %cst_24 : f32 to vector<8x8x8xf32>
    %112 = arith.select %23, %110, %111 : vector<8x8x8xi1>, vector<8x8x8xf32>
    %cst_25 = arith.constant dense<0xFF800000> : vector<8x8xf32>
    %113 = vector.multi_reduction <maximumf>, %112, %cst_25 [2] : vector<8x8x8xf32> to vector<8x8xf32>
    %114 = vector.shape_cast %113 : vector<8x8xf32> to vector<8x8x1xf32>
    %115 = vector.broadcast %114 : vector<8x8x1xf32> to vector<8x8x8xf32>
    %116 = arith.subf %112, %115 : vector<8x8x8xf32>
    %117 = math.exp %116 : vector<8x8x8xf32>
    %cst_26 = arith.constant dense<0.000000e+00> : vector<8x8xf32>
    %118 = vector.multi_reduction <add>, %117, %cst_26 [2] : vector<8x8x8xf32> to vector<8x8xf32>
    %119 = vector.shape_cast %118 : vector<8x8xf32> to vector<8x8x1xf32>
    %120 = tpu.reciprocal %119 {approx = true} : vector<8x8x1xf32> -> vector<8x8x1xf32>
    %121 = vector.broadcast %120 : vector<8x8x1xf32> to vector<8x8x8xf32>
    %122 = arith.mulf %117, %121 : vector<8x8x8xf32>
    "tpu.trace_start"() <{level = 10 : i32, message = "bqk,bkd->bqd"}> : () -> ()
    %cst_27 = arith.constant dense<0.000000e+00> : vector<8x8x8xf32>
    %123 = tpu.matmul %122, %107, %cst_27 {dimension_numbers = #tpu.dot_dimension_numbers<[2], [1], [1], [2], [0, 0, 0, 1, 1, 2], [0], [0]>} : vector<8x8x8xf32>, vector<8x8x8xf32>, vector<8x8x8xf32> -> vector<8x8x8xf32>
    "tpu.trace_stop"() : () -> ()
    %124 = vector.extract_strided_slice %123 {offsets = [0, 0, 0], sizes = [1, 8, 8], strides = [1, 1, 1]} : vector<8x8x8xf32> to vector<1x8x8xf32>
    %125 = vector.shape_cast %124 : vector<1x8x8xf32> to vector<8x8xf32>
    %126 = vector.extract_strided_slice %123 {offsets = [1, 0, 0], sizes = [1, 8, 8], strides = [1, 1, 1]} : vector<8x8x8xf32> to vector<1x8x8xf32>
    %127 = vector.shape_cast %126 : vector<1x8x8xf32> to vector<8x8xf32>
    %128 = vector.extract_strided_slice %123 {offsets = [2, 0, 0], sizes = [1, 8, 8], strides = [1, 1, 1]} : vector<8x8x8xf32> to vector<1x8x8xf32>
    %129 = vector.shape_cast %128 : vector<1x8x8xf32> to vector<8x8xf32>
    %130 = vector.extract_strided_slice %123 {offsets = [3, 0, 0], sizes = [1, 8, 8], strides = [1, 1, 1]} : vector<8x8x8xf32> to vector<1x8x8xf32>
    %131 = vector.shape_cast %130 : vector<1x8x8xf32> to vector<8x8xf32>
    %132 = tpu.concatenate %125, %127, %129, %131 in 1 : vector<8x8xf32>, vector<8x8xf32>, vector<8x8xf32>, vector<8x8xf32> -> vector<8x32xf32>
    %133 = vector.extract_strided_slice %123 {offsets = [4, 0, 0], sizes = [1, 8, 8], strides = [1, 1, 1]} : vector<8x8x8xf32> to vector<1x8x8xf32>
    %134 = vector.shape_cast %133 : vector<1x8x8xf32> to vector<8x8xf32>
    %135 = vector.extract_strided_slice %123 {offsets = [5, 0, 0], sizes = [1, 8, 8], strides = [1, 1, 1]} : vector<8x8x8xf32> to vector<1x8x8xf32>
    %136 = vector.shape_cast %135 : vector<1x8x8xf32> to vector<8x8xf32>
    %137 = vector.extract_strided_slice %123 {offsets = [6, 0, 0], sizes = [1, 8, 8], strides = [1, 1, 1]} : vector<8x8x8xf32> to vector<1x8x8xf32>
    %138 = vector.shape_cast %137 : vector<1x8x8xf32> to vector<8x8xf32>
    %139 = vector.extract_strided_slice %123 {offsets = [7, 0, 0], sizes = [1, 8, 8], strides = [1, 1, 1]} : vector<8x8x8xf32> to vector<1x8x8xf32>
    %140 = vector.shape_cast %139 : vector<1x8x8xf32> to vector<8x8xf32>
    %141 = tpu.concatenate %134, %136, %138, %140 in 1 : vector<8x8xf32>, vector<8x8xf32>, vector<8x8xf32>, vector<8x8xf32> -> vector<8x32xf32>
    %142 = tpu.concatenate %132, %141 in 0 : vector<8x32xf32>, vector<8x32xf32> -> vector<16x32xf32>
    %c0_28 = arith.constant 0 : index
    %c0_29 = arith.constant 0 : index
    %c0_30 = arith.constant 0 : index
    %143 = vector.load %arg6[%c0_28, %c0_29, %c0_30] : memref<2x32x32xf32, #tpu.memory_space<vmem>>, vector<1x32x32xf32>
    %144 = vector.shape_cast %143 : vector<1x32x32xf32> to vector<32x32xf32>
    %cst_31 = arith.constant dense<0.000000e+00> : vector<16x32xf32>
    %145 = tpu.matmul %142, %144, %cst_31 {dimension_numbers = #tpu.dot_dimension_numbers<[1], [0], [0], [1], [0, 0, 1, 1], [], []>} : vector<16x32xf32>, vector<32x32xf32>, vector<16x32xf32> -> vector<16x32xf32>
    %c0_32 = arith.constant 0 : index
    %c0_33 = arith.constant 0 : index
    %c0_34 = arith.constant 0 : index
    %146 = vector.load %arg7[%c0_32, %c0_33, %c0_34] : memref<2x1x32xf32, #tpu.memory_space<vmem>>, vector<1x1x32xf32>
    %147 = vector.shape_cast %146 : vector<1x1x32xf32> to vector<1x32xf32>
    %148 = vector.broadcast %147 : vector<1x32xf32> to vector<16x32xf32>
    %149 = arith.addf %145, %148 : vector<16x32xf32>
    %150 = arith.addf %0, %149 : vector<16x32xf32>
    %c0_35 = arith.constant 0 : index
    %c0_36 = arith.constant 0 : index
    %c0_37 = arith.constant 0 : index
    %151 = vector.load %arg8[%c0_35, %c0_36, %c0_37] : memref<2x1x32xf32, #tpu.memory_space<vmem>>, vector<1x1x32xf32>
    %152 = vector.shape_cast %151 : vector<1x1x32xf32> to vector<1x32xf32>
    %c0_38 = arith.constant 0 : index
    %c0_39 = arith.constant 0 : index
    %c0_40 = arith.constant 0 : index
    %153 = vector.load %arg9[%c0_38, %c0_39, %c0_40] : memref<2x1x32xf32, #tpu.memory_space<vmem>>, vector<1x1x32xf32>
    %154 = vector.shape_cast %153 : vector<1x1x32xf32> to vector<1x32xf32>
    %cst_41 = arith.constant dense<0.000000e+00> : vector<16xf32>
    %155 = vector.multi_reduction <add>, %150, %cst_41 [1] : vector<16x32xf32> to vector<16xf32>
    %156 = vector.shape_cast %155 : vector<16xf32> to vector<16x1xf32>
    %cst_42 = arith.constant 3.200000e+01 : f32
    %157 = vector.broadcast %cst_42 : f32 to vector<16x1xf32>
    %158 = arith.divf %156, %157 : vector<16x1xf32>
    %159 = vector.broadcast %158 : vector<16x1xf32> to vector<16x32xf32>
    %160 = arith.subf %150, %159 : vector<16x32xf32>
    %161 = arith.mulf %160, %160 : vector<16x32xf32>
    %cst_43 = arith.constant dense<0.000000e+00> : vector<16xf32>
    %162 = vector.multi_reduction <add>, %161, %cst_43 [1] : vector<16x32xf32> to vector<16xf32>
    %163 = vector.shape_cast %162 : vector<16xf32> to vector<16x1xf32>
    %cst_44 = arith.constant 3.200000e+01 : f32
    %164 = vector.broadcast %cst_44 : f32 to vector<16x1xf32>
    %165 = arith.divf %163, %164 : vector<16x1xf32>
    %166 = vector.broadcast %158 : vector<16x1xf32> to vector<16x32xf32>
    %167 = arith.subf %150, %166 : vector<16x32xf32>
    %cst_45 = arith.constant 9.99999974E-6 : f32
    %168 = vector.broadcast %cst_45 : f32 to vector<16x1xf32>
    %169 = arith.addf %165, %168 : vector<16x1xf32>
    %170 = math.rsqrt %169 : vector<16x1xf32>
    %171 = vector.broadcast %170 : vector<16x1xf32> to vector<16x32xf32>
    %172 = arith.mulf %167, %171 : vector<16x32xf32>
    %173 = vector.broadcast %152 : vector<1x32xf32> to vector<16x32xf32>
    %174 = arith.mulf %172, %173 : vector<16x32xf32>
    %175 = vector.broadcast %154 : vector<1x32xf32> to vector<16x32xf32>
    %176 = arith.addf %174, %175 : vector<16x32xf32>
    %c0_46 = arith.constant 0 : index
    %c0_47 = arith.constant 0 : index
    %c0_48 = arith.constant 0 : index
    %177 = vector.load %arg10[%c0_46, %c0_47, %c0_48] : memref<2x32x128xf32, #tpu.memory_space<vmem>>, vector<1x32x128xf32>
    %178 = vector.shape_cast %177 : vector<1x32x128xf32> to vector<32x128xf32>
    %cst_49 = arith.constant dense<0.000000e+00> : vector<16x128xf32>
    %179 = tpu.matmul %176, %178, %cst_49 {dimension_numbers = #tpu.dot_dimension_numbers<[1], [0], [0], [1], [0, 0, 1, 1], [], []>} : vector<16x32xf32>, vector<32x128xf32>, vector<16x128xf32> -> vector<16x128xf32>
    %c0_50 = arith.constant 0 : index
    %c0_51 = arith.constant 0 : index
    %c0_52 = arith.constant 0 : index
    %180 = vector.load %arg11[%c0_50, %c0_51, %c0_52] : memref<2x1x128xf32, #tpu.memory_space<vmem>>, vector<1x1x128xf32>
    %181 = vector.shape_cast %180 : vector<1x1x128xf32> to vector<1x128xf32>
    %182 = vector.broadcast %181 : vector<1x128xf32> to vector<16x128xf32>
    %183 = arith.addf %179, %182 : vector<16x128xf32>
    %cst_53 = arith.constant 5.000000e-01 : f32
    %184 = vector.broadcast %cst_53 : f32 to vector<16x128xf32>
    %185 = arith.mulf %184, %183 : vector<16x128xf32>
    %cst_54 = arith.constant 4.471500e-02 : f32
    %186 = vector.broadcast %cst_54 : f32 to vector<16x128xf32>
    %187 = arith.mulf %186, %183 : vector<16x128xf32>
    %188 = arith.mulf %187, %183 : vector<16x128xf32>
    %189 = arith.mulf %188, %183 : vector<16x128xf32>
    %190 = arith.addf %183, %189 : vector<16x128xf32>
    %cst_55 = arith.constant 0.797884583 : f32
    %191 = vector.broadcast %cst_55 : f32 to vector<16x128xf32>
    %192 = arith.mulf %191, %190 : vector<16x128xf32>
    %193 = math.tanh %192 : vector<16x128xf32>
    %cst_56 = arith.constant 1.000000e+00 : f32
    %194 = vector.broadcast %cst_56 : f32 to vector<16x128xf32>
    %195 = arith.addf %194, %193 : vector<16x128xf32>
    %196 = arith.mulf %185, %195 : vector<16x128xf32>
    %c0_57 = arith.constant 0 : index
    %c0_58 = arith.constant 0 : index
    %c0_59 = arith.constant 0 : index
    %197 = vector.load %arg12[%c0_57, %c0_58, %c0_59] : memref<2x128x32xf32, #tpu.memory_space<vmem>>, vector<1x128x32xf32>
    %198 = vector.shape_cast %197 : vector<1x128x32xf32> to vector<128x32xf32>
    %cst_60 = arith.constant dense<0.000000e+00> : vector<16x32xf32>
    %199 = tpu.matmul %196, %198, %cst_60 {dimension_numbers = #tpu.dot_dimension_numbers<[1], [0], [0], [1], [0, 0, 1, 1], [], []>} : vector<16x128xf32>, vector<128x32xf32>, vector<16x32xf32> -> vector<16x32xf32>
    %c0_61 = arith.constant 0 : index
    %c0_62 = arith.constant 0 : index
    %c0_63 = arith.constant 0 : index
    %200 = vector.load %arg13[%c0_61, %c0_62, %c0_63] : memref<2x1x32xf32, #tpu.memory_space<vmem>>, vector<1x1x32xf32>
    %201 = vector.shape_cast %200 : vector<1x1x32xf32> to vector<1x32xf32>
    %202 = vector.broadcast %201 : vector<1x32xf32> to vector<16x32xf32>
    %203 = arith.addf %199, %202 : vector<16x32xf32>
    %204 = arith.addf %150, %203 : vector<16x32xf32>
    %c1 = arith.constant 1 : index
    %c0_64 = arith.constant 0 : index
    %c0_65 = arith.constant 0 : index
    %205 = vector.load %arg2[%c1, %c0_64, %c0_65] : memref<2x1x32xf32, #tpu.memory_space<vmem>>, vector<1x1x32xf32>
    %206 = vector.shape_cast %205 : vector<1x1x32xf32> to vector<1x32xf32>
    %c1_66 = arith.constant 1 : index
    %c0_67 = arith.constant 0 : index
    %c0_68 = arith.constant 0 : index
    %207 = vector.load %arg3[%c1_66, %c0_67, %c0_68] : memref<2x1x32xf32, #tpu.memory_space<vmem>>, vector<1x1x32xf32>
    %208 = vector.shape_cast %207 : vector<1x1x32xf32> to vector<1x32xf32>
    %cst_69 = arith.constant dense<0.000000e+00> : vector<16xf32>
    %209 = vector.multi_reduction <add>, %204, %cst_69 [1] : vector<16x32xf32> to vector<16xf32>
    %210 = vector.shape_cast %209 : vector<16xf32> to vector<16x1xf32>
    %cst_70 = arith.constant 3.200000e+01 : f32
    %211 = vector.broadcast %cst_70 : f32 to vector<16x1xf32>
    %212 = arith.divf %210, %211 : vector<16x1xf32>
    %213 = vector.broadcast %212 : vector<16x1xf32> to vector<16x32xf32>
    %214 = arith.subf %204, %213 : vector<16x32xf32>
    %215 = arith.mulf %214, %214 : vector<16x32xf32>
    %cst_71 = arith.constant dense<0.000000e+00> : vector<16xf32>
    %216 = vector.multi_reduction <add>, %215, %cst_71 [1] : vector<16x32xf32> to vector<16xf32>
    %217 = vector.shape_cast %216 : vector<16xf32> to vector<16x1xf32>
    %cst_72 = arith.constant 3.200000e+01 : f32
    %218 = vector.broadcast %cst_72 : f32 to vector<16x1xf32>
    %219 = arith.divf %217, %218 : vector<16x1xf32>
    %220 = vector.broadcast %212 : vector<16x1xf32> to vector<16x32xf32>
    %221 = arith.subf %204, %220 : vector<16x32xf32>
    %cst_73 = arith.constant 9.99999974E-6 : f32
    %222 = vector.broadcast %cst_73 : f32 to vector<16x1xf32>
    %223 = arith.addf %219, %222 : vector<16x1xf32>
    %224 = math.rsqrt %223 : vector<16x1xf32>
    %225 = vector.broadcast %224 : vector<16x1xf32> to vector<16x32xf32>
    %226 = arith.mulf %221, %225 : vector<16x32xf32>
    %227 = vector.broadcast %206 : vector<1x32xf32> to vector<16x32xf32>
    %228 = arith.mulf %226, %227 : vector<16x32xf32>
    %229 = vector.broadcast %208 : vector<1x32xf32> to vector<16x32xf32>
    %230 = arith.addf %228, %229 : vector<16x32xf32>
    %c1_74 = arith.constant 1 : index
    %c0_75 = arith.constant 0 : index
    %c0_76 = arith.constant 0 : index
    %231 = vector.load %arg4[%c1_74, %c0_75, %c0_76] : memref<2x32x96xf32, #tpu.memory_space<vmem>>, vector<1x32x96xf32>
    %232 = vector.shape_cast %231 : vector<1x32x96xf32> to vector<32x96xf32>
    %cst_77 = arith.constant dense<0.000000e+00> : vector<16x96xf32>
    %233 = tpu.matmul %230, %232, %cst_77 {dimension_numbers = #tpu.dot_dimension_numbers<[1], [0], [0], [1], [0, 0, 1, 1], [], []>} : vector<16x32xf32>, vector<32x96xf32>, vector<16x96xf32> -> vector<16x96xf32>
    %c1_78 = arith.constant 1 : index
    %c0_79 = arith.constant 0 : index
    %c0_80 = arith.constant 0 : index
    %234 = vector.load %arg5[%c1_78, %c0_79, %c0_80] : memref<2x1x96xf32, #tpu.memory_space<vmem>>, vector<1x1x96xf32>
    %235 = vector.shape_cast %234 : vector<1x1x96xf32> to vector<1x96xf32>
    %236 = vector.broadcast %235 : vector<1x96xf32> to vector<16x96xf32>
    %237 = arith.addf %233, %236 : vector<16x96xf32>
    %238 = vector.extract_strided_slice %237 {offsets = [0, 0], sizes = [8, 8], strides = [1, 1]} : vector<16x96xf32> to vector<8x8xf32>
    %239 = vector.extract_strided_slice %237 {offsets = [0, 32], sizes = [8, 8], strides = [1, 1]} : vector<16x96xf32> to vector<8x8xf32>
    %240 = vector.extract_strided_slice %237 {offsets = [0, 64], sizes = [8, 8], strides = [1, 1]} : vector<16x96xf32> to vector<8x8xf32>
    %241 = vector.extract_strided_slice %237 {offsets = [0, 8], sizes = [8, 8], strides = [1, 1]} : vector<16x96xf32> to vector<8x8xf32>
    %242 = vector.extract_strided_slice %237 {offsets = [0, 40], sizes = [8, 8], strides = [1, 1]} : vector<16x96xf32> to vector<8x8xf32>
    %243 = vector.extract_strided_slice %237 {offsets = [0, 72], sizes = [8, 8], strides = [1, 1]} : vector<16x96xf32> to vector<8x8xf32>
    %244 = vector.extract_strided_slice %237 {offsets = [0, 16], sizes = [8, 8], strides = [1, 1]} : vector<16x96xf32> to vector<8x8xf32>
    %245 = vector.extract_strided_slice %237 {offsets = [0, 48], sizes = [8, 8], strides = [1, 1]} : vector<16x96xf32> to vector<8x8xf32>
    %246 = vector.extract_strided_slice %237 {offsets = [0, 80], sizes = [8, 8], strides = [1, 1]} : vector<16x96xf32> to vector<8x8xf32>
    %247 = vector.extract_strided_slice %237 {offsets = [0, 24], sizes = [8, 8], strides = [1, 1]} : vector<16x96xf32> to vector<8x8xf32>
    %248 = vector.extract_strided_slice %237 {offsets = [0, 56], sizes = [8, 8], strides = [1, 1]} : vector<16x96xf32> to vector<8x8xf32>
    %249 = vector.extract_strided_slice %237 {offsets = [0, 88], sizes = [8, 8], strides = [1, 1]} : vector<16x96xf32> to vector<8x8xf32>
    %250 = vector.extract_strided_slice %237 {offsets = [8, 0], sizes = [8, 8], strides = [1, 1]} : vector<16x96xf32> to vector<8x8xf32>
    %251 = vector.extract_strided_slice %237 {offsets = [8, 32], sizes = [8, 8], strides = [1, 1]} : vector<16x96xf32> to vector<8x8xf32>
    %252 = vector.extract_strided_slice %237 {offsets = [8, 64], sizes = [8, 8], strides = [1, 1]} : vector<16x96xf32> to vector<8x8xf32>
    %253 = vector.extract_strided_slice %237 {offsets = [8, 8], sizes = [8, 8], strides = [1, 1]} : vector<16x96xf32> to vector<8x8xf32>
    %254 = vector.extract_strided_slice %237 {offsets = [8, 40], sizes = [8, 8], strides = [1, 1]} : vector<16x96xf32> to vector<8x8xf32>
    %255 = vector.extract_strided_slice %237 {offsets = [8, 72], sizes = [8, 8], strides = [1, 1]} : vector<16x96xf32> to vector<8x8xf32>
    %256 = vector.extract_strided_slice %237 {offsets = [8, 16], sizes = [8, 8], strides = [1, 1]} : vector<16x96xf32> to vector<8x8xf32>
    %257 = vector.extract_strided_slice %237 {offsets = [8, 48], sizes = [8, 8], strides = [1, 1]} : vector<16x96xf32> to vector<8x8xf32>
    %258 = vector.extract_strided_slice %237 {offsets = [8, 80], sizes = [8, 8], strides = [1, 1]} : vector<16x96xf32> to vector<8x8xf32>
    %259 = vector.extract_strided_slice %237 {offsets = [8, 24], sizes = [8, 8], strides = [1, 1]} : vector<16x96xf32> to vector<8x8xf32>
    %260 = vector.extract_strided_slice %237 {offsets = [8, 56], sizes = [8, 8], strides = [1, 1]} : vector<16x96xf32> to vector<8x8xf32>
    %261 = vector.extract_strided_slice %237 {offsets = [8, 88], sizes = [8, 8], strides = [1, 1]} : vector<16x96xf32> to vector<8x8xf32>
    %262 = vector.shape_cast %238 : vector<8x8xf32> to vector<1x8x8xf32>
    %263 = vector.shape_cast %241 : vector<8x8xf32> to vector<1x8x8xf32>
    %264 = vector.shape_cast %244 : vector<8x8xf32> to vector<1x8x8xf32>
    %265 = vector.shape_cast %247 : vector<8x8xf32> to vector<1x8x8xf32>
    %266 = vector.shape_cast %250 : vector<8x8xf32> to vector<1x8x8xf32>
    %267 = vector.shape_cast %253 : vector<8x8xf32> to vector<1x8x8xf32>
    %268 = vector.shape_cast %256 : vector<8x8xf32> to vector<1x8x8xf32>
    %269 = vector.shape_cast %259 : vector<8x8xf32> to vector<1x8x8xf32>
    %270 = tpu.concatenate %262, %263, %264, %265, %266, %267, %268, %269 in 0 : vector<1x8x8xf32>, vector<1x8x8xf32>, vector<1x8x8xf32>, vector<1x8x8xf32>, vector<1x8x8xf32>, vector<1x8x8xf32>, vector<1x8x8xf32>, vector<1x8x8xf32> -> vector<8x8x8xf32>
    %271 = vector.shape_cast %239 : vector<8x8xf32> to vector<1x8x8xf32>
    %272 = vector.shape_cast %242 : vector<8x8xf32> to vector<1x8x8xf32>
    %273 = vector.shape_cast %245 : vector<8x8xf32> to vector<1x8x8xf32>
    %274 = vector.shape_cast %248 : vector<8x8xf32> to vector<1x8x8xf32>
    %275 = vector.shape_cast %251 : vector<8x8xf32> to vector<1x8x8xf32>
    %276 = vector.shape_cast %254 : vector<8x8xf32> to vector<1x8x8xf32>
    %277 = vector.shape_cast %257 : vector<8x8xf32> to vector<1x8x8xf32>
    %278 = vector.shape_cast %260 : vector<8x8xf32> to vector<1x8x8xf32>
    %279 = tpu.concatenate %271, %272, %273, %274, %275, %276, %277, %278 in 0 : vector<1x8x8xf32>, vector<1x8x8xf32>, vector<1x8x8xf32>, vector<1x8x8xf32>, vector<1x8x8xf32>, vector<1x8x8xf32>, vector<1x8x8xf32>, vector<1x8x8xf32> -> vector<8x8x8xf32>
    %280 = vector.shape_cast %240 : vector<8x8xf32> to vector<1x8x8xf32>
    %281 = vector.shape_cast %243 : vector<8x8xf32> to vector<1x8x8xf32>
    %282 = vector.shape_cast %246 : vector<8x8xf32> to vector<1x8x8xf32>
    %283 = vector.shape_cast %249 : vector<8x8xf32> to vector<1x8x8xf32>
    %284 = vector.shape_cast %252 : vector<8x8xf32> to vector<1x8x8xf32>
    %285 = vector.shape_cast %255 : vector<8x8xf32> to vector<1x8x8xf32>
    %286 = vector.shape_cast %258 : vector<8x8xf32> to vector<1x8x8xf32>
    %287 = vector.shape_cast %261 : vector<8x8xf32> to vector<1x8x8xf32>
    %288 = tpu.concatenate %280, %281, %282, %283, %284, %285, %286, %287 in 0 : vector<1x8x8xf32>, vector<1x8x8xf32>, vector<1x8x8xf32>, vector<1x8x8xf32>, vector<1x8x8xf32>, vector<1x8x8xf32>, vector<1x8x8xf32>, vector<1x8x8xf32> -> vector<8x8x8xf32>
    "tpu.trace_start"() <{level = 10 : i32, message = "bqd,bkd->bqk"}> : () -> ()
    %cst_81 = arith.constant dense<0.000000e+00> : vector<8x8x8xf32>
    %289 = tpu.matmul %270, %279, %cst_81 {dimension_numbers = #tpu.dot_dimension_numbers<[2], [2], [1], [1], [0, 0, 0, 1, 1, 1], [0], [0]>} : vector<8x8x8xf32>, vector<8x8x8xf32>, vector<8x8x8xf32> -> vector<8x8x8xf32>
    "tpu.trace_stop"() : () -> ()
    %cst_82 = arith.constant 0.353553385 : f32
    %290 = vector.broadcast %cst_82 : f32 to vector<8x8x8xf32>
    %291 = arith.mulf %289, %290 : vector<8x8x8xf32>
    %cst_83 = arith.constant -1.000000e+30 : f32
    %292 = vector.broadcast %cst_83 : f32 to vector<8x8x8xf32>
    %293 = arith.select %23, %291, %292 : vector<8x8x8xi1>, vector<8x8x8xf32>
    %cst_84 = arith.constant dense<0xFF800000> : vector<8x8xf32>
    %294 = vector.multi_reduction <maximumf>, %293, %cst_84 [2] : vector<8x8x8xf32> to vector<8x8xf32>
    %295 = vector.shape_cast %294 : vector<8x8xf32> to vector<8x8x1xf32>
    %296 = vector.broadcast %295 : vector<8x8x1xf32> to vector<8x8x8xf32>
    %297 = arith.subf %293, %296 : vector<8x8x8xf32>
    %298 = math.exp %297 : vector<8x8x8xf32>
    %cst_85 = arith.constant dense<0.000000e+00> : vector<8x8xf32>
    %299 = vector.multi_reduction <add>, %298, %cst_85 [2] : vector<8x8x8xf32> to vector<8x8xf32>
    %300 = vector.shape_cast %299 : vector<8x8xf32> to vector<8x8x1xf32>
    %301 = tpu.reciprocal %300 {approx = true} : vector<8x8x1xf32> -> vector<8x8x1xf32>
    %302 = vector.broadcast %301 : vector<8x8x1xf32> to vector<8x8x8xf32>
    %303 = arith.mulf %298, %302 : vector<8x8x8xf32>
    "tpu.trace_start"() <{level = 10 : i32, message = "bqk,bkd->bqd"}> : () -> ()
    %cst_86 = arith.constant dense<0.000000e+00> : vector<8x8x8xf32>
    %304 = tpu.matmul %303, %288, %cst_86 {dimension_numbers = #tpu.dot_dimension_numbers<[2], [1], [1], [2], [0, 0, 0, 1, 1, 2], [0], [0]>} : vector<8x8x8xf32>, vector<8x8x8xf32>, vector<8x8x8xf32> -> vector<8x8x8xf32>
    "tpu.trace_stop"() : () -> ()
    %305 = vector.extract_strided_slice %304 {offsets = [0, 0, 0], sizes = [1, 8, 8], strides = [1, 1, 1]} : vector<8x8x8xf32> to vector<1x8x8xf32>
    %306 = vector.shape_cast %305 : vector<1x8x8xf32> to vector<8x8xf32>
    %307 = vector.extract_strided_slice %304 {offsets = [1, 0, 0], sizes = [1, 8, 8], strides = [1, 1, 1]} : vector<8x8x8xf32> to vector<1x8x8xf32>
    %308 = vector.shape_cast %307 : vector<1x8x8xf32> to vector<8x8xf32>
    %309 = vector.extract_strided_slice %304 {offsets = [2, 0, 0], sizes = [1, 8, 8], strides = [1, 1, 1]} : vector<8x8x8xf32> to vector<1x8x8xf32>
    %310 = vector.shape_cast %309 : vector<1x8x8xf32> to vector<8x8xf32>
    %311 = vector.extract_strided_slice %304 {offsets = [3, 0, 0], sizes = [1, 8, 8], strides = [1, 1, 1]} : vector<8x8x8xf32> to vector<1x8x8xf32>
    %312 = vector.shape_cast %311 : vector<1x8x8xf32> to vector<8x8xf32>
    %313 = tpu.concatenate %306, %308, %310, %312 in 1 : vector<8x8xf32>, vector<8x8xf32>, vector<8x8xf32>, vector<8x8xf32> -> vector<8x32xf32>
    %314 = vector.extract_strided_slice %304 {offsets = [4, 0, 0], sizes = [1, 8, 8], strides = [1, 1, 1]} : vector<8x8x8xf32> to vector<1x8x8xf32>
    %315 = vector.shape_cast %314 : vector<1x8x8xf32> to vector<8x8xf32>
    %316 = vector.extract_strided_slice %304 {offsets = [5, 0, 0], sizes = [1, 8, 8], strides = [1, 1, 1]} : vector<8x8x8xf32> to vector<1x8x8xf32>
    %317 = vector.shape_cast %316 : vector<1x8x8xf32> to vector<8x8xf32>
    %318 = vector.extract_strided_slice %304 {offsets = [6, 0, 0], sizes = [1, 8, 8], strides = [1, 1, 1]} : vector<8x8x8xf32> to vector<1x8x8xf32>
    %319 = vector.shape_cast %318 : vector<1x8x8xf32> to vector<8x8xf32>
    %320 = vector.extract_strided_slice %304 {offsets = [7, 0, 0], sizes = [1, 8, 8], strides = [1, 1, 1]} : vector<8x8x8xf32> to vector<1x8x8xf32>
    %321 = vector.shape_cast %320 : vector<1x8x8xf32> to vector<8x8xf32>
    %322 = tpu.concatenate %315, %317, %319, %321 in 1 : vector<8x8xf32>, vector<8x8xf32>, vector<8x8xf32>, vector<8x8xf32> -> vector<8x32xf32>
    %323 = tpu.concatenate %313, %322 in 0 : vector<8x32xf32>, vector<8x32xf32> -> vector<16x32xf32>
    %c1_87 = arith.constant 1 : index
    %c0_88 = arith.constant 0 : index
    %c0_89 = arith.constant 0 : index
    %324 = vector.load %arg6[%c1_87, %c0_88, %c0_89] : memref<2x32x32xf32, #tpu.memory_space<vmem>>, vector<1x32x32xf32>
    %325 = vector.shape_cast %324 : vector<1x32x32xf32> to vector<32x32xf32>
    %cst_90 = arith.constant dense<0.000000e+00> : vector<16x32xf32>
    %326 = tpu.matmul %323, %325, %cst_90 {dimension_numbers = #tpu.dot_dimension_numbers<[1], [0], [0], [1], [0, 0, 1, 1], [], []>} : vector<16x32xf32>, vector<32x32xf32>, vector<16x32xf32> -> vector<16x32xf32>
    %c1_91 = arith.constant 1 : index
    %c0_92 = arith.constant 0 : index
    %c0_93 = arith.constant 0 : index
    %327 = vector.load %arg7[%c1_91, %c0_92, %c0_93] : memref<2x1x32xf32, #tpu.memory_space<vmem>>, vector<1x1x32xf32>
    %328 = vector.shape_cast %327 : vector<1x1x32xf32> to vector<1x32xf32>
    %329 = vector.broadcast %328 : vector<1x32xf32> to vector<16x32xf32>
    %330 = arith.addf %326, %329 : vector<16x32xf32>
    %331 = arith.addf %204, %330 : vector<16x32xf32>
    %c1_94 = arith.constant 1 : index
    %c0_95 = arith.constant 0 : index
    %c0_96 = arith.constant 0 : index
    %332 = vector.load %arg8[%c1_94, %c0_95, %c0_96] : memref<2x1x32xf32, #tpu.memory_space<vmem>>, vector<1x1x32xf32>
    %333 = vector.shape_cast %332 : vector<1x1x32xf32> to vector<1x32xf32>
    %c1_97 = arith.constant 1 : index
    %c0_98 = arith.constant 0 : index
    %c0_99 = arith.constant 0 : index
    %334 = vector.load %arg9[%c1_97, %c0_98, %c0_99] : memref<2x1x32xf32, #tpu.memory_space<vmem>>, vector<1x1x32xf32>
    %335 = vector.shape_cast %334 : vector<1x1x32xf32> to vector<1x32xf32>
    %cst_100 = arith.constant dense<0.000000e+00> : vector<16xf32>
    %336 = vector.multi_reduction <add>, %331, %cst_100 [1] : vector<16x32xf32> to vector<16xf32>
    %337 = vector.shape_cast %336 : vector<16xf32> to vector<16x1xf32>
    %cst_101 = arith.constant 3.200000e+01 : f32
    %338 = vector.broadcast %cst_101 : f32 to vector<16x1xf32>
    %339 = arith.divf %337, %338 : vector<16x1xf32>
    %340 = vector.broadcast %339 : vector<16x1xf32> to vector<16x32xf32>
    %341 = arith.subf %331, %340 : vector<16x32xf32>
    %342 = arith.mulf %341, %341 : vector<16x32xf32>
    %cst_102 = arith.constant dense<0.000000e+00> : vector<16xf32>
    %343 = vector.multi_reduction <add>, %342, %cst_102 [1] : vector<16x32xf32> to vector<16xf32>
    %344 = vector.shape_cast %343 : vector<16xf32> to vector<16x1xf32>
    %cst_103 = arith.constant 3.200000e+01 : f32
    %345 = vector.broadcast %cst_103 : f32 to vector<16x1xf32>
    %346 = arith.divf %344, %345 : vector<16x1xf32>
    %347 = vector.broadcast %339 : vector<16x1xf32> to vector<16x32xf32>
    %348 = arith.subf %331, %347 : vector<16x32xf32>
    %cst_104 = arith.constant 9.99999974E-6 : f32
    %349 = vector.broadcast %cst_104 : f32 to vector<16x1xf32>
    %350 = arith.addf %346, %349 : vector<16x1xf32>
    %351 = math.rsqrt %350 : vector<16x1xf32>
    %352 = vector.broadcast %351 : vector<16x1xf32> to vector<16x32xf32>
    %353 = arith.mulf %348, %352 : vector<16x32xf32>
    %354 = vector.broadcast %333 : vector<1x32xf32> to vector<16x32xf32>
    %355 = arith.mulf %353, %354 : vector<16x32xf32>
    %356 = vector.broadcast %335 : vector<1x32xf32> to vector<16x32xf32>
    %357 = arith.addf %355, %356 : vector<16x32xf32>
    %c1_105 = arith.constant 1 : index
    %c0_106 = arith.constant 0 : index
    %c0_107 = arith.constant 0 : index
    %358 = vector.load %arg10[%c1_105, %c0_106, %c0_107] : memref<2x32x128xf32, #tpu.memory_space<vmem>>, vector<1x32x128xf32>
    %359 = vector.shape_cast %358 : vector<1x32x128xf32> to vector<32x128xf32>
    %cst_108 = arith.constant dense<0.000000e+00> : vector<16x128xf32>
    %360 = tpu.matmul %357, %359, %cst_108 {dimension_numbers = #tpu.dot_dimension_numbers<[1], [0], [0], [1], [0, 0, 1, 1], [], []>} : vector<16x32xf32>, vector<32x128xf32>, vector<16x128xf32> -> vector<16x128xf32>
    %c1_109 = arith.constant 1 : index
    %c0_110 = arith.constant 0 : index
    %c0_111 = arith.constant 0 : index
    %361 = vector.load %arg11[%c1_109, %c0_110, %c0_111] : memref<2x1x128xf32, #tpu.memory_space<vmem>>, vector<1x1x128xf32>
    %362 = vector.shape_cast %361 : vector<1x1x128xf32> to vector<1x128xf32>
    %363 = vector.broadcast %362 : vector<1x128xf32> to vector<16x128xf32>
    %364 = arith.addf %360, %363 : vector<16x128xf32>
    %cst_112 = arith.constant 5.000000e-01 : f32
    %365 = vector.broadcast %cst_112 : f32 to vector<16x128xf32>
    %366 = arith.mulf %365, %364 : vector<16x128xf32>
    %cst_113 = arith.constant 4.471500e-02 : f32
    %367 = vector.broadcast %cst_113 : f32 to vector<16x128xf32>
    %368 = arith.mulf %367, %364 : vector<16x128xf32>
    %369 = arith.mulf %368, %364 : vector<16x128xf32>
    %370 = arith.mulf %369, %364 : vector<16x128xf32>
    %371 = arith.addf %364, %370 : vector<16x128xf32>
    %cst_114 = arith.constant 0.797884583 : f32
    %372 = vector.broadcast %cst_114 : f32 to vector<16x128xf32>
    %373 = arith.mulf %372, %371 : vector<16x128xf32>
    %374 = math.tanh %373 : vector<16x128xf32>
    %cst_115 = arith.constant 1.000000e+00 : f32
    %375 = vector.broadcast %cst_115 : f32 to vector<16x128xf32>
    %376 = arith.addf %375, %374 : vector<16x128xf32>
    %377 = arith.mulf %366, %376 : vector<16x128xf32>
    %c1_116 = arith.constant 1 : index
    %c0_117 = arith.constant 0 : index
    %c0_118 = arith.constant 0 : index
    %378 = vector.load %arg12[%c1_116, %c0_117, %c0_118] : memref<2x128x32xf32, #tpu.memory_space<vmem>>, vector<1x128x32xf32>
    %379 = vector.shape_cast %378 : vector<1x128x32xf32> to vector<128x32xf32>
    %cst_119 = arith.constant dense<0.000000e+00> : vector<16x32xf32>
    %380 = tpu.matmul %377, %379, %cst_119 {dimension_numbers = #tpu.dot_dimension_numbers<[1], [0], [0], [1], [0, 0, 1, 1], [], []>} : vector<16x128xf32>, vector<128x32xf32>, vector<16x32xf32> -> vector<16x32xf32>
    %c1_120 = arith.constant 1 : index
    %c0_121 = arith.constant 0 : index
    %c0_122 = arith.constant 0 : index
    %381 = vector.load %arg13[%c1_120, %c0_121, %c0_122] : memref<2x1x32xf32, #tpu.memory_space<vmem>>, vector<1x1x32xf32>
    %382 = vector.shape_cast %381 : vector<1x1x32xf32> to vector<1x32xf32>
    %383 = vector.broadcast %382 : vector<1x32xf32> to vector<16x32xf32>
    %384 = arith.addf %380, %383 : vector<16x32xf32>
    %385 = arith.addf %331, %384 : vector<16x32xf32>
    %c0_123 = arith.constant 0 : index
    %c0_124 = arith.constant 0 : index
    %386 = vector.load %arg14[%c0_123, %c0_124] : memref<1x32xf32, #tpu.memory_space<vmem>>, vector<1x32xf32>
    %c0_125 = arith.constant 0 : index
    %c0_126 = arith.constant 0 : index
    %387 = vector.load %arg15[%c0_125, %c0_126] : memref<1x32xf32, #tpu.memory_space<vmem>>, vector<1x32xf32>
    %cst_127 = arith.constant dense<0.000000e+00> : vector<16xf32>
    %388 = vector.multi_reduction <add>, %385, %cst_127 [1] : vector<16x32xf32> to vector<16xf32>
    %389 = vector.shape_cast %388 : vector<16xf32> to vector<16x1xf32>
    %cst_128 = arith.constant 3.200000e+01 : f32
    %390 = vector.broadcast %cst_128 : f32 to vector<16x1xf32>
    %391 = arith.divf %389, %390 : vector<16x1xf32>
    %392 = vector.broadcast %391 : vector<16x1xf32> to vector<16x32xf32>
    %393 = arith.subf %385, %392 : vector<16x32xf32>
    %394 = arith.mulf %393, %393 : vector<16x32xf32>
    %cst_129 = arith.constant dense<0.000000e+00> : vector<16xf32>
    %395 = vector.multi_reduction <add>, %394, %cst_129 [1] : vector<16x32xf32> to vector<16xf32>
    %396 = vector.shape_cast %395 : vector<16xf32> to vector<16x1xf32>
    %cst_130 = arith.constant 3.200000e+01 : f32
    %397 = vector.broadcast %cst_130 : f32 to vector<16x1xf32>
    %398 = arith.divf %396, %397 : vector<16x1xf32>
    %399 = vector.broadcast %391 : vector<16x1xf32> to vector<16x32xf32>
    %400 = arith.subf %385, %399 : vector<16x32xf32>
    %cst_131 = arith.constant 9.99999974E-6 : f32
    %401 = vector.broadcast %cst_131 : f32 to vector<16x1xf32>
    %402 = arith.addf %398, %401 : vector<16x1xf32>
    %403 = math.rsqrt %402 : vector<16x1xf32>
    %404 = vector.broadcast %403 : vector<16x1xf32> to vector<16x32xf32>
    %405 = arith.mulf %400, %404 : vector<16x32xf32>
    %406 = vector.broadcast %386 : vector<1x32xf32> to vector<16x32xf32>
    %407 = arith.mulf %405, %406 : vector<16x32xf32>
    %408 = vector.broadcast %387 : vector<1x32xf32> to vector<16x32xf32>
    %409 = arith.addf %407, %408 : vector<16x32xf32>
    %c0_132 = arith.constant 0 : index
    %c0_133 = arith.constant 0 : index
    %410 = vector.load %arg17[%c0_132, %c0_133] : memref<16x32xf32, #tpu.memory_space<vmem>>, vector<16x32xf32>
    tpu.vector_store %arg17[%c0_132, %c0_133], %409 {strides = array<i32>} : memref<16x32xf32, #tpu.memory_space<vmem>>, vector<16x32xf32>,
    %c0_134 = arith.constant 0 : index
    %c0_135 = arith.constant 0 : index
    %411 = vector.load %arg16[%c0_134, %c0_135] : memref<32x128xf32, #tpu.memory_space<vmem>>, vector<32x128xf32>
    %cst_136 = arith.constant dense<0.000000e+00> : vector<16x128xf32>
    %412 = tpu.matmul %409, %411, %cst_136 {dimension_numbers = #tpu.dot_dimension_numbers<[1], [0], [0], [1], [0, 0, 1, 1], [], []>} : vector<16x32xf32>, vector<32x128xf32>, vector<16x128xf32> -> vector<16x128xf32>
    %c0_137 = arith.constant 0 : index
    %c0_138 = arith.constant 0 : index
    %413 = vector.load %arg18[%c0_137, %c0_138] : memref<16x128xf32, #tpu.memory_space<vmem>>, vector<16x128xf32>
    tpu.vector_store %arg18[%c0_137, %c0_138], %412 {strides = array<i32>} : memref<16x128xf32, #tpu.memory_space<vmem>>, vector<16x128xf32>,
    return
  }
}

</mosaic_0001>

<llo_original>
// kernel: custom_gpt2_forward.1
$region0: #{custom_gpt2_forward.1}
  #allocation0 [shape = 'u32[]', space=smem, size = 0x4, offset = 0x4, fixed_abs, tag = 'smem constant byte address 0x4 - core index']
  #allocation1 [shape = 'u32[144,128]{1,0:T(1,128)}', space=vmem, size = 0x12000, scoped, tag = 'internal scratch']
  %s0 = inlined_call_operand.vmem [shape: f32[16,32], index: 0, kind: input, shape index: {}]
  %s1 = inlined_call_operand.vmem [shape: f32[2,8], index: 1, kind: input, shape index: {}]
  %s2 = inlined_call_operand.vmem [shape: f32[2,1,32], index: 2, kind: input, shape index: {}]
  %s3 = inlined_call_operand.vmem [shape: f32[2,1,32], index: 3, kind: input, shape index: {}]
  %s4 = inlined_call_operand.vmem [shape: f32[2,32,96], index: 4, kind: input, shape index: {}]
  %s5 = inlined_call_operand.vmem [shape: f32[2,1,96], index: 5, kind: input, shape index: {}]
  %s6 = inlined_call_operand.vmem [shape: f32[2,32,32], index: 6, kind: input, shape index: {}]
  %s7 = inlined_call_operand.vmem [shape: f32[2,1,32], index: 7, kind: input, shape index: {}]
  %s8 = inlined_call_operand.vmem [shape: f32[2,1,32], index: 8, kind: input, shape index: {}]
  %s9 = inlined_call_operand.vmem [shape: f32[2,1,32], index: 9, kind: input, shape index: {}]
  %s10 = inlined_call_operand.vmem [shape: f32[2,32,128], index: 10, kind: input, shape index: {}]
  %s11 = inlined_call_operand.vmem [shape: f32[2,1,128], index: 11, kind: input, shape index: {}]
  %s12 = inlined_call_operand.vmem [shape: f32[2,128,32], index: 12, kind: input, shape index: {}]
  %s13 = inlined_call_operand.vmem [shape: f32[2,1,32], index: 13, kind: input, shape index: {}]
  %s14 = inlined_call_operand.vmem [shape: f32[1,32], index: 14, kind: input, shape index: {}]
  %s15 = inlined_call_operand.vmem [shape: f32[1,32], index: 15, kind: input, shape index: {}]
  %s16 = inlined_call_operand.vmem [shape: f32[32,128], index: 16, kind: input, shape index: {}]
  %s17 = inlined_call_operand.hbm [shape: f32[16,32], index: 17, kind: output, shape index: {0}]
  %s18 = inlined_call_operand.hbm [shape: f32[16,128], index: 18, kind: output, shape index: {1}]
  %19 = xla_tuple %s17, %s18
  %s20 = sld [smem:[#allocation0]]
  $region86: #{custom_gpt2_forward.1} parent=0
    _
  %s22 = ssub.s32 1, %s20
  %s23 = scalar_select 0, %s22, %s20
  $region1: #{custom_gpt2_forward.1} parent=0
    #allocation2 [shape = 'u8[8192]{0}', space=vmem, size = 0x2000, scoped, tag = 'output window, operand 0, single buffered']
    #allocation3 [shape = 's32[1]{0}', space=sflag, size = 0x4, scoped, tag = 'scoped memory for custom_gpt2_forward.1']
    #allocation4 [shape = 'u8[8192]{0}', space=vmem, size = 0x2000, scoped, tag = 'output window, operand 1, single buffered']
    #allocation5 [shape = 's32[1]{0}', space=sflag, size = 0x4, scoped, tag = 'scoped memory for custom_gpt2_forward.1']
    %24 = vsyncpa [#allocation3], 0
    %25 = vsyncpa [#allocation5], 0
    // Predicated region
    $region2: #{custom_gpt2_forward.1} parent=1 // pred_check
      _
    $region3: #{custom_gpt2_forward.1} parent=1 // pred_check_branch
      %27 = sbr.rel (0) target = $region5
    $region4: #{custom_gpt2_forward.1} parent=1 // pred_region
      _
    $region5: #{custom_gpt2_forward.1} parent=1 // pred_fallthru
      _
    // Predicated region
    $region6: #{custom_gpt2_forward.1} parent=1 // pred_check
      _
    $region7: #{custom_gpt2_forward.1} parent=1 // pred_check_branch
      %29 = sbr.rel (0) target = $region9
    $region8: #{custom_gpt2_forward.1} parent=1 // pred_region
      _
    $region9: #{custom_gpt2_forward.1} parent=1 // pred_fallthru
      _
    // Predicated region
    $region10: #{custom_gpt2_forward.1} parent=1 // pred_check
      _
    $region11: #{custom_gpt2_forward.1} parent=1 // pred_check_branch
      %31 = sbr.rel (0) target = $region13
    $region12: #{custom_gpt2_forward.1} parent=1 // pred_region
      _
    $region13: #{custom_gpt2_forward.1} parent=1 // pred_fallthru
      _
    // Predicated region
    $region14: #{custom_gpt2_forward.1} parent=1 // pred_check
      _
    $region15: #{custom_gpt2_forward.1} parent=1 // pred_check_branch
      %33 = sbr.rel (0) target = $region17
    $region16: #{custom_gpt2_forward.1} parent=1 // pred_region
      _
    $region17: #{custom_gpt2_forward.1} parent=1 // pred_fallthru
      _
    // Predicated region
    $region18: #{custom_gpt2_forward.1} parent=1 // pred_check
      _
    $region19: #{custom_gpt2_forward.1} parent=1 // pred_check_branch
      %35 = sbr.rel (0) target = $region21
    $region20: #{custom_gpt2_forward.1} parent=1 // pred_region
      _
    $region21: #{custom_gpt2_forward.1} parent=1 // pred_fallthru
      _
    // Predicated region
    $region22: #{custom_gpt2_forward.1} parent=1 // pred_check
      _
    $region23: #{custom_gpt2_forward.1} parent=1 // pred_check_branch
      %37 = sbr.rel (0) target = $region25
    $region24: #{custom_gpt2_forward.1} parent=1 // pred_region
      _
    $region25: #{custom_gpt2_forward.1} parent=1 // pred_fallthru
      _
    // Predicated region
    $region26: #{custom_gpt2_forward.1} parent=1 // pred_check
      _
    $region27: #{custom_gpt2_forward.1} parent=1 // pred_check_branch
      %39 = sbr.rel (0) target = $region29
    $region28: #{custom_gpt2_forward.1} parent=1 // pred_region
      _
    $region29: #{custom_gpt2_forward.1} parent=1 // pred_fallthru
      _
    // Predicated region
    $region30: #{custom_gpt2_forward.1} parent=1 // pred_check
      _
    $region31: #{custom_gpt2_forward.1} parent=1 // pred_check_branch
      %41 = sbr.rel (0) target = $region33
    $region32: #{custom_gpt2_forward.1} parent=1 // pred_region
      _
    $region33: #{custom_gpt2_forward.1} parent=1 // pred_fallthru
      _
    // Predicated region
    $region34: #{custom_gpt2_forward.1} parent=1 // pred_check
      _
    $region35: #{custom_gpt2_forward.1} parent=1 // pred_check_branch
      %43 = sbr.rel (0) target = $region37
    $region36: #{custom_gpt2_forward.1} parent=1 // pred_region
      _
    $region37: #{custom_gpt2_forward.1} parent=1 // pred_fallthru
      _
    // Predicated region
    $region38: #{custom_gpt2_forward.1} parent=1 // pred_check
      _
    $region39: #{custom_gpt2_forward.1} parent=1 // pred_check_branch
      %45 = sbr.rel (0) target = $region41
    $region40: #{custom_gpt2_forward.1} parent=1 // pred_region
      _
    $region41: #{custom_gpt2_forward.1} parent=1 // pred_fallthru
      _
    // Predicated region
    $region42: #{custom_gpt2_forward.1} parent=1 // pred_check
      _
    $region43: #{custom_gpt2_forward.1} parent=1 // pred_check_branch
      %47 = sbr.rel (0) target = $region45
    $region44: #{custom_gpt2_forward.1} parent=1 // pred_region
      _
    $region45: #{custom_gpt2_forward.1} parent=1 // pred_fallthru
      _
    // Predicated region
    $region46: #{custom_gpt2_forward.1} parent=1 // pred_check
      _
    $region47: #{custom_gpt2_forward.1} parent=1 // pred_check_branch
      %49 = sbr.rel (0) target = $region49
    $region48: #{custom_gpt2_forward.1} parent=1 // pred_region
      _
    $region49: #{custom_gpt2_forward.1} parent=1 // pred_fallthru
      _
    // Predicated region
    $region50: #{custom_gpt2_forward.1} parent=1 // pred_check
      _
    $region51: #{custom_gpt2_forward.1} parent=1 // pred_check_branch
      %51 = sbr.rel (0) target = $region53
    $region52: #{custom_gpt2_forward.1} parent=1 // pred_region
      _
    $region53: #{custom_gpt2_forward.1} parent=1 // pred_fallthru
      _
    // Predicated region
    $region54: #{custom_gpt2_forward.1} parent=1 // pred_check
      _
    $region55: #{custom_gpt2_forward.1} parent=1 // pred_check_branch
      %53 = sbr.rel (0) target = $region57
    $region56: #{custom_gpt2_forward.1} parent=1 // pred_region
      _
    $region57: #{custom_gpt2_forward.1} parent=1 // pred_fallthru
      _
    // Predicated region
    $region58: #{custom_gpt2_forward.1} parent=1 // pred_check
      _
    $region59: #{custom_gpt2_forward.1} parent=1 // pred_check_branch
      %55 = sbr.rel (0) target = $region61
    $region60: #{custom_gpt2_forward.1} parent=1 // pred_region
      _
    $region61: #{custom_gpt2_forward.1} parent=1 // pred_fallthru
      _
    // Predicated region
    $region62: #{custom_gpt2_forward.1} parent=1 // pred_check
      _
    $region63: #{custom_gpt2_forward.1} parent=1 // pred_check_branch
      %57 = sbr.rel (0) target = $region65
    $region64: #{custom_gpt2_forward.1} parent=1 // pred_region
      _
    $region65: #{custom_gpt2_forward.1} parent=1 // pred_fallthru
      _
    // Predicated region
    $region66: #{custom_gpt2_forward.1} parent=1 // pred_check
      _
    $region67: #{custom_gpt2_forward.1} parent=1 // pred_check_branch
      %59 = sbr.rel (0) target = $region69
    $region68: #{custom_gpt2_forward.1} parent=1 // pred_region
      _
    $region69: #{custom_gpt2_forward.1} parent=1 // pred_fallthru
      _
    %v60 = vld [vmem:[%s0] sm:$0xff]
    %v61 = vld [vmem:[%s0 + $0x8] sm:$0xff]
    %v62 = vlaneseq
    %v63 = vshrl.u32 %v62, 7
    %v64 = vlaneseq
    %v65 = vand.u32 %v64, 127
    %vm66 = vcmp.ge.s32.totalorder %v63, %v65
    %v67 = vld [vmem:[%s1] sm:$0x3]
    %vm68 = vcmp.gt.f32.partialorder %v67, 0.5
    %v69 = vsel %vm68, 1, 0
    %v70 = vlaneseq
    %v71 = vshrl.u32 %v70, 7
    %v72 = vsub.s32 0, %v71
    %v73 = vrot.slane %v69, %v72
    %vm74 = vcmp.eq.s32.totalorder %v73, 1
    %vm75 = vmand %vm66, %vm74
    %v76 = vlaneseq
    %v77 = vshrl.u32 %v76, 7
    %v78 = vsub.s32 1, %v77
    %v79 = vrot.slane %v69, %v78
    %vm80 = vcmp.eq.s32.totalorder %v79, 1
    %vm81 = vmand %vm66, %vm80
    %v82 = vld [vmem:[%s2] sm:$0x1]
    %v83 = vld [vmem:[%s3] sm:$0x1]
    %vm84 = vcmask 261120
    %v85 = vsel %vm84, %v60, 0.0
    %86 = vadd.xlane.f32.xlu0 %v85
    %v87 = vpop.xlane.xlu0 %86
    %v88 = vsel %vm84, %v61, 0.0
    %89 = vadd.xlane.f32.xlu0 %v88
    %v90 = vpop.xlane.xlu0 %89
    %v91 = vrcp.pop 32.0
    %v92 = vmul.f32 %v87, %v91
    %v93 = vmul.f32 %v90, %v91
    %v94 = vsub.f32 %v60, %v92
    %v95 = vsub.f32 %v61, %v93
    %v96 = vmul.f32 %v94, %v94
    %v97 = vmul.f32 %v95, %v95
    %v98 = vsel %vm84, %v96, 0.0
    %99 = vadd.xlane.f32.xlu0 %v98
    %v100 = vpop.xlane.xlu0 %99
    %v101 = vsel %vm84, %v97, 0.0
    %102 = vadd.xlane.f32.xlu0 %v101
    %v103 = vpop.xlane.xlu0 %102
    %v104 = vmul.f32 %v100, %v91
    %v105 = vmul.f32 %v103, %v91
    %v106 = vadd.f32 %v104, 1e-05
    %v107 = vadd.f32 %v105, 1e-05
    %v108 = vrsqrt.pop %v106
    %v109 = vrsqrt.pop %v107
    %v110 = vmul.f32 %v94, %v108
    %v111 = vmul.f32 %v95, %v109
    %v113 = vlaneseq
    %v114 = vshrl.u32 %v113, 7
    %v115 = vsub.s32 0, %v114
    %v116 = vrot.slane %v82, %v115
    %v118 = vmul.f32 %v110, %v116
    %v119 = vmul.f32 %v111, %v116
    %v121 = vlaneseq
    %v122 = vshrl.u32 %v121, 7
    %v123 = vsub.s32 0, %v122
    %v124 = vrot.slane %v83, %v123
    %v126 = vadd.f32 %v118, %v124
    %v127 = vadd.f32 %v119, %v124
    %v128 = vld [vmem:[%s4] sm:$0xff]
    %v129 = vld [vmem:[%s4 + $0x8] sm:$0xff]
    %v130 = vld [vmem:[%s4 + $0x10] sm:$0xff]
    %v131 = vld [vmem:[%s4 + $0x18] sm:$0xff]
    %v132 = vld [vmem:[%s5] sm:$0x1]
    %v134 = vlaneseq
    %v135 = vshrl.u32 %v134, 7
    %v136 = vsub.s32 0, %v135
    %v137 = vrot.slane %v132, %v136
    %v140 = vsel %vm84, %v126, 0
    %v143 = vsel %vm84, %v127, 0
    %145 = vmatprep.subr.mxu0 0.0
    %146 = vmatpush1.msra.mxu0 %v128
    %147 = vmatprep.subr.mxu0 0.0
    %148 = vmatpush1.msra.mxu0 %v129
    %149 = vmatprep.subr.mxu0 0.0
    %150 = vmatpush1.msra.mxu0 %v130
    %151 = vmatprep.subr.mxu0 0.0
    %152 = vmatpush1.msra.mxu0 %v131
    %153 = vmatprep.subr.mxu0 0.0
    %154 = vmatpush1.msra.mxu0 0.0
    %155 = vmatprep.subr.mxu0 0.0
    %156 = vmatpush1.msra.mxu0 0.0
    %157 = vmatprep.subr.mxu0 0.0
    %158 = vmatpush1.msra.mxu0 0.0
    %159 = vmatprep.subr.mxu0 0.0
    %160 = vmatpush1.msra.mxu0 0.0
    %161 = vmatprep.subr.mxu0 0.0
    %162 = vmatpush1.msra.mxu0 0.0
    %163 = vmatprep.subr.mxu0 0.0
    %164 = vmatpush1.msra.mxu0 0.0
    %165 = vmatprep.subr.mxu0 0.0
    %166 = vmatpush1.msra.mxu0 0.0
    %167 = vmatprep.subr.mxu0 0.0
    %168 = vmatpush1.msra.mxu0 0.0
    %169 = vmatprep.subr.mxu0 0.0
    %170 = vmatpush1.msra.mxu0 0.0
    %171 = vmatprep.subr.mxu0 0.0
    %172 = vmatpush1.msra.mxu0 0.0
    %173 = vmatprep.subr.mxu0 0.0
    %174 = vmatpush1.msra.mxu0 0.0
    %175 = vmatprep.subr.mxu0 0.0
    %176 = vmatpush1.msra.mxu0 0.0
    %177 = vmatprep.subr.mxu0 0.0
    %178 = vmatpush1.msra.mxu0 0.0
    %179 = vmatprep.subr.mxu0 0.0
    %180 = vmatpush1.msra.mxu0 0.0
    %181 = vmatprep.subr.mxu0 0.0
    %182 = vmatpush1.msra.mxu0 0.0
    %183 = vmatprep.subr.mxu0 0.0
    %184 = vmatpush1.msra.mxu0 0.0
    %185 = vmatprep.subr.mxu0 0.0
    %186 = vmatpush1.msra.mxu0 0.0
    %187 = vmatprep.subr.mxu0 0.0
    %188 = vmatpush1.msra.mxu0 0.0
    %189 = vmatprep.subr.mxu0 0.0
    %190 = vmatpush1.msra.mxu0 0.0
    %191 = vmatprep.subr.mxu0 0.0
    %192 = vmatpush1.msra.mxu0 0.0
    %193 = vmatprep.subr.mxu0 0.0
    %194 = vmatpush1.msra.mxu0 0.0
    %195 = vmatprep.subr.mxu0 0.0
    %196 = vmatpush1.msra.mxu0 0.0
    %197 = vmatprep.subr.mxu0 0.0
    %198 = vmatpush1.msra.mxu0 0.0
    %199 = vmatprep.subr.mxu0 0.0
    %200 = vmatpush1.msra.mxu0 0.0
    %201 = vmatprep.subr.mxu0 0.0
    %202 = vmatpush1.msra.mxu0 0.0
    %203 = vmatprep.subr.mxu0 0.0
    %204 = vmatpush1.msra.mxu0 0.0
    %205 = vmatprep.subr.mxu0 0.0
    %206 = vmatpush1.msra.mxu0 0.0
    %207 = vmatprep.subr.mxu0 0.0
    %208 = vmatpush1.msra.mxu0 0.0
    %209 = vmatprep.mubr.f32.mxu0 0.0
    %210 = vmatmul.mubr.f32.gmra.mrb[0].mxu0 %v140
    %v211 = vpop.f32.mrb[0].mxu0
    %v212 = vadd.f32 %v137, %v211
    %v213 = vpop.f32.mrb[0].mxu0
    %214 = vmatprep.mubr.f32.mxu0 0.0
    %215 = vmatmul.mubr.f32.gmra.mrb[0].mxu0 %v143
    %v216 = vpop.f32.mrb[0].mxu0
    %v217 = vadd.f32 %v137, %v216
    %v218 = vpop.f32.mrb[0].mxu0
    %219 = vdwg.mxu0
    %221 = vrot.lane.b32.xlu0 %v212, 120
    %v222 = vpop.permute.xlu0 %221
    %223 = vrot.lane.b32.xlu0 %v212, 112
    %v224 = vpop.permute.xlu0 %223
    %225 = vrot.lane.b32.xlu0 %v212, 104
    %v226 = vpop.permute.xlu0 %225
    %228 = vrot.lane.b32.xlu0 %v217, 120
    %v229 = vpop.permute.xlu0 %228
    %230 = vrot.lane.b32.xlu0 %v217, 112
    %v231 = vpop.permute.xlu0 %230
    %232 = vrot.lane.b32.xlu0 %v217, 104
    %v233 = vpop.permute.xlu0 %232
    %234 = vrot.lane.b32.xlu0 %v212, 96
    %v235 = vpop.permute.xlu0 %234
    %vm236 = vcmask 64512
    %v237 = vsel %vm236, %v212, 0
    %v239 = vsel %vm236, %v235, 0
    %241 = vmatprep.subr.mxu0 0.0
    %242 = vmatpush1.xpose.msra.mxu0 %v239
    %243 = vmatprep.subr.mxu0 0.0
    %244 = vmatpush1.xpose.msra.mxu0 0.0
    %245 = vmatprep.subr.mxu0 0.0
    %246 = vmatpush1.xpose.msra.mxu0 0.0
    %247 = vmatprep.subr.mxu0 0.0
    %248 = vmatpush1.xpose.msra.mxu0 0.0
    %249 = vmatprep.subr.mxu0 0.0
    %250 = vmatpush1.xpose.msra.mxu0 0.0
    %251 = vmatprep.subr.mxu0 0.0
    %252 = vmatpush1.xpose.msra.mxu0 0.0
    %253 = vmatprep.subr.mxu0 0.0
    %254 = vmatpush1.xpose.msra.mxu0 0.0
    %255 = vmatprep.subr.mxu0 0.0
    %256 = vmatpush1.xpose.msra.mxu0 0.0
    %257 = vmatprep.subr.mxu0 0.0
    %258 = vmatpush1.xpose.msra.mxu0 0.0
    %259 = vmatprep.subr.mxu0 0.0
    %260 = vmatpush1.xpose.msra.mxu0 0.0
    %261 = vmatprep.subr.mxu0 0.0
    %262 = vmatpush1.xpose.msra.mxu0 0.0
    %263 = vmatprep.subr.mxu0 0.0
    %264 = vmatpush1.xpose.msra.mxu0 0.0
    %265 = vmatprep.subr.mxu0 0.0
    %266 = vmatpush1.xpose.msra.mxu0 0.0
    %267 = vmatprep.subr.mxu0 0.0
    %268 = vmatpush1.xpose.msra.mxu0 0.0
    %269 = vmatprep.subr.mxu0 0.0
    %270 = vmatpush1.xpose.msra.mxu0 0.0
    %271 = vmatprep.subr.mxu0 0.0
    %272 = vmatpush1.xpose.msra.mxu0 0.0
    %273 = vmatprep.subr.mxu0 0.0
    %274 = vmatpush1.xpose.msra.mxu0 0.0
    %275 = vmatprep.subr.mxu0 0.0
    %276 = vmatpush1.xpose.msra.mxu0 0.0
    %277 = vmatprep.subr.mxu0 0.0
    %278 = vmatpush1.xpose.msra.mxu0 0.0
    %279 = vmatprep.subr.mxu0 0.0
    %280 = vmatpush1.xpose.msra.mxu0 0.0
    %281 = vmatprep.subr.mxu0 0.0
    %282 = vmatpush1.xpose.msra.mxu0 0.0
    %283 = vmatprep.subr.mxu0 0.0
    %284 = vmatpush1.xpose.msra.mxu0 0.0
    %285 = vmatprep.subr.mxu0 0.0
    %286 = vmatpush1.xpose.msra.mxu0 0.0
    %287 = vmatprep.subr.mxu0 0.0
    %288 = vmatpush1.xpose.msra.mxu0 0.0
    %289 = vmatprep.subr.mxu0 0.0
    %290 = vmatpush1.xpose.msra.mxu0 0.0
    %291 = vmatprep.subr.mxu0 0.0
    %292 = vmatpush1.xpose.msra.mxu0 0.0
    %293 = vmatprep.subr.mxu0 0.0
    %294 = vmatpush1.xpose.msra.mxu0 0.0
    %295 = vmatprep.subr.mxu0 0.0
    %296 = vmatpush1.xpose.msra.mxu0 0.0
    %297 = vmatprep.subr.mxu0 0.0
    %298 = vmatpush1.xpose.msra.mxu0 0.0
    %299 = vmatprep.subr.mxu0 0.0
    %300 = vmatpush1.xpose.msra.mxu0 0.0
    %301 = vmatprep.subr.mxu0 0.0
    %302 = vmatpush1.xpose.msra.mxu0 0.0
    %303 = vmatprep.subr.mxu0 0.0
    %304 = vmatpush1.xpose.msra.mxu0 0.0
    %305 = vmatprep.mubr.f32.mxu0 0.0
    %306 = vmatmul.mubr.f32.gmra.mrb[0].mxu0 %v237
    %v307 = vpop.f32.mrb[0].mxu0
    %v308 = vadd.f32 0.0, %v307
    %v309 = vpop.f32.mrb[0].mxu0
    %310 = vdwg.mxu0
    %311 = vrot.lane.b32.xlu0 %v222, 96
    %v312 = vpop.permute.xlu0 %311
    %v313 = vsel %vm236, %v222, 0
    %v315 = vsel %vm236, %v312, 0
    %317 = vmatprep.subr.mxu0 0.0
    %318 = vmatpush1.xpose.msra.mxu0 %v315
    %319 = vmatprep.subr.mxu0 0.0
    %320 = vmatpush1.xpose.msra.mxu0 0.0
    %321 = vmatprep.subr.mxu0 0.0
    %322 = vmatpush1.xpose.msra.mxu0 0.0
    %323 = vmatprep.subr.mxu0 0.0
    %324 = vmatpush1.xpose.msra.mxu0 0.0
    %325 = vmatprep.subr.mxu0 0.0
    %326 = vmatpush1.xpose.msra.mxu0 0.0
    %327 = vmatprep.subr.mxu0 0.0
    %328 = vmatpush1.xpose.msra.mxu0 0.0
    %329 = vmatprep.subr.mxu0 0.0
    %330 = vmatpush1.xpose.msra.mxu0 0.0
    %331 = vmatprep.subr.mxu0 0.0
    %332 = vmatpush1.xpose.msra.mxu0 0.0
    %333 = vmatprep.subr.mxu0 0.0
    %334 = vmatpush1.xpose.msra.mxu0 0.0
    %335 = vmatprep.subr.mxu0 0.0
    %336 = vmatpush1.xpose.msra.mxu0 0.0
    %337 = vmatprep.subr.mxu0 0.0
    %338 = vmatpush1.xpose.msra.mxu0 0.0
    %339 = vmatprep.subr.mxu0 0.0
    %340 = vmatpush1.xpose.msra.mxu0 0.0
    %341 = vmatprep.subr.mxu0 0.0
    %342 = vmatpush1.xpose.msra.mxu0 0.0
    %343 = vmatprep.subr.mxu0 0.0
    %344 = vmatpush1.xpose.msra.mxu0 0.0
    %345 = vmatprep.subr.mxu0 0.0
    %346 = vmatpush1.xpose.msra.mxu0 0.0
    %347 = vmatprep.subr.mxu0 0.0
    %348 = vmatpush1.xpose.msra.mxu0 0.0
    %349 = vmatprep.subr.mxu0 0.0
    %350 = vmatpush1.xpose.msra.mxu0 0.0
    %351 = vmatprep.subr.mxu0 0.0
    %352 = vmatpush1.xpose.msra.mxu0 0.0
    %353 = vmatprep.subr.mxu0 0.0
    %354 = vmatpush1.xpose.msra.mxu0 0.0
    %355 = vmatprep.subr.mxu0 0.0
    %356 = vmatpush1.xpose.msra.mxu0 0.0
    %357 = vmatprep.subr.mxu0 0.0
    %358 = vmatpush1.xpose.msra.mxu0 0.0
    %359 = vmatprep.subr.mxu0 0.0
    %360 = vmatpush1.xpose.msra.mxu0 0.0
    %361 = vmatprep.subr.mxu0 0.0
    %362 = vmatpush1.xpose.msra.mxu0 0.0
    %363 = vmatprep.subr.mxu0 0.0
    %364 = vmatpush1.xpose.msra.mxu0 0.0
    %365 = vmatprep.subr.mxu0 0.0
    %366 = vmatpush1.xpose.msra.mxu0 0.0
    %367 = vmatprep.subr.mxu0 0.0
    %368 = vmatpush1.xpose.msra.mxu0 0.0
    %369 = vmatprep.subr.mxu0 0.0
    %370 = vmatpush1.xpose.msra.mxu0 0.0
    %371 = vmatprep.subr.mxu0 0.0
    %372 = vmatpush1.xpose.msra.mxu0 0.0
    %373 = vmatprep.subr.mxu0 0.0
    %374 = vmatpush1.xpose.msra.mxu0 0.0
    %375 = vmatprep.subr.mxu0 0.0
    %376 = vmatpush1.xpose.msra.mxu0 0.0
    %377 = vmatprep.subr.mxu0 0.0
    %378 = vmatpush1.xpose.msra.mxu0 0.0
    %379 = vmatprep.subr.mxu0 0.0
    %380 = vmatpush1.xpose.msra.mxu0 0.0
    %381 = vmatprep.mubr.f32.mxu0 0.0
    %382 = vmatmul.mubr.f32.gmra.mrb[0].mxu0 %v313
    %v383 = vpop.f32.mrb[0].mxu0
    %v384 = vadd.f32 0.0, %v383
    %v385 = vpop.f32.mrb[0].mxu0
    %386 = vdwg.mxu0
    %387 = vrot.lane.b32.xlu0 %v224, 96
    %v388 = vpop.permute.xlu0 %387
    %v389 = vsel %vm236, %v224, 0
    %v391 = vsel %vm236, %v388, 0
    %393 = vmatprep.subr.mxu0 0.0
    %394 = vmatpush1.xpose.msra.mxu0 %v391
    %395 = vmatprep.subr.mxu0 0.0
    %396 = vmatpush1.xpose.msra.mxu0 0.0
    %397 = vmatprep.subr.mxu0 0.0
    %398 = vmatpush1.xpose.msra.mxu0 0.0
    %399 = vmatprep.subr.mxu0 0.0
    %400 = vmatpush1.xpose.msra.mxu0 0.0
    %401 = vmatprep.subr.mxu0 0.0
    %402 = vmatpush1.xpose.msra.mxu0 0.0
    %403 = vmatprep.subr.mxu0 0.0
    %404 = vmatpush1.xpose.msra.mxu0 0.0
    %405 = vmatprep.subr.mxu0 0.0
    %406 = vmatpush1.xpose.msra.mxu0 0.0
    %407 = vmatprep.subr.mxu0 0.0
    %408 = vmatpush1.xpose.msra.mxu0 0.0
    %409 = vmatprep.subr.mxu0 0.0
    %410 = vmatpush1.xpose.msra.mxu0 0.0
    %411 = vmatprep.subr.mxu0 0.0
    %412 = vmatpush1.xpose.msra.mxu0 0.0
    %413 = vmatprep.subr.mxu0 0.0
    %414 = vmatpush1.xpose.msra.mxu0 0.0
    %415 = vmatprep.subr.mxu0 0.0
    %416 = vmatpush1.xpose.msra.mxu0 0.0
    %417 = vmatprep.subr.mxu0 0.0
    %418 = vmatpush1.xpose.msra.mxu0 0.0
    %419 = vmatprep.subr.mxu0 0.0
    %420 = vmatpush1.xpose.msra.mxu0 0.0
    %421 = vmatprep.subr.mxu0 0.0
    %422 = vmatpush1.xpose.msra.mxu0 0.0
    %423 = vmatprep.subr.mxu0 0.0
    %424 = vmatpush1.xpose.msra.mxu0 0.0
    %425 = vmatprep.subr.mxu0 0.0
    %426 = vmatpush1.xpose.msra.mxu0 0.0
    %427 = vmatprep.subr.mxu0 0.0
    %428 = vmatpush1.xpose.msra.mxu0 0.0
    %429 = vmatprep.subr.mxu0 0.0
    %430 = vmatpush1.xpose.msra.mxu0 0.0
    %431 = vmatprep.subr.mxu0 0.0
    %432 = vmatpush1.xpose.msra.mxu0 0.0
    %433 = vmatprep.subr.mxu0 0.0
    %434 = vmatpush1.xpose.msra.mxu0 0.0
    %435 = vmatprep.subr.mxu0 0.0
    %436 = vmatpush1.xpose.msra.mxu0 0.0
    %437 = vmatprep.subr.mxu0 0.0
    %438 = vmatpush1.xpose.msra.mxu0 0.0
    %439 = vmatprep.subr.mxu0 0.0
    %440 = vmatpush1.xpose.msra.mxu0 0.0
    %441 = vmatprep.subr.mxu0 0.0
    %442 = vmatpush1.xpose.msra.mxu0 0.0
    %443 = vmatprep.subr.mxu0 0.0
    %444 = vmatpush1.xpose.msra.mxu0 0.0
    %445 = vmatprep.subr.mxu0 0.0
    %446 = vmatpush1.xpose.msra.mxu0 0.0
    %447 = vmatprep.subr.mxu0 0.0
    %448 = vmatpush1.xpose.msra.mxu0 0.0
    %449 = vmatprep.subr.mxu0 0.0
    %450 = vmatpush1.xpose.msra.mxu0 0.0
    %451 = vmatprep.subr.mxu0 0.0
    %452 = vmatpush1.xpose.msra.mxu0 0.0
    %453 = vmatprep.subr.mxu0 0.0
    %454 = vmatpush1.xpose.msra.mxu0 0.0
    %455 = vmatprep.subr.mxu0 0.0
    %456 = vmatpush1.xpose.msra.mxu0 0.0
    %457 = vmatprep.mubr.f32.mxu0 0.0
    %458 = vmatmul.mubr.f32.gmra.mrb[0].mxu0 %v389
    %v459 = vpop.f32.mrb[0].mxu0
    %v460 = vadd.f32 0.0, %v459
    %v461 = vpop.f32.mrb[0].mxu0
    %462 = vdwg.mxu0
    %463 = vrot.lane.b32.xlu0 %v226, 96
    %v464 = vpop.permute.xlu0 %463
    %v465 = vsel %vm236, %v226, 0
    %v467 = vsel %vm236, %v464, 0
    %469 = vmatprep.subr.mxu0 0.0
    %470 = vmatpush1.xpose.msra.mxu0 %v467
    %471 = vmatprep.subr.mxu0 0.0
    %472 = vmatpush1.xpose.msra.mxu0 0.0
    %473 = vmatprep.subr.mxu0 0.0
    %474 = vmatpush1.xpose.msra.mxu0 0.0
    %475 = vmatprep.subr.mxu0 0.0
    %476 = vmatpush1.xpose.msra.mxu0 0.0
    %477 = vmatprep.subr.mxu0 0.0
    %478 = vmatpush1.xpose.msra.mxu0 0.0
    %479 = vmatprep.subr.mxu0 0.0
    %480 = vmatpush1.xpose.msra.mxu0 0.0
    %481 = vmatprep.subr.mxu0 0.0
    %482 = vmatpush1.xpose.msra.mxu0 0.0
    %483 = vmatprep.subr.mxu0 0.0
    %484 = vmatpush1.xpose.msra.mxu0 0.0
    %485 = vmatprep.subr.mxu0 0.0
    %486 = vmatpush1.xpose.msra.mxu0 0.0
    %487 = vmatprep.subr.mxu0 0.0
    %488 = vmatpush1.xpose.msra.mxu0 0.0
    %489 = vmatprep.subr.mxu0 0.0
    %490 = vmatpush1.xpose.msra.mxu0 0.0
    %491 = vmatprep.subr.mxu0 0.0
    %492 = vmatpush1.xpose.msra.mxu0 0.0
    %493 = vmatprep.subr.mxu0 0.0
    %494 = vmatpush1.xpose.msra.mxu0 0.0
    %495 = vmatprep.subr.mxu0 0.0
    %496 = vmatpush1.xpose.msra.mxu0 0.0
    %497 = vmatprep.subr.mxu0 0.0
    %498 = vmatpush1.xpose.msra.mxu0 0.0
    %499 = vmatprep.subr.mxu0 0.0
    %500 = vmatpush1.xpose.msra.mxu0 0.0
    %501 = vmatprep.subr.mxu0 0.0
    %502 = vmatpush1.xpose.msra.mxu0 0.0
    %503 = vmatprep.subr.mxu0 0.0
    %504 = vmatpush1.xpose.msra.mxu0 0.0
    %505 = vmatprep.subr.mxu0 0.0
    %506 = vmatpush1.xpose.msra.mxu0 0.0
    %507 = vmatprep.subr.mxu0 0.0
    %508 = vmatpush1.xpose.msra.mxu0 0.0
    %509 = vmatprep.subr.mxu0 0.0
    %510 = vmatpush1.xpose.msra.mxu0 0.0
    %511 = vmatprep.subr.mxu0 0.0
    %512 = vmatpush1.xpose.msra.mxu0 0.0
    %513 = vmatprep.subr.mxu0 0.0
    %514 = vmatpush1.xpose.msra.mxu0 0.0
    %515 = vmatprep.subr.mxu0 0.0
    %516 = vmatpush1.xpose.msra.mxu0 0.0
    %517 = vmatprep.subr.mxu0 0.0
    %518 = vmatpush1.xpose.msra.mxu0 0.0
    %519 = vmatprep.subr.mxu0 0.0
    %520 = vmatpush1.xpose.msra.mxu0 0.0
    %521 = vmatprep.subr.mxu0 0.0
    %522 = vmatpush1.xpose.msra.mxu0 0.0
    %523 = vmatprep.subr.mxu0 0.0
    %524 = vmatpush1.xpose.msra.mxu0 0.0
    %525 = vmatprep.subr.mxu0 0.0
    %526 = vmatpush1.xpose.msra.mxu0 0.0
    %527 = vmatprep.subr.mxu0 0.0
    %528 = vmatpush1.xpose.msra.mxu0 0.0
    %529 = vmatprep.subr.mxu0 0.0
    %530 = vmatpush1.xpose.msra.mxu0 0.0
    %531 = vmatprep.subr.mxu0 0.0
    %532 = vmatpush1.xpose.msra.mxu0 0.0
    %533 = vmatprep.mubr.f32.mxu0 0.0
    %534 = vmatmul.mubr.f32.gmra.mrb[0].mxu0 %v465
    %v535 = vpop.f32.mrb[0].mxu0
    %v536 = vadd.f32 0.0, %v535
    %v537 = vpop.f32.mrb[0].mxu0
    %538 = vdwg.mxu0
    %539 = vrot.lane.b32.xlu0 %v217, 96
    %v540 = vpop.permute.xlu0 %539
    %v541 = vsel %vm236, %v217, 0
    %v543 = vsel %vm236, %v540, 0
    %545 = vmatprep.subr.mxu0 0.0
    %546 = vmatpush1.xpose.msra.mxu0 %v543
    %547 = vmatprep.subr.mxu0 0.0
    %548 = vmatpush1.xpose.msra.mxu0 0.0
    %549 = vmatprep.subr.mxu0 0.0
    %550 = vmatpush1.xpose.msra.mxu0 0.0
    %551 = vmatprep.subr.mxu0 0.0
    %552 = vmatpush1.xpose.msra.mxu0 0.0
    %553 = vmatprep.subr.mxu0 0.0
    %554 = vmatpush1.xpose.msra.mxu0 0.0
    %555 = vmatprep.subr.mxu0 0.0
    %556 = vmatpush1.xpose.msra.mxu0 0.0
    %557 = vmatprep.subr.mxu0 0.0
    %558 = vmatpush1.xpose.msra.mxu0 0.0
    %559 = vmatprep.subr.mxu0 0.0
    %560 = vmatpush1.xpose.msra.mxu0 0.0
    %561 = vmatprep.subr.mxu0 0.0
    %562 = vmatpush1.xpose.msra.mxu0 0.0
    %563 = vmatprep.subr.mxu0 0.0
    %564 = vmatpush1.xpose.msra.mxu0 0.0
    %565 = vmatprep.subr.mxu0 0.0
    %566 = vmatpush1.xpose.msra.mxu0 0.0
    %567 = vmatprep.subr.mxu0 0.0
    %568 = vmatpush1.xpose.msra.mxu0 0.0
    %569 = vmatprep.subr.mxu0 0.0
    %570 = vmatpush1.xpose.msra.mxu0 0.0
    %571 = vmatprep.subr.mxu0 0.0
    %572 = vmatpush1.xpose.msra.mxu0 0.0
    %573 = vmatprep.subr.mxu0 0.0
    %574 = vmatpush1.xpose.msra.mxu0 0.0
    %575 = vmatprep.subr.mxu0 0.0
    %576 = vmatpush1.xpose.msra.mxu0 0.0
    %577 = vmatprep.subr.mxu0 0.0
    %578 = vmatpush1.xpose.msra.mxu0 0.0
    %579 = vmatprep.subr.mxu0 0.0
    %580 = vmatpush1.xpose.msra.mxu0 0.0
    %581 = vmatprep.subr.mxu0 0.0
    %582 = vmatpush1.xpose.msra.mxu0 0.0
    %583 = vmatprep.subr.mxu0 0.0
    %584 = vmatpush1.xpose.msra.mxu0 0.0
    %585 = vmatprep.subr.mxu0 0.0
    %586 = vmatpush1.xpose.msra.mxu0 0.0
    %587 = vmatprep.subr.mxu0 0.0
    %588 = vmatpush1.xpose.msra.mxu0 0.0
    %589 = vmatprep.subr.mxu0 0.0
    %590 = vmatpush1.xpose.msra.mxu0 0.0
    %591 = vmatprep.subr.mxu0 0.0
    %592 = vmatpush1.xpose.msra.mxu0 0.0
    %593 = vmatprep.subr.mxu0 0.0
    %594 = vmatpush1.xpose.msra.mxu0 0.0
    %595 = vmatprep.subr.mxu0 0.0
    %596 = vmatpush1.xpose.msra.mxu0 0.0
    %597 = vmatprep.subr.mxu0 0.0
    %598 = vmatpush1.xpose.msra.mxu0 0.0
    %599 = vmatprep.subr.mxu0 0.0
    %600 = vmatpush1.xpose.msra.mxu0 0.0
    %601 = vmatprep.subr.mxu0 0.0
    %602 = vmatpush1.xpose.msra.mxu0 0.0
    %603 = vmatprep.subr.mxu0 0.0
    %604 = vmatpush1.xpose.msra.mxu0 0.0
    %605 = vmatprep.subr.mxu0 0.0
    %606 = vmatpush1.xpose.msra.mxu0 0.0
    %607 = vmatprep.subr.mxu0 0.0
    %608 = vmatpush1.xpose.msra.mxu0 0.0
    %609 = vmatprep.mubr.f32.mxu0 0.0
    %610 = vmatmul.mubr.f32.gmra.mrb[0].mxu0 %v541
    %v611 = vpop.f32.mrb[0].mxu0
    %v612 = vadd.f32 0.0, %v611
    %v613 = vpop.f32.mrb[0].mxu0
    %614 = vdwg.mxu0
    %615 = vrot.lane.b32.xlu0 %v229, 96
    %v616 = vpop.permute.xlu0 %615
    %v617 = vsel %vm236, %v229, 0
    %v619 = vsel %vm236, %v616, 0
    %621 = vmatprep.subr.mxu0 0.0
    %622 = vmatpush1.xpose.msra.mxu0 %v619
    %623 = vmatprep.subr.mxu0 0.0
    %624 = vmatpush1.xpose.msra.mxu0 0.0
    %625 = vmatprep.subr.mxu0 0.0
    %626 = vmatpush1.xpose.msra.mxu0 0.0
    %627 = vmatprep.subr.mxu0 0.0
    %628 = vmatpush1.xpose.msra.mxu0 0.0
    %629 = vmatprep.subr.mxu0 0.0
    %630 = vmatpush1.xpose.msra.mxu0 0.0
    %631 = vmatprep.subr.mxu0 0.0
    %632 = vmatpush1.xpose.msra.mxu0 0.0
    %633 = vmatprep.subr.mxu0 0.0
    %634 = vmatpush1.xpose.msra.mxu0 0.0
    %635 = vmatprep.subr.mxu0 0.0
    %636 = vmatpush1.xpose.msra.mxu0 0.0
    %637 = vmatprep.subr.mxu0 0.0
    %638 = vmatpush1.xpose.msra.mxu0 0.0
    %639 = vmatprep.subr.mxu0 0.0
    %640 = vmatpush1.xpose.msra.mxu0 0.0
    %641 = vmatprep.subr.mxu0 0.0
    %642 = vmatpush1.xpose.msra.mxu0 0.0
    %643 = vmatprep.subr.mxu0 0.0
    %644 = vmatpush1.xpose.msra.mxu0 0.0
    %645 = vmatprep.subr.mxu0 0.0
    %646 = vmatpush1.xpose.msra.mxu0 0.0
    %647 = vmatprep.subr.mxu0 0.0
    %648 = vmatpush1.xpose.msra.mxu0 0.0
    %649 = vmatprep.subr.mxu0 0.0
    %650 = vmatpush1.xpose.msra.mxu0 0.0
    %651 = vmatprep.subr.mxu0 0.0
    %652 = vmatpush1.xpose.msra.mxu0 0.0
    %653 = vmatprep.subr.mxu0 0.0
    %654 = vmatpush1.xpose.msra.mxu0 0.0
    %655 = vmatprep.subr.mxu0 0.0
    %656 = vmatpush1.xpose.msra.mxu0 0.0
    %657 = vmatprep.subr.mxu0 0.0
    %658 = vmatpush1.xpose.msra.mxu0 0.0
    %659 = vmatprep.subr.mxu0 0.0
    %660 = vmatpush1.xpose.msra.mxu0 0.0
    %661 = vmatprep.subr.mxu0 0.0
    %662 = vmatpush1.xpose.msra.mxu0 0.0
    %663 = vmatprep.subr.mxu0 0.0
    %664 = vmatpush1.xpose.msra.mxu0 0.0
    %665 = vmatprep.subr.mxu0 0.0
    %666 = vmatpush1.xpose.msra.mxu0 0.0
    %667 = vmatprep.subr.mxu0 0.0
    %668 = vmatpush1.xpose.msra.mxu0 0.0
    %669 = vmatprep.subr.mxu0 0.0
    %670 = vmatpush1.xpose.msra.mxu0 0.0
    %671 = vmatprep.subr.mxu0 0.0
    %672 = vmatpush1.xpose.msra.mxu0 0.0
    %673 = vmatprep.subr.mxu0 0.0
    %674 = vmatpush1.xpose.msra.mxu0 0.0
    %675 = vmatprep.subr.mxu0 0.0
    %676 = vmatpush1.xpose.msra.mxu0 0.0
    %677 = vmatprep.subr.mxu0 0.0
    %678 = vmatpush1.xpose.msra.mxu0 0.0
    %679 = vmatprep.subr.mxu0 0.0
    %680 = vmatpush1.xpose.msra.mxu0 0.0
    %681 = vmatprep.subr.mxu0 0.0
    %682 = vmatpush1.xpose.msra.mxu0 0.0
    %683 = vmatprep.subr.mxu0 0.0
    %684 = vmatpush1.xpose.msra.mxu0 0.0
    %685 = vmatprep.mubr.f32.mxu0 0.0
    %686 = vmatmul.mubr.f32.gmra.mrb[0].mxu0 %v617
    %v687 = vpop.f32.mrb[0].mxu0
    %v688 = vadd.f32 0.0, %v687
    %v689 = vpop.f32.mrb[0].mxu0
    %690 = vdwg.mxu0
    %691 = vrot.lane.b32.xlu0 %v231, 96
    %v692 = vpop.permute.xlu0 %691
    %v693 = vsel %vm236, %v231, 0
    %v695 = vsel %vm236, %v692, 0
    %697 = vmatprep.subr.mxu0 0.0
    %698 = vmatpush1.xpose.msra.mxu0 %v695
    %699 = vmatprep.subr.mxu0 0.0
    %700 = vmatpush1.xpose.msra.mxu0 0.0
    %701 = vmatprep.subr.mxu0 0.0
    %702 = vmatpush1.xpose.msra.mxu0 0.0
    %703 = vmatprep.subr.mxu0 0.0
    %704 = vmatpush1.xpose.msra.mxu0 0.0
    %705 = vmatprep.subr.mxu0 0.0
    %706 = vmatpush1.xpose.msra.mxu0 0.0
    %707 = vmatprep.subr.mxu0 0.0
    %708 = vmatpush1.xpose.msra.mxu0 0.0
    %709 = vmatprep.subr.mxu0 0.0
    %710 = vmatpush1.xpose.msra.mxu0 0.0
    %711 = vmatprep.subr.mxu0 0.0
    %712 = vmatpush1.xpose.msra.mxu0 0.0
    %713 = vmatprep.subr.mxu0 0.0
    %714 = vmatpush1.xpose.msra.mxu0 0.0
    %715 = vmatprep.subr.mxu0 0.0
    %716 = vmatpush1.xpose.msra.mxu0 0.0
    %717 = vmatprep.subr.mxu0 0.0
    %718 = vmatpush1.xpose.msra.mxu0 0.0
    %719 = vmatprep.subr.mxu0 0.0
    %720 = vmatpush1.xpose.msra.mxu0 0.0
    %721 = vmatprep.subr.mxu0 0.0
    %722 = vmatpush1.xpose.msra.mxu0 0.0
    %723 = vmatprep.subr.mxu0 0.0
    %724 = vmatpush1.xpose.msra.mxu0 0.0
    %725 = vmatprep.subr.mxu0 0.0
    %726 = vmatpush1.xpose.msra.mxu0 0.0
    %727 = vmatprep.subr.mxu0 0.0
    %728 = vmatpush1.xpose.msra.mxu0 0.0
    %729 = vmatprep.subr.mxu0 0.0
    %730 = vmatpush1.xpose.msra.mxu0 0.0
    %731 = vmatprep.subr.mxu0 0.0
    %732 = vmatpush1.xpose.msra.mxu0 0.0
    %733 = vmatprep.subr.mxu0 0.0
    %734 = vmatpush1.xpose.msra.mxu0 0.0
    %735 = vmatprep.subr.mxu0 0.0
    %736 = vmatpush1.xpose.msra.mxu0 0.0
    %737 = vmatprep.subr.mxu0 0.0
    %738 = vmatpush1.xpose.msra.mxu0 0.0
    %739 = vmatprep.subr.mxu0 0.0
    %740 = vmatpush1.xpose.msra.mxu0 0.0
    %741 = vmatprep.subr.mxu0 0.0
    %742 = vmatpush1.xpose.msra.mxu0 0.0
    %743 = vmatprep.subr.mxu0 0.0
    %744 = vmatpush1.xpose.msra.mxu0 0.0
    %745 = vmatprep.subr.mxu0 0.0
    %746 = vmatpush1.xpose.msra.mxu0 0.0
    %747 = vmatprep.subr.mxu0 0.0
    %748 = vmatpush1.xpose.msra.mxu0 0.0
    %749 = vmatprep.subr.mxu0 0.0
    %750 = vmatpush1.xpose.msra.mxu0 0.0
    %751 = vmatprep.subr.mxu0 0.0
    %752 = vmatpush1.xpose.msra.mxu0 0.0
    %753 = vmatprep.subr.mxu0 0.0
    %754 = vmatpush1.xpose.msra.mxu0 0.0
    %755 = vmatprep.subr.mxu0 0.0
    %756 = vmatpush1.xpose.msra.mxu0 0.0
    %757 = vmatprep.subr.mxu0 0.0
    %758 = vmatpush1.xpose.msra.mxu0 0.0
    %759 = vmatprep.subr.mxu0 0.0
    %760 = vmatpush1.xpose.msra.mxu0 0.0
    %761 = vmatprep.mubr.f32.mxu0 0.0
    %762 = vmatmul.mubr.f32.gmra.mrb[0].mxu0 %v693
    %v763 = vpop.f32.mrb[0].mxu0
    %v764 = vadd.f32 0.0, %v763
    %v765 = vpop.f32.mrb[0].mxu0
    %766 = vdwg.mxu0
    %767 = vrot.lane.b32.xlu0 %v233, 96
    %v768 = vpop.permute.xlu0 %767
    %v769 = vsel %vm236, %v233, 0
    %v771 = vsel %vm236, %v768, 0
    %773 = vmatprep.subr.mxu0 0.0
    %774 = vmatpush1.xpose.msra.mxu0 %v771
    %775 = vmatprep.subr.mxu0 0.0
    %776 = vmatpush1.xpose.msra.mxu0 0.0
    %777 = vmatprep.subr.mxu0 0.0
    %778 = vmatpush1.xpose.msra.mxu0 0.0
    %779 = vmatprep.subr.mxu0 0.0
    %780 = vmatpush1.xpose.msra.mxu0 0.0
    %781 = vmatprep.subr.mxu0 0.0
    %782 = vmatpush1.xpose.msra.mxu0 0.0
    %783 = vmatprep.subr.mxu0 0.0
    %784 = vmatpush1.xpose.msra.mxu0 0.0
    %785 = vmatprep.subr.mxu0 0.0
    %786 = vmatpush1.xpose.msra.mxu0 0.0
    %787 = vmatprep.subr.mxu0 0.0
    %788 = vmatpush1.xpose.msra.mxu0 0.0
    %789 = vmatprep.subr.mxu0 0.0
    %790 = vmatpush1.xpose.msra.mxu0 0.0
    %791 = vmatprep.subr.mxu0 0.0
    %792 = vmatpush1.xpose.msra.mxu0 0.0
    %793 = vmatprep.subr.mxu0 0.0
    %794 = vmatpush1.xpose.msra.mxu0 0.0
    %795 = vmatprep.subr.mxu0 0.0
    %796 = vmatpush1.xpose.msra.mxu0 0.0
    %797 = vmatprep.subr.mxu0 0.0
    %798 = vmatpush1.xpose.msra.mxu0 0.0
    %799 = vmatprep.subr.mxu0 0.0
    %800 = vmatpush1.xpose.msra.mxu0 0.0
    %801 = vmatprep.subr.mxu0 0.0
    %802 = vmatpush1.xpose.msra.mxu0 0.0
    %803 = vmatprep.subr.mxu0 0.0
    %804 = vmatpush1.xpose.msra.mxu0 0.0
    %805 = vmatprep.subr.mxu0 0.0
    %806 = vmatpush1.xpose.msra.mxu0 0.0
    %807 = vmatprep.subr.mxu0 0.0
    %808 = vmatpush1.xpose.msra.mxu0 0.0
    %809 = vmatprep.subr.mxu0 0.0
    %810 = vmatpush1.xpose.msra.mxu0 0.0
    %811 = vmatprep.subr.mxu0 0.0
    %812 = vmatpush1.xpose.msra.mxu0 0.0
    %813 = vmatprep.subr.mxu0 0.0
    %814 = vmatpush1.xpose.msra.mxu0 0.0
    %815 = vmatprep.subr.mxu0 0.0
    %816 = vmatpush1.xpose.msra.mxu0 0.0
    %817 = vmatprep.subr.mxu0 0.0
    %818 = vmatpush1.xpose.msra.mxu0 0.0
    %819 = vmatprep.subr.mxu0 0.0
    %820 = vmatpush1.xpose.msra.mxu0 0.0
    %821 = vmatprep.subr.mxu0 0.0
    %822 = vmatpush1.xpose.msra.mxu0 0.0
    %823 = vmatprep.subr.mxu0 0.0
    %824 = vmatpush1.xpose.msra.mxu0 0.0
    %825 = vmatprep.subr.mxu0 0.0
    %826 = vmatpush1.xpose.msra.mxu0 0.0
    %827 = vmatprep.subr.mxu0 0.0
    %828 = vmatpush1.xpose.msra.mxu0 0.0
    %829 = vmatprep.subr.mxu0 0.0
    %830 = vmatpush1.xpose.msra.mxu0 0.0
    %831 = vmatprep.subr.mxu0 0.0
    %832 = vmatpush1.xpose.msra.mxu0 0.0
    %833 = vmatprep.subr.mxu0 0.0
    %834 = vmatpush1.xpose.msra.mxu0 0.0
    %835 = vmatprep.subr.mxu0 0.0
    %836 = vmatpush1.xpose.msra.mxu0 0.0
    %837 = vmatprep.mubr.f32.mxu0 0.0
    %838 = vmatmul.mubr.f32.gmra.mrb[0].mxu0 %v769
    %v839 = vpop.f32.mrb[0].mxu0
    %v840 = vadd.f32 0.0, %v839
    %v841 = vpop.f32.mrb[0].mxu0
    %842 = vdwg.mxu0
    %v843 = vmul.f32 %v308, 0.35355338
    %v844 = vmul.f32 %v384, 0.35355338
    %v845 = vmul.f32 %v460, 0.35355338
    %v846 = vmul.f32 %v536, 0.35355338
    %v847 = vmul.f32 %v612, 0.35355338
    %v848 = vmul.f32 %v688, 0.35355338
    %v849 = vmul.f32 %v764, 0.35355338
    %v850 = vmul.f32 %v840, 0.35355338
    %v851 = vsel %vm75, %v843, -1e+30
    %v852 = vsel %vm75, %v844, -1e+30
    %v853 = vsel %vm75, %v845, -1e+30
    %v854 = vsel %vm75, %v846, -1e+30
    %v855 = vsel %vm81, %v847, -1e+30
    %v856 = vsel %vm81, %v848, -1e+30
    %v857 = vsel %vm81, %v849, -1e+30
    %v858 = vsel %vm81, %v850, -1e+30
    %v859 = vsel %vm236, %v851, -inf
    %860 = vmax.xlane.f32.xlu0 %v859
    %v861 = vpop.xlane.xlu0 %860
    %v862 = vsel %vm236, %v852, -inf
    %863 = vmax.xlane.f32.xlu0 %v862
    %v864 = vpop.xlane.xlu0 %863
    %v865 = vsel %vm236, %v853, -inf
    %866 = vmax.xlane.f32.xlu0 %v865
    %v867 = vpop.xlane.xlu0 %866
    %v868 = vsel %vm236, %v854, -inf
    %869 = vmax.xlane.f32.xlu0 %v868
    %v870 = vpop.xlane.xlu0 %869
    %v871 = vsel %vm236, %v855, -inf
    %872 = vmax.xlane.f32.xlu0 %v871
    %v873 = vpop.xlane.xlu0 %872
    %v874 = vsel %vm236, %v856, -inf
    %875 = vmax.xlane.f32.xlu0 %v874
    %v876 = vpop.xlane.xlu0 %875
    %v877 = vsel %vm236, %v857, -inf
    %878 = vmax.xlane.f32.xlu0 %v877
    %v879 = vpop.xlane.xlu0 %878
    %v880 = vsel %vm236, %v858, -inf
    %881 = vmax.xlane.f32.xlu0 %v880
    %v882 = vpop.xlane.xlu0 %881
    %v883 = vsub.f32 %v851, %v861
    %v884 = vsub.f32 %v852, %v864
    %v885 = vsub.f32 %v853, %v867
    %v886 = vsub.f32 %v854, %v870
    %v887 = vsub.f32 %v855, %v873
    %v888 = vsub.f32 %v856, %v876
    %v889 = vsub.f32 %v857, %v879
    %v890 = vsub.f32 %v858, %v882
    %v891 = vmul.f32 %v883, 1.442695
    %v892 = vpow.pop %v891
    %v893 = vmul.f32 %v884, 1.442695
    %v894 = vpow.pop %v893
    %v895 = vmul.f32 %v885, 1.442695
    %v896 = vpow.pop %v895
    %v897 = vmul.f32 %v886, 1.442695
    %v898 = vpow.pop %v897
    %v899 = vmul.f32 %v887, 1.442695
    %v900 = vpow.pop %v899
    %v901 = vmul.f32 %v888, 1.442695
    %v902 = vpow.pop %v901
    %v903 = vmul.f32 %v889, 1.442695
    %v904 = vpow.pop %v903
    %v905 = vmul.f32 %v890, 1.442695
    %v906 = vpow.pop %v905
    %v907 = vsel %vm236, %v892, 0.0
    %908 = vadd.xlane.f32.xlu0 %v907
    %v909 = vpop.xlane.xlu0 %908
    %v910 = vsel %vm236, %v894, 0.0
    %911 = vadd.xlane.f32.xlu0 %v910
    %v912 = vpop.xlane.xlu0 %911
    %v913 = vsel %vm236, %v896, 0.0
    %914 = vadd.xlane.f32.xlu0 %v913
    %v915 = vpop.xlane.xlu0 %914
    %v916 = vsel %vm236, %v898, 0.0
    %917 = vadd.xlane.f32.xlu0 %v916
    %v918 = vpop.xlane.xlu0 %917
    %v919 = vsel %vm236, %v900, 0.0
    %920 = vadd.xlane.f32.xlu0 %v919
    %v921 = vpop.xlane.xlu0 %920
    %v922 = vsel %vm236, %v902, 0.0
    %923 = vadd.xlane.f32.xlu0 %v922
    %v924 = vpop.xlane.xlu0 %923
    %v925 = vsel %vm236, %v904, 0.0
    %926 = vadd.xlane.f32.xlu0 %v925
    %v927 = vpop.xlane.xlu0 %926
    %v928 = vsel %vm236, %v906, 0.0
    %929 = vadd.xlane.f32.xlu0 %v928
    %v930 = vpop.xlane.xlu0 %929
    %v931 = vrcp.pop %v909
    %v932 = vrcp.pop %v912
    %v933 = vrcp.pop %v915
    %v934 = vrcp.pop %v918
    %v935 = vrcp.pop %v921
    %v936 = vrcp.pop %v924
    %v937 = vrcp.pop %v927
    %v938 = vrcp.pop %v930
    %v939 = vmul.f32 %v892, %v931
    %v940 = vmul.f32 %v894, %v932
    %v941 = vmul.f32 %v896, %v933
    %v942 = vmul.f32 %v898, %v934
    %v943 = vmul.f32 %v900, %v935
    %v944 = vmul.f32 %v902, %v936
    %v945 = vmul.f32 %v904, %v937
    %v946 = vmul.f32 %v906, %v938
    %947 = vrot.lane.b32.xlu0 %v212, 64
    %v948 = vpop.permute.xlu0 %947
    %v951 = vsel %vm236, %v939, 0
    %953 = vmatprep.subr.mxu0 0.0
    %954 = vmatpush1.msra.mxu0 %v948
    %955 = vmatprep.subr.mxu0 0.0
    %956 = vmatpush1.msra.mxu0 0.0
    %957 = vmatprep.subr.mxu0 0.0
    %958 = vmatpush1.msra.mxu0 0.0
    %959 = vmatprep.subr.mxu0 0.0
    %960 = vmatpush1.msra.mxu0 0.0
    %961 = vmatprep.subr.mxu0 0.0
    %962 = vmatpush1.msra.mxu0 0.0
    %963 = vmatprep.subr.mxu0 0.0
    %964 = vmatpush1.msra.mxu0 0.0
    %965 = vmatprep.subr.mxu0 0.0
    %966 = vmatpush1.msra.mxu0 0.0
    %967 = vmatprep.subr.mxu0 0.0
    %968 = vmatpush1.msra.mxu0 0.0
    %969 = vmatprep.subr.mxu0 0.0
    %970 = vmatpush1.msra.mxu0 0.0
    %971 = vmatprep.subr.mxu0 0.0
    %972 = vmatpush1.msra.mxu0 0.0
    %973 = vmatprep.subr.mxu0 0.0
    %974 = vmatpush1.msra.mxu0 0.0
    %975 = vmatprep.subr.mxu0 0.0
    %976 = vmatpush1.msra.mxu0 0.0
    %977 = vmatprep.subr.mxu0 0.0
    %978 = vmatpush1.msra.mxu0 0.0
    %979 = vmatprep.subr.mxu0 0.0
    %980 = vmatpush1.msra.mxu0 0.0
    %981 = vmatprep.subr.mxu0 0.0
    %982 = vmatpush1.msra.mxu0 0.0
    %983 = vmatprep.subr.mxu0 0.0
    %984 = vmatpush1.msra.mxu0 0.0
    %985 = vmatprep.subr.mxu0 0.0
    %986 = vmatpush1.msra.mxu0 0.0
    %987 = vmatprep.subr.mxu0 0.0
    %988 = vmatpush1.msra.mxu0 0.0
    %989 = vmatprep.subr.mxu0 0.0
    %990 = vmatpush1.msra.mxu0 0.0
    %991 = vmatprep.subr.mxu0 0.0
    %992 = vmatpush1.msra.mxu0 0.0
    %993 = vmatprep.subr.mxu0 0.0
    %994 = vmatpush1.msra.mxu0 0.0
    %995 = vmatprep.subr.mxu0 0.0
    %996 = vmatpush1.msra.mxu0 0.0
    %997 = vmatprep.subr.mxu0 0.0
    %998 = vmatpush1.msra.mxu0 0.0
    %999 = vmatprep.subr.mxu0 0.0
    %1000 = vmatpush1.msra.mxu0 0.0
    %1001 = vmatprep.subr.mxu0 0.0
    %1002 = vmatpush1.msra.mxu0 0.0
    %1003 = vmatprep.subr.mxu0 0.0
    %1004 = vmatpush1.msra.mxu0 0.0
    %1005 = vmatprep.subr.mxu0 0.0
    %1006 = vmatpush1.msra.mxu0 0.0
    %1007 = vmatprep.subr.mxu0 0.0
    %1008 = vmatpush1.msra.mxu0 0.0
    %1009 = vmatprep.subr.mxu0 0.0
    %1010 = vmatpush1.msra.mxu0 0.0
    %1011 = vmatprep.subr.mxu0 0.0
    %1012 = vmatpush1.msra.mxu0 0.0
    %1013 = vmatprep.subr.mxu0 0.0
    %1014 = vmatpush1.msra.mxu0 0.0
    %1015 = vmatprep.subr.mxu0 0.0
    %1016 = vmatpush1.msra.mxu0 0.0
    %1017 = vmatprep.mubr.f32.mxu0 0.0
    %1018 = vmatmul.mubr.f32.gmra.mrb[0].mxu0 %v951
    %v1019 = vpop.f32.mrb[0].mxu0
    %v1020 = vadd.f32 0.0, %v1019
    %v1021 = vpop.f32.mrb[0].mxu0
    %1022 = vdwg.mxu0
    %1023 = vrot.lane.b32.xlu0 %v222, 64
    %v1024 = vpop.permute.xlu0 %1023
    %v1027 = vsel %vm236, %v940, 0
    %1029 = vmatprep.subr.mxu0 0.0
    %1030 = vmatpush1.msra.mxu0 %v1024
    %1031 = vmatprep.subr.mxu0 0.0
    %1032 = vmatpush1.msra.mxu0 0.0
    %1033 = vmatprep.subr.mxu0 0.0
    %1034 = vmatpush1.msra.mxu0 0.0
    %1035 = vmatprep.subr.mxu0 0.0
    %1036 = vmatpush1.msra.mxu0 0.0
    %1037 = vmatprep.subr.mxu0 0.0
    %1038 = vmatpush1.msra.mxu0 0.0
    %1039 = vmatprep.subr.mxu0 0.0
    %1040 = vmatpush1.msra.mxu0 0.0
    %1041 = vmatprep.subr.mxu0 0.0
    %1042 = vmatpush1.msra.mxu0 0.0
    %1043 = vmatprep.subr.mxu0 0.0
    %1044 = vmatpush1.msra.mxu0 0.0
    %1045 = vmatprep.subr.mxu0 0.0
    %1046 = vmatpush1.msra.mxu0 0.0
    %1047 = vmatprep.subr.mxu0 0.0
    %1048 = vmatpush1.msra.mxu0 0.0
    %1049 = vmatprep.subr.mxu0 0.0
    %1050 = vmatpush1.msra.mxu0 0.0
    %1051 = vmatprep.subr.mxu0 0.0
    %1052 = vmatpush1.msra.mxu0 0.0
    %1053 = vmatprep.subr.mxu0 0.0
    %1054 = vmatpush1.msra.mxu0 0.0
    %1055 = vmatprep.subr.mxu0 0.0
    %1056 = vmatpush1.msra.mxu0 0.0
    %1057 = vmatprep.subr.mxu0 0.0
    %1058 = vmatpush1.msra.mxu0 0.0
    %1059 = vmatprep.subr.mxu0 0.0
    %1060 = vmatpush1.msra.mxu0 0.0
    %1061 = vmatprep.subr.mxu0 0.0
    %1062 = vmatpush1.msra.mxu0 0.0
    %1063 = vmatprep.subr.mxu0 0.0
    %1064 = vmatpush1.msra.mxu0 0.0
    %1065 = vmatprep.subr.mxu0 0.0
    %1066 = vmatpush1.msra.mxu0 0.0
    %1067 = vmatprep.subr.mxu0 0.0
    %1068 = vmatpush1.msra.mxu0 0.0
    %1069 = vmatprep.subr.mxu0 0.0
    %1070 = vmatpush1.msra.mxu0 0.0
    %1071 = vmatprep.subr.mxu0 0.0
    %1072 = vmatpush1.msra.mxu0 0.0
    %1073 = vmatprep.subr.mxu0 0.0
    %1074 = vmatpush1.msra.mxu0 0.0
    %1075 = vmatprep.subr.mxu0 0.0
    %1076 = vmatpush1.msra.mxu0 0.0
    %1077 = vmatprep.subr.mxu0 0.0
    %1078 = vmatpush1.msra.mxu0 0.0
    %1079 = vmatprep.subr.mxu0 0.0
    %1080 = vmatpush1.msra.mxu0 0.0
    %1081 = vmatprep.subr.mxu0 0.0
    %1082 = vmatpush1.msra.mxu0 0.0
    %1083 = vmatprep.subr.mxu0 0.0
    %1084 = vmatpush1.msra.mxu0 0.0
    %1085 = vmatprep.subr.mxu0 0.0
    %1086 = vmatpush1.msra.mxu0 0.0
    %1087 = vmatprep.subr.mxu0 0.0
    %1088 = vmatpush1.msra.mxu0 0.0
    %1089 = vmatprep.subr.mxu0 0.0
    %1090 = vmatpush1.msra.mxu0 0.0
    %1091 = vmatprep.subr.mxu0 0.0
    %1092 = vmatpush1.msra.mxu0 0.0
    %1093 = vmatprep.mubr.f32.mxu0 0.0
    %1094 = vmatmul.mubr.f32.gmra.mrb[0].mxu0 %v1027
    %v1095 = vpop.f32.mrb[0].mxu0
    %v1096 = vadd.f32 0.0, %v1095
    %v1097 = vpop.f32.mrb[0].mxu0
    %1098 = vdwg.mxu0
    %1099 = vrot.lane.b32.xlu0 %v224, 64
    %v1100 = vpop.permute.xlu0 %1099
    %v1103 = vsel %vm236, %v941, 0
    %1105 = vmatprep.subr.mxu0 0.0
    %1106 = vmatpush1.msra.mxu0 %v1100
    %1107 = vmatprep.subr.mxu0 0.0
    %1108 = vmatpush1.msra.mxu0 0.0
    %1109 = vmatprep.subr.mxu0 0.0
    %1110 = vmatpush1.msra.mxu0 0.0
    %1111 = vmatprep.subr.mxu0 0.0
    %1112 = vmatpush1.msra.mxu0 0.0
    %1113 = vmatprep.subr.mxu0 0.0
    %1114 = vmatpush1.msra.mxu0 0.0
    %1115 = vmatprep.subr.mxu0 0.0
    %1116 = vmatpush1.msra.mxu0 0.0
    %1117 = vmatprep.subr.mxu0 0.0
    %1118 = vmatpush1.msra.mxu0 0.0
    %1119 = vmatprep.subr.mxu0 0.0
    %1120 = vmatpush1.msra.mxu0 0.0
    %1121 = vmatprep.subr.mxu0 0.0
    %1122 = vmatpush1.msra.mxu0 0.0
    %1123 = vmatprep.subr.mxu0 0.0
    %1124 = vmatpush1.msra.mxu0 0.0
    %1125 = vmatprep.subr.mxu0 0.0
    %1126 = vmatpush1.msra.mxu0 0.0
    %1127 = vmatprep.subr.mxu0 0.0
    %1128 = vmatpush1.msra.mxu0 0.0
    %1129 = vmatprep.subr.mxu0 0.0
    %1130 = vmatpush1.msra.mxu0 0.0
    %1131 = vmatprep.subr.mxu0 0.0
    %1132 = vmatpush1.msra.mxu0 0.0
    %1133 = vmatprep.subr.mxu0 0.0
    %1134 = vmatpush1.msra.mxu0 0.0
    %1135 = vmatprep.subr.mxu0 0.0
    %1136 = vmatpush1.msra.mxu0 0.0
    %1137 = vmatprep.subr.mxu0 0.0
    %1138 = vmatpush1.msra.mxu0 0.0
    %1139 = vmatprep.subr.mxu0 0.0
    %1140 = vmatpush1.msra.mxu0 0.0
    %1141 = vmatprep.subr.mxu0 0.0
    %1142 = vmatpush1.msra.mxu0 0.0
    %1143 = vmatprep.subr.mxu0 0.0
    %1144 = vmatpush1.msra.mxu0 0.0
    %1145 = vmatprep.subr.mxu0 0.0
    %1146 = vmatpush1.msra.mxu0 0.0
    %1147 = vmatprep.subr.mxu0 0.0
    %1148 = vmatpush1.msra.mxu0 0.0
    %1149 = vmatprep.subr.mxu0 0.0
    %1150 = vmatpush1.msra.mxu0 0.0
    %1151 = vmatprep.subr.mxu0 0.0
    %1152 = vmatpush1.msra.mxu0 0.0
    %1153 = vmatprep.subr.mxu0 0.0
    %1154 = vmatpush1.msra.mxu0 0.0
    %1155 = vmatprep.subr.mxu0 0.0
    %1156 = vmatpush1.msra.mxu0 0.0
    %1157 = vmatprep.subr.mxu0 0.0
    %1158 = vmatpush1.msra.mxu0 0.0
    %1159 = vmatprep.subr.mxu0 0.0
    %1160 = vmatpush1.msra.mxu0 0.0
    %1161 = vmatprep.subr.mxu0 0.0
    %1162 = vmatpush1.msra.mxu0 0.0
    %1163 = vmatprep.subr.mxu0 0.0
    %1164 = vmatpush1.msra.mxu0 0.0
    %1165 = vmatprep.subr.mxu0 0.0
    %1166 = vmatpush1.msra.mxu0 0.0
    %1167 = vmatprep.subr.mxu0 0.0
    %1168 = vmatpush1.msra.mxu0 0.0
    %1169 = vmatprep.mubr.f32.mxu0 0.0
    %1170 = vmatmul.mubr.f32.gmra.mrb[0].mxu0 %v1103
    %v1171 = vpop.f32.mrb[0].mxu0
    %v1172 = vadd.f32 0.0, %v1171
    %v1173 = vpop.f32.mrb[0].mxu0
    %1174 = vdwg.mxu0
    %1175 = vrot.lane.b32.xlu0 %v226, 64
    %v1176 = vpop.permute.xlu0 %1175
    %v1179 = vsel %vm236, %v942, 0
    %1181 = vmatprep.subr.mxu0 0.0
    %1182 = vmatpush1.msra.mxu0 %v1176
    %1183 = vmatprep.subr.mxu0 0.0
    %1184 = vmatpush1.msra.mxu0 0.0
    %1185 = vmatprep.subr.mxu0 0.0
    %1186 = vmatpush1.msra.mxu0 0.0
    %1187 = vmatprep.subr.mxu0 0.0
    %1188 = vmatpush1.msra.mxu0 0.0
    %1189 = vmatprep.subr.mxu0 0.0
    %1190 = vmatpush1.msra.mxu0 0.0
    %1191 = vmatprep.subr.mxu0 0.0
    %1192 = vmatpush1.msra.mxu0 0.0
    %1193 = vmatprep.subr.mxu0 0.0
    %1194 = vmatpush1.msra.mxu0 0.0
    %1195 = vmatprep.subr.mxu0 0.0
    %1196 = vmatpush1.msra.mxu0 0.0
    %1197 = vmatprep.subr.mxu0 0.0
    %1198 = vmatpush1.msra.mxu0 0.0
    %1199 = vmatprep.subr.mxu0 0.0
    %1200 = vmatpush1.msra.mxu0 0.0
    %1201 = vmatprep.subr.mxu0 0.0
    %1202 = vmatpush1.msra.mxu0 0.0
    %1203 = vmatprep.subr.mxu0 0.0
    %1204 = vmatpush1.msra.mxu0 0.0
    %1205 = vmatprep.subr.mxu0 0.0
    %1206 = vmatpush1.msra.mxu0 0.0
    %1207 = vmatprep.subr.mxu0 0.0
    %1208 = vmatpush1.msra.mxu0 0.0
    %1209 = vmatprep.subr.mxu0 0.0
    %1210 = vmatpush1.msra.mxu0 0.0
    %1211 = vmatprep.subr.mxu0 0.0
    %1212 = vmatpush1.msra.mxu0 0.0
    %1213 = vmatprep.subr.mxu0 0.0
    %1214 = vmatpush1.msra.mxu0 0.0
    %1215 = vmatprep.subr.mxu0 0.0
    %1216 = vmatpush1.msra.mxu0 0.0
    %1217 = vmatprep.subr.mxu0 0.0
    %1218 = vmatpush1.msra.mxu0 0.0
    %1219 = vmatprep.subr.mxu0 0.0
    %1220 = vmatpush1.msra.mxu0 0.0
    %1221 = vmatprep.subr.mxu0 0.0
    %1222 = vmatpush1.msra.mxu0 0.0
    %1223 = vmatprep.subr.mxu0 0.0
    %1224 = vmatpush1.msra.mxu0 0.0
    %1225 = vmatprep.subr.mxu0 0.0
    %1226 = vmatpush1.msra.mxu0 0.0
    %1227 = vmatprep.subr.mxu0 0.0
    %1228 = vmatpush1.msra.mxu0 0.0
    %1229 = vmatprep.subr.mxu0 0.0
    %1230 = vmatpush1.msra.mxu0 0.0
    %1231 = vmatprep.subr.mxu0 0.0
    %1232 = vmatpush1.msra.mxu0 0.0
    %1233 = vmatprep.subr.mxu0 0.0
    %1234 = vmatpush1.msra.mxu0 0.0
    %1235 = vmatprep.subr.mxu0 0.0
    %1236 = vmatpush1.msra.mxu0 0.0
    %1237 = vmatprep.subr.mxu0 0.0
    %1238 = vmatpush1.msra.mxu0 0.0
    %1239 = vmatprep.subr.mxu0 0.0
    %1240 = vmatpush1.msra.mxu0 0.0
    %1241 = vmatprep.subr.mxu0 0.0
    %1242 = vmatpush1.msra.mxu0 0.0
    %1243 = vmatprep.subr.mxu0 0.0
    %1244 = vmatpush1.msra.mxu0 0.0
    %1245 = vmatprep.mubr.f32.mxu0 0.0
    %1246 = vmatmul.mubr.f32.gmra.mrb[0].mxu0 %v1179
    %v1247 = vpop.f32.mrb[0].mxu0
    %v1248 = vadd.f32 0.0, %v1247
    %v1249 = vpop.f32.mrb[0].mxu0
    %1250 = vdwg.mxu0
    %1251 = vrot.lane.b32.xlu0 %v217, 64
    %v1252 = vpop.permute.xlu0 %1251
    %v1255 = vsel %vm236, %v943, 0
    %1257 = vmatprep.subr.mxu0 0.0
    %1258 = vmatpush1.msra.mxu0 %v1252
    %1259 = vmatprep.subr.mxu0 0.0
    %1260 = vmatpush1.msra.mxu0 0.0
    %1261 = vmatprep.subr.mxu0 0.0
    %1262 = vmatpush1.msra.mxu0 0.0
    %1263 = vmatprep.subr.mxu0 0.0
    %1264 = vmatpush1.msra.mxu0 0.0
    %1265 = vmatprep.subr.mxu0 0.0
    %1266 = vmatpush1.msra.mxu0 0.0
    %1267 = vmatprep.subr.mxu0 0.0
    %1268 = vmatpush1.msra.mxu0 0.0
    %1269 = vmatprep.subr.mxu0 0.0
    %1270 = vmatpush1.msra.mxu0 0.0
    %1271 = vmatprep.subr.mxu0 0.0
    %1272 = vmatpush1.msra.mxu0 0.0
    %1273 = vmatprep.subr.mxu0 0.0
    %1274 = vmatpush1.msra.mxu0 0.0
    %1275 = vmatprep.subr.mxu0 0.0
    %1276 = vmatpush1.msra.mxu0 0.0
    %1277 = vmatprep.subr.mxu0 0.0
    %1278 = vmatpush1.msra.mxu0 0.0
    %1279 = vmatprep.subr.mxu0 0.0
    %1280 = vmatpush1.msra.mxu0 0.0
    %1281 = vmatprep.subr.mxu0 0.0
    %1282 = vmatpush1.msra.mxu0 0.0
    %1283 = vmatprep.subr.mxu0 0.0
    %1284 = vmatpush1.msra.mxu0 0.0
    %1285 = vmatprep.subr.mxu0 0.0
    %1286 = vmatpush1.msra.mxu0 0.0
    %1287 = vmatprep.subr.mxu0 0.0
    %1288 = vmatpush1.msra.mxu0 0.0
    %1289 = vmatprep.subr.mxu0 0.0
    %1290 = vmatpush1.msra.mxu0 0.0
    %1291 = vmatprep.subr.mxu0 0.0
    %1292 = vmatpush1.msra.mxu0 0.0
    %1293 = vmatprep.subr.mxu0 0.0
    %1294 = vmatpush1.msra.mxu0 0.0
    %1295 = vmatprep.subr.mxu0 0.0
    %1296 = vmatpush1.msra.mxu0 0.0
    %1297 = vmatprep.subr.mxu0 0.0
    %1298 = vmatpush1.msra.mxu0 0.0
    %1299 = vmatprep.subr.mxu0 0.0
    %1300 = vmatpush1.msra.mxu0 0.0
    %1301 = vmatprep.subr.mxu0 0.0
    %1302 = vmatpush1.msra.mxu0 0.0
    %1303 = vmatprep.subr.mxu0 0.0
    %1304 = vmatpush1.msra.mxu0 0.0
    %1305 = vmatprep.subr.mxu0 0.0
    %1306 = vmatpush1.msra.mxu0 0.0
    %1307 = vmatprep.subr.mxu0 0.0
    %1308 = vmatpush1.msra.mxu0 0.0
    %1309 = vmatprep.subr.mxu0 0.0
    %1310 = vmatpush1.msra.mxu0 0.0
    %1311 = vmatprep.subr.mxu0 0.0
    %1312 = vmatpush1.msra.mxu0 0.0
    %1313 = vmatprep.subr.mxu0 0.0
    %1314 = vmatpush1.msra.mxu0 0.0
    %1315 = vmatprep.subr.mxu0 0.0
    %1316 = vmatpush1.msra.mxu0 0.0
    %1317 = vmatprep.subr.mxu0 0.0
    %1318 = vmatpush1.msra.mxu0 0.0
    %1319 = vmatprep.subr.mxu0 0.0
    %1320 = vmatpush1.msra.mxu0 0.0
    %1321 = vmatprep.mubr.f32.mxu0 0.0
    %1322 = vmatmul.mubr.f32.gmra.mrb[0].mxu0 %v1255
    %v1323 = vpop.f32.mrb[0].mxu0
    %v1324 = vadd.f32 0.0, %v1323
    %v1325 = vpop.f32.mrb[0].mxu0
    %1326 = vdwg.mxu0
    %1327 = vrot.lane.b32.xlu0 %v229, 64
    %v1328 = vpop.permute.xlu0 %1327
    %v1331 = vsel %vm236, %v944, 0
    %1333 = vmatprep.subr.mxu0 0.0
    %1334 = vmatpush1.msra.mxu0 %v1328
    %1335 = vmatprep.subr.mxu0 0.0
    %1336 = vmatpush1.msra.mxu0 0.0
    %1337 = vmatprep.subr.mxu0 0.0
    %1338 = vmatpush1.msra.mxu0 0.0
    %1339 = vmatprep.subr.mxu0 0.0
    %1340 = vmatpush1.msra.mxu0 0.0
    %1341 = vmatprep.subr.mxu0 0.0
    %1342 = vmatpush1.msra.mxu0 0.0
    %1343 = vmatprep.subr.mxu0 0.0
    %1344 = vmatpush1.msra.mxu0 0.0
    %1345 = vmatprep.subr.mxu0 0.0
    %1346 = vmatpush1.msra.mxu0 0.0
    %1347 = vmatprep.subr.mxu0 0.0
    %1348 = vmatpush1.msra.mxu0 0.0
    %1349 = vmatprep.subr.mxu0 0.0
    %1350 = vmatpush1.msra.mxu0 0.0
    %1351 = vmatprep.subr.mxu0 0.0
    %1352 = vmatpush1.msra.mxu0 0.0
    %1353 = vmatprep.subr.mxu0 0.0
    %1354 = vmatpush1.msra.mxu0 0.0
    %1355 = vmatprep.subr.mxu0 0.0
    %1356 = vmatpush1.msra.mxu0 0.0
    %1357 = vmatprep.subr.mxu0 0.0
    %1358 = vmatpush1.msra.mxu0 0.0
    %1359 = vmatprep.subr.mxu0 0.0
    %1360 = vmatpush1.msra.mxu0 0.0
    %1361 = vmatprep.subr.mxu0 0.0
    %1362 = vmatpush1.msra.mxu0 0.0
    %1363 = vmatprep.subr.mxu0 0.0
    %1364 = vmatpush1.msra.mxu0 0.0
    %1365 = vmatprep.subr.mxu0 0.0
    %1366 = vmatpush1.msra.mxu0 0.0
    %1367 = vmatprep.subr.mxu0 0.0
    %1368 = vmatpush1.msra.mxu0 0.0
    %1369 = vmatprep.subr.mxu0 0.0
    %1370 = vmatpush1.msra.mxu0 0.0
    %1371 = vmatprep.subr.mxu0 0.0
    %1372 = vmatpush1.msra.mxu0 0.0
    %1373 = vmatprep.subr.mxu0 0.0
    %1374 = vmatpush1.msra.mxu0 0.0
    %1375 = vmatprep.subr.mxu0 0.0
    %1376 = vmatpush1.msra.mxu0 0.0
    %1377 = vmatprep.subr.mxu0 0.0
    %1378 = vmatpush1.msra.mxu0 0.0
    %1379 = vmatprep.subr.mxu0 0.0
    %1380 = vmatpush1.msra.mxu0 0.0
    %1381 = vmatprep.subr.mxu0 0.0
    %1382 = vmatpush1.msra.mxu0 0.0
    %1383 = vmatprep.subr.mxu0 0.0
    %1384 = vmatpush1.msra.mxu0 0.0
    %1385 = vmatprep.subr.mxu0 0.0
    %1386 = vmatpush1.msra.mxu0 0.0
    %1387 = vmatprep.subr.mxu0 0.0
    %1388 = vmatpush1.msra.mxu0 0.0
    %1389 = vmatprep.subr.mxu0 0.0
    %1390 = vmatpush1.msra.mxu0 0.0
    %1391 = vmatprep.subr.mxu0 0.0
    %1392 = vmatpush1.msra.mxu0 0.0
    %1393 = vmatprep.subr.mxu0 0.0
    %1394 = vmatpush1.msra.mxu0 0.0
    %1395 = vmatprep.subr.mxu0 0.0
    %1396 = vmatpush1.msra.mxu0 0.0
    %1397 = vmatprep.mubr.f32.mxu0 0.0
    %1398 = vmatmul.mubr.f32.gmra.mrb[0].mxu0 %v1331
    %v1399 = vpop.f32.mrb[0].mxu0
    %v1400 = vadd.f32 0.0, %v1399
    %v1401 = vpop.f32.mrb[0].mxu0
    %1402 = vdwg.mxu0
    %1403 = vrot.lane.b32.xlu0 %v231, 64
    %v1404 = vpop.permute.xlu0 %1403
    %v1407 = vsel %vm236, %v945, 0
    %1409 = vmatprep.subr.mxu0 0.0
    %1410 = vmatpush1.msra.mxu0 %v1404
    %1411 = vmatprep.subr.mxu0 0.0
    %1412 = vmatpush1.msra.mxu0 0.0
    %1413 = vmatprep.subr.mxu0 0.0
    %1414 = vmatpush1.msra.mxu0 0.0
    %1415 = vmatprep.subr.mxu0 0.0
    %1416 = vmatpush1.msra.mxu0 0.0
    %1417 = vmatprep.subr.mxu0 0.0
    %1418 = vmatpush1.msra.mxu0 0.0
    %1419 = vmatprep.subr.mxu0 0.0
    %1420 = vmatpush1.msra.mxu0 0.0
    %1421 = vmatprep.subr.mxu0 0.0
    %1422 = vmatpush1.msra.mxu0 0.0
    %1423 = vmatprep.subr.mxu0 0.0
    %1424 = vmatpush1.msra.mxu0 0.0
    %1425 = vmatprep.subr.mxu0 0.0
    %1426 = vmatpush1.msra.mxu0 0.0
    %1427 = vmatprep.subr.mxu0 0.0
    %1428 = vmatpush1.msra.mxu0 0.0
    %1429 = vmatprep.subr.mxu0 0.0
    %1430 = vmatpush1.msra.mxu0 0.0
    %1431 = vmatprep.subr.mxu0 0.0
    %1432 = vmatpush1.msra.mxu0 0.0
    %1433 = vmatprep.subr.mxu0 0.0
    %1434 = vmatpush1.msra.mxu0 0.0
    %1435 = vmatprep.subr.mxu0 0.0
    %1436 = vmatpush1.msra.mxu0 0.0
    %1437 = vmatprep.subr.mxu0 0.0
    %1438 = vmatpush1.msra.mxu0 0.0
    %1439 = vmatprep.subr.mxu0 0.0
    %1440 = vmatpush1.msra.mxu0 0.0
    %1441 = vmatprep.subr.mxu0 0.0
    %1442 = vmatpush1.msra.mxu0 0.0
    %1443 = vmatprep.subr.mxu0 0.0
    %1444 = vmatpush1.msra.mxu0 0.0
    %1445 = vmatprep.subr.mxu0 0.0
    %1446 = vmatpush1.msra.mxu0 0.0
    %1447 = vmatprep.subr.mxu0 0.0
    %1448 = vmatpush1.msra.mxu0 0.0
    %1449 = vmatprep.subr.mxu0 0.0
    %1450 = vmatpush1.msra.mxu0 0.0
    %1451 = vmatprep.subr.mxu0 0.0
    %1452 = vmatpush1.msra.mxu0 0.0
    %1453 = vmatprep.subr.mxu0 0.0
    %1454 = vmatpush1.msra.mxu0 0.0
    %1455 = vmatprep.subr.mxu0 0.0
    %1456 = vmatpush1.msra.mxu0 0.0
    %1457 = vmatprep.subr.mxu0 0.0
    %1458 = vmatpush1.msra.mxu0 0.0
    %1459 = vmatprep.subr.mxu0 0.0
    %1460 = vmatpush1.msra.mxu0 0.0
    %1461 = vmatprep.subr.mxu0 0.0
    %1462 = vmatpush1.msra.mxu0 0.0
    %1463 = vmatprep.subr.mxu0 0.0
    %1464 = vmatpush1.msra.mxu0 0.0
    %1465 = vmatprep.subr.mxu0 0.0
    %1466 = vmatpush1.msra.mxu0 0.0
    %1467 = vmatprep.subr.mxu0 0.0
    %1468 = vmatpush1.msra.mxu0 0.0
    %1469 = vmatprep.subr.mxu0 0.0
    %1470 = vmatpush1.msra.mxu0 0.0
    %1471 = vmatprep.subr.mxu0 0.0
    %1472 = vmatpush1.msra.mxu0 0.0
    %1473 = vmatprep.mubr.f32.mxu0 0.0
    %1474 = vmatmul.mubr.f32.gmra.mrb[0].mxu0 %v1407
    %v1475 = vpop.f32.mrb[0].mxu0
    %v1476 = vadd.f32 0.0, %v1475
    %v1477 = vpop.f32.mrb[0].mxu0
    %1478 = vdwg.mxu0
    %1479 = vrot.lane.b32.xlu0 %v233, 64
    %v1480 = vpop.permute.xlu0 %1479
    %v1483 = vsel %vm236, %v946, 0
    %1485 = vmatprep.subr.mxu0 0.0
    %1486 = vmatpush1.msra.mxu0 %v1480
    %1487 = vmatprep.subr.mxu0 0.0
    %1488 = vmatpush1.msra.mxu0 0.0
    %1489 = vmatprep.subr.mxu0 0.0
    %1490 = vmatpush1.msra.mxu0 0.0
    %1491 = vmatprep.subr.mxu0 0.0
    %1492 = vmatpush1.msra.mxu0 0.0
    %1493 = vmatprep.subr.mxu0 0.0
    %1494 = vmatpush1.msra.mxu0 0.0
    %1495 = vmatprep.subr.mxu0 0.0
    %1496 = vmatpush1.msra.mxu0 0.0
    %1497 = vmatprep.subr.mxu0 0.0
    %1498 = vmatpush1.msra.mxu0 0.0
    %1499 = vmatprep.subr.mxu0 0.0
    %1500 = vmatpush1.msra.mxu0 0.0
    %1501 = vmatprep.subr.mxu0 0.0
    %1502 = vmatpush1.msra.mxu0 0.0
    %1503 = vmatprep.subr.mxu0 0.0
    %1504 = vmatpush1.msra.mxu0 0.0
    %1505 = vmatprep.subr.mxu0 0.0
    %1506 = vmatpush1.msra.mxu0 0.0
    %1507 = vmatprep.subr.mxu0 0.0
    %1508 = vmatpush1.msra.mxu0 0.0
    %1509 = vmatprep.subr.mxu0 0.0
    %1510 = vmatpush1.msra.mxu0 0.0
    %1511 = vmatprep.subr.mxu0 0.0
    %1512 = vmatpush1.msra.mxu0 0.0
    %1513 = vmatprep.subr.mxu0 0.0
    %1514 = vmatpush1.msra.mxu0 0.0
    %1515 = vmatprep.subr.mxu0 0.0
    %1516 = vmatpush1.msra.mxu0 0.0
    %1517 = vmatprep.subr.mxu0 0.0
    %1518 = vmatpush1.msra.mxu0 0.0
    %1519 = vmatprep.subr.mxu0 0.0
    %1520 = vmatpush1.msra.mxu0 0.0
    %1521 = vmatprep.subr.mxu0 0.0
    %1522 = vmatpush1.msra.mxu0 0.0
    %1523 = vmatprep.subr.mxu0 0.0
    %1524 = vmatpush1.msra.mxu0 0.0
    %1525 = vmatprep.subr.mxu0 0.0
    %1526 = vmatpush1.msra.mxu0 0.0
    %1527 = vmatprep.subr.mxu0 0.0
    %1528 = vmatpush1.msra.mxu0 0.0
    %1529 = vmatprep.subr.mxu0 0.0
    %1530 = vmatpush1.msra.mxu0 0.0
    %1531 = vmatprep.subr.mxu0 0.0
    %1532 = vmatpush1.msra.mxu0 0.0
    %1533 = vmatprep.subr.mxu0 0.0
    %1534 = vmatpush1.msra.mxu0 0.0
    %1535 = vmatprep.subr.mxu0 0.0
    %1536 = vmatpush1.msra.mxu0 0.0
    %1537 = vmatprep.subr.mxu0 0.0
    %1538 = vmatpush1.msra.mxu0 0.0
    %1539 = vmatprep.subr.mxu0 0.0
    %1540 = vmatpush1.msra.mxu0 0.0
    %1541 = vmatprep.subr.mxu0 0.0
    %1542 = vmatpush1.msra.mxu0 0.0
    %1543 = vmatprep.subr.mxu0 0.0
    %1544 = vmatpush1.msra.mxu0 0.0
    %1545 = vmatprep.subr.mxu0 0.0
    %1546 = vmatpush1.msra.mxu0 0.0
    %1547 = vmatprep.subr.mxu0 0.0
    %1548 = vmatpush1.msra.mxu0 0.0
    %1549 = vmatprep.mubr.f32.mxu0 0.0
    %1550 = vmatmul.mubr.f32.gmra.mrb[0].mxu0 %v1483
    %v1551 = vpop.f32.mrb[0].mxu0
    %v1552 = vadd.f32 0.0, %v1551
    %v1553 = vpop.f32.mrb[0].mxu0
    %1554 = vdwg.mxu0
    %1556 = vrot.lane.b32.xlu0 %v1096, 8
    %v1557 = vpop.permute.xlu0 %1556
    %1560 = vrot.lane.b32.xlu0 %v1172, 16
    %v1561 = vpop.permute.xlu0 %1560
    %1564 = vrot.lane.b32.xlu0 %v1248, 24
    %v1565 = vpop.permute.xlu0 %1564
    %v1567 = vsel %vm236, %v1020, %v1557
    %vm1568 = vcmask 130048
    %v1569 = vsel %vm1568, %v1567, %v1561
    %vm1570 = vcmask 195584
    %v1571 = vsel %vm1570, %v1569, %v1565
    %1573 = vrot.lane.b32.xlu0 %v1400, 8
    %v1574 = vpop.permute.xlu0 %1573
    %1577 = vrot.lane.b32.xlu0 %v1476, 16
    %v1578 = vpop.permute.xlu0 %1577
    %1581 = vrot.lane.b32.xlu0 %v1552, 24
    %v1582 = vpop.permute.xlu0 %1581
    %v1584 = vsel %vm236, %v1324, %v1574
    %v1585 = vsel %vm1568, %v1584, %v1578
    %v1586 = vsel %vm1570, %v1585, %v1582
    %v1587 = vld [vmem:[%s6] sm:$0xff]
    %v1588 = vld [vmem:[%s6 + $0x8] sm:$0xff]
    %v1589 = vld [vmem:[%s6 + $0x10] sm:$0xff]
    %v1590 = vld [vmem:[%s6 + $0x18] sm:$0xff]
    %v1591 = vld [vmem:[%s7] sm:$0x1]
    %v1593 = vlaneseq
    %v1594 = vshrl.u32 %v1593, 7
    %v1595 = vsub.s32 0, %v1594
    %v1596 = vrot.slane %v1591, %v1595
    %v1599 = vsel %vm84, %v1571, 0
    %v1602 = vsel %vm84, %v1586, 0
    %1604 = vmatprep.subr.mxu0 0.0
    %1605 = vmatpush1.msra.mxu0 %v1587
    %1606 = vmatprep.subr.mxu0 0.0
    %1607 = vmatpush1.msra.mxu0 %v1588
    %1608 = vmatprep.subr.mxu0 0.0
    %1609 = vmatpush1.msra.mxu0 %v1589
    %1610 = vmatprep.subr.mxu0 0.0
    %1611 = vmatpush1.msra.mxu0 %v1590
    %1612 = vmatprep.subr.mxu0 0.0
    %1613 = vmatpush1.msra.mxu0 0.0
    %1614 = vmatprep.subr.mxu0 0.0
    %1615 = vmatpush1.msra.mxu0 0.0
    %1616 = vmatprep.subr.mxu0 0.0
    %1617 = vmatpush1.msra.mxu0 0.0
    %1618 = vmatprep.subr.mxu0 0.0
    %1619 = vmatpush1.msra.mxu0 0.0
    %1620 = vmatprep.subr.mxu0 0.0
    %1621 = vmatpush1.msra.mxu0 0.0
    %1622 = vmatprep.subr.mxu0 0.0
    %1623 = vmatpush1.msra.mxu0 0.0
    %1624 = vmatprep.subr.mxu0 0.0
    %1625 = vmatpush1.msra.mxu0 0.0
    %1626 = vmatprep.subr.mxu0 0.0
    %1627 = vmatpush1.msra.mxu0 0.0
    %1628 = vmatprep.subr.mxu0 0.0
    %1629 = vmatpush1.msra.mxu0 0.0
    %1630 = vmatprep.subr.mxu0 0.0
    %1631 = vmatpush1.msra.mxu0 0.0
    %1632 = vmatprep.subr.mxu0 0.0
    %1633 = vmatpush1.msra.mxu0 0.0
    %1634 = vmatprep.subr.mxu0 0.0
    %1635 = vmatpush1.msra.mxu0 0.0
    %1636 = vmatprep.subr.mxu0 0.0
    %1637 = vmatpush1.msra.mxu0 0.0
    %1638 = vmatprep.subr.mxu0 0.0
    %1639 = vmatpush1.msra.mxu0 0.0
    %1640 = vmatprep.subr.mxu0 0.0
    %1641 = vmatpush1.msra.mxu0 0.0
    %1642 = vmatprep.subr.mxu0 0.0
    %1643 = vmatpush1.msra.mxu0 0.0
    %1644 = vmatprep.subr.mxu0 0.0
    %1645 = vmatpush1.msra.mxu0 0.0
    %1646 = vmatprep.subr.mxu0 0.0
    %1647 = vmatpush1.msra.mxu0 0.0
    %1648 = vmatprep.subr.mxu0 0.0
    %1649 = vmatpush1.msra.mxu0 0.0
    %1650 = vmatprep.subr.mxu0 0.0
    %1651 = vmatpush1.msra.mxu0 0.0
    %1652 = vmatprep.subr.mxu0 0.0
    %1653 = vmatpush1.msra.mxu0 0.0
    %1654 = vmatprep.subr.mxu0 0.0
    %1655 = vmatpush1.msra.mxu0 0.0
    %1656 = vmatprep.subr.mxu0 0.0
    %1657 = vmatpush1.msra.mxu0 0.0
    %1658 = vmatprep.subr.mxu0 0.0
    %1659 = vmatpush1.msra.mxu0 0.0
    %1660 = vmatprep.subr.mxu0 0.0
    %1661 = vmatpush1.msra.mxu0 0.0
    %1662 = vmatprep.subr.mxu0 0.0
    %1663 = vmatpush1.msra.mxu0 0.0
    %1664 = vmatprep.subr.mxu0 0.0
    %1665 = vmatpush1.msra.mxu0 0.0
    %1666 = vmatprep.subr.mxu0 0.0
    %1667 = vmatpush1.msra.mxu0 0.0
    %1668 = vmatprep.mubr.f32.mxu0 0.0
    %1669 = vmatmul.mubr.f32.gmra.mrb[0].mxu0 %v1599
    %v1670 = vpop.f32.mrb[0].mxu0
    %v1671 = vadd.f32 %v1596, %v1670
    %v1672 = vpop.f32.mrb[0].mxu0
    %1673 = vmatprep.mubr.f32.mxu0 0.0
    %1674 = vmatmul.mubr.f32.gmra.mrb[0].mxu0 %v1602
    %v1675 = vpop.f32.mrb[0].mxu0
    %v1676 = vadd.f32 %v1596, %v1675
    %v1677 = vpop.f32.mrb[0].mxu0
    %1678 = vdwg.mxu0
    %v1679 = vadd.f32 %v60, %v1671
    %v1680 = vadd.f32 %v61, %v1676
    %v1681 = vld [vmem:[%s8] sm:$0x1]
    %v1682 = vld [vmem:[%s9] sm:$0x1]
    %v1683 = vsel %vm84, %v1679, 0.0
    %1684 = vadd.xlane.f32.xlu0 %v1683
    %v1685 = vpop.xlane.xlu0 %1684
    %v1686 = vsel %vm84, %v1680, 0.0
    %1687 = vadd.xlane.f32.xlu0 %v1686
    %v1688 = vpop.xlane.xlu0 %1687
    %v1689 = vmul.f32 %v1685, %v91
    %v1690 = vmul.f32 %v1688, %v91
    %v1691 = vsub.f32 %v1679, %v1689
    %v1692 = vsub.f32 %v1680, %v1690
    %v1693 = vmul.f32 %v1691, %v1691
    %v1694 = vmul.f32 %v1692, %v1692
    %v1695 = vsel %vm84, %v1693, 0.0
    %1696 = vadd.xlane.f32.xlu0 %v1695
    %v1697 = vpop.xlane.xlu0 %1696
    %v1698 = vsel %vm84, %v1694, 0.0
    %1699 = vadd.xlane.f32.xlu0 %v1698
    %v1700 = vpop.xlane.xlu0 %1699
    %v1701 = vmul.f32 %v1697, %v91
    %v1702 = vmul.f32 %v1700, %v91
    %v1703 = vadd.f32 %v1701, 1e-05
    %v1704 = vadd.f32 %v1702, 1e-05
    %v1705 = vrsqrt.pop %v1703
    %v1706 = vrsqrt.pop %v1704
    %v1707 = vmul.f32 %v1691, %v1705
    %v1708 = vmul.f32 %v1692, %v1706
    %v1710 = vlaneseq
    %v1711 = vshrl.u32 %v1710, 7
    %v1712 = vsub.s32 0, %v1711
    %v1713 = vrot.slane %v1681, %v1712
    %v1715 = vmul.f32 %v1707, %v1713
    %v1716 = vmul.f32 %v1708, %v1713
    %v1718 = vlaneseq
    %v1719 = vshrl.u32 %v1718, 7
    %v1720 = vsub.s32 0, %v1719
    %v1721 = vrot.slane %v1682, %v1720
    %v1723 = vadd.f32 %v1715, %v1721
    %v1724 = vadd.f32 %v1716, %v1721
    %v1725 = vld [vmem:[%s10] sm:$0xff]
    %v1726 = vld [vmem:[%s10 + $0x8] sm:$0xff]
    %v1727 = vld [vmem:[%s10 + $0x10] sm:$0xff]
    %v1728 = vld [vmem:[%s10 + $0x18] sm:$0xff]
    %v1729 = vld [vmem:[%s11] sm:$0x1]
    %v1731 = vlaneseq
    %v1732 = vshrl.u32 %v1731, 7
    %v1733 = vsub.s32 0, %v1732
    %v1734 = vrot.slane %v1729, %v1733
    %v1737 = vsel %vm84, %v1723, 0
    %v1740 = vsel %vm84, %v1724, 0
    %1742 = vmatprep.subr.mxu0 0.0
    %1743 = vmatpush1.msra.mxu0 %v1725
    %1744 = vmatprep.subr.mxu0 0.0
    %1745 = vmatpush1.msra.mxu0 %v1726
    %1746 = vmatprep.subr.mxu0 0.0
    %1747 = vmatpush1.msra.mxu0 %v1727
    %1748 = vmatprep.subr.mxu0 0.0
    %1749 = vmatpush1.msra.mxu0 %v1728
    %1750 = vmatprep.subr.mxu0 0.0
    %1751 = vmatpush1.msra.mxu0 0.0
    %1752 = vmatprep.subr.mxu0 0.0
    %1753 = vmatpush1.msra.mxu0 0.0
    %1754 = vmatprep.subr.mxu0 0.0
    %1755 = vmatpush1.msra.mxu0 0.0
    %1756 = vmatprep.subr.mxu0 0.0
    %1757 = vmatpush1.msra.mxu0 0.0
    %1758 = vmatprep.subr.mxu0 0.0
    %1759 = vmatpush1.msra.mxu0 0.0
    %1760 = vmatprep.subr.mxu0 0.0
    %1761 = vmatpush1.msra.mxu0 0.0
    %1762 = vmatprep.subr.mxu0 0.0
    %1763 = vmatpush1.msra.mxu0 0.0
    %1764 = vmatprep.subr.mxu0 0.0
    %1765 = vmatpush1.msra.mxu0 0.0
    %1766 = vmatprep.subr.mxu0 0.0
    %1767 = vmatpush1.msra.mxu0 0.0
    %1768 = vmatprep.subr.mxu0 0.0
    %1769 = vmatpush1.msra.mxu0 0.0
    %1770 = vmatprep.subr.mxu0 0.0
    %1771 = vmatpush1.msra.mxu0 0.0
    %1772 = vmatprep.subr.mxu0 0.0
    %1773 = vmatpush1.msra.mxu0 0.0
    %1774 = vmatprep.subr.mxu0 0.0
    %1775 = vmatpush1.msra.mxu0 0.0
    %1776 = vmatprep.subr.mxu0 0.0
    %1777 = vmatpush1.msra.mxu0 0.0
    %1778 = vmatprep.subr.mxu0 0.0
    %1779 = vmatpush1.msra.mxu0 0.0
    %1780 = vmatprep.subr.mxu0 0.0
    %1781 = vmatpush1.msra.mxu0 0.0
    %1782 = vmatprep.subr.mxu0 0.0
    %1783 = vmatpush1.msra.mxu0 0.0
    %1784 = vmatprep.subr.mxu0 0.0
    %1785 = vmatpush1.msra.mxu0 0.0
    %1786 = vmatprep.subr.mxu0 0.0
    %1787 = vmatpush1.msra.mxu0 0.0
    %1788 = vmatprep.subr.mxu0 0.0
    %1789 = vmatpush1.msra.mxu0 0.0
    %1790 = vmatprep.subr.mxu0 0.0
    %1791 = vmatpush1.msra.mxu0 0.0
    %1792 = vmatprep.subr.mxu0 0.0
    %1793 = vmatpush1.msra.mxu0 0.0
    %1794 = vmatprep.subr.mxu0 0.0
    %1795 = vmatpush1.msra.mxu0 0.0
    %1796 = vmatprep.subr.mxu0 0.0
    %1797 = vmatpush1.msra.mxu0 0.0
    %1798 = vmatprep.subr.mxu0 0.0
    %1799 = vmatpush1.msra.mxu0 0.0
    %1800 = vmatprep.subr.mxu0 0.0
    %1801 = vmatpush1.msra.mxu0 0.0
    %1802 = vmatprep.subr.mxu0 0.0
    %1803 = vmatpush1.msra.mxu0 0.0
    %1804 = vmatprep.subr.mxu0 0.0
    %1805 = vmatpush1.msra.mxu0 0.0
    %1806 = vmatprep.mubr.f32.mxu0 0.0
    %1807 = vmatmul.mubr.f32.gmra.mrb[0].mxu0 %v1737
    %v1808 = vpop.f32.mrb[0].mxu0
    %v1809 = vadd.f32 %v1734, %v1808
    %v1810 = vpop.f32.mrb[0].mxu0
    %1811 = vmatprep.mubr.f32.mxu0 0.0
    %1812 = vmatmul.mubr.f32.gmra.mrb[0].mxu0 %v1740
    %v1813 = vpop.f32.mrb[0].mxu0
    %v1814 = vadd.f32 %v1734, %v1813
    %v1815 = vpop.f32.mrb[0].mxu0
    %1816 = vdwg.mxu0
    %v1817 = vmul.f32 %v1809, 0.5
    %v1818 = vmul.f32 %v1814, 0.5
    %v1819 = vmul.f32 %v1809, 0.044715
    %v1820 = vmul.f32 %v1814, 0.044715
    %v1821 = vmul.f32 %v1819, %v1809
    %v1822 = vmul.f32 %v1820, %v1814
    %v1823 = vmul.f32 %v1821, %v1809
    %v1824 = vmul.f32 %v1822, %v1814
    %v1825 = vadd.f32 %v1809, %v1823
    %v1826 = vadd.f32 %v1814, %v1824
    %v1827 = vmul.f32 %v1825, 0.7978846
    %v1828 = vmul.f32 %v1826, 0.7978846
    %v1829 = vtanh.pop %v1827
    %v1830 = vtanh.pop %v1828
    %v1831 = vadd.f32 %v1829, 1.0
    %v1832 = vadd.f32 %v1830, 1.0
    %v1833 = vmul.f32 %v1817, %v1831
    %v1834 = vmul.f32 %v1818, %v1832
    %v1835 = vld [vmem:[%s12] sm:$0xff]
    %v1836 = vld [vmem:[%s12 + $0x8] sm:$0xff]
    %v1837 = vld [vmem:[%s12 + $0x10] sm:$0xff]
    %v1838 = vld [vmem:[%s12 + $0x18] sm:$0xff]
    %v1839 = vld [vmem:[%s12 + $0x20] sm:$0xff]
    %v1840 = vld [vmem:[%s12 + $0x28] sm:$0xff]
    %v1841 = vld [vmem:[%s12 + $0x30] sm:$0xff]
    %v1842 = vld [vmem:[%s12 + $0x38] sm:$0xff]
    %v1843 = vld [vmem:[%s12 + $0x40] sm:$0xff]
    %v1844 = vld [vmem:[%s12 + $0x48] sm:$0xff]
    %v1845 = vld [vmem:[%s12 + $0x50] sm:$0xff]
    %v1846 = vld [vmem:[%s12 + $0x58] sm:$0xff]
    %v1847 = vld [vmem:[%s12 + $0x60] sm:$0xff]
    %v1848 = vld [vmem:[%s12 + $0x68] sm:$0xff]
    %v1849 = vld [vmem:[%s12 + $0x70] sm:$0xff]
    %v1850 = vld [vmem:[%s12 + $0x78] sm:$0xff]
    %v1851 = vld [vmem:[%s13] sm:$0x1]
    %v1853 = vlaneseq
    %v1854 = vshrl.u32 %v1853, 7
    %v1855 = vsub.s32 0, %v1854
    %v1856 = vrot.slane %v1851, %v1855
    %1858 = vmatprep.subr.mxu0 0.0
    %1859 = vmatpush1.msra.mxu0 %v1835
    %1860 = vmatprep.subr.mxu0 0.0
    %1861 = vmatpush1.msra.mxu0 %v1836
    %1862 = vmatprep.subr.mxu0 0.0
    %1863 = vmatpush1.msra.mxu0 %v1837
    %1864 = vmatprep.subr.mxu0 0.0
    %1865 = vmatpush1.msra.mxu0 %v1838
    %1866 = vmatprep.subr.mxu0 0.0
    %1867 = vmatpush1.msra.mxu0 %v1839
    %1868 = vmatprep.subr.mxu0 0.0
    %1869 = vmatpush1.msra.mxu0 %v1840
    %1870 = vmatprep.subr.mxu0 0.0
    %1871 = vmatpush1.msra.mxu0 %v1841
    %1872 = vmatprep.subr.mxu0 0.0
    %1873 = vmatpush1.msra.mxu0 %v1842
    %1874 = vmatprep.subr.mxu0 0.0
    %1875 = vmatpush1.msra.mxu0 %v1843
    %1876 = vmatprep.subr.mxu0 0.0
    %1877 = vmatpush1.msra.mxu0 %v1844
    %1878 = vmatprep.subr.mxu0 0.0
    %1879 = vmatpush1.msra.mxu0 %v1845
    %1880 = vmatprep.subr.mxu0 0.0
    %1881 = vmatpush1.msra.mxu0 %v1846
    %1882 = vmatprep.subr.mxu0 0.0
    %1883 = vmatpush1.msra.mxu0 %v1847
    %1884 = vmatprep.subr.mxu0 0.0
    %1885 = vmatpush1.msra.mxu0 %v1848
    %1886 = vmatprep.subr.mxu0 0.0
    %1887 = vmatpush1.msra.mxu0 %v1849
    %1888 = vmatprep.subr.mxu0 0.0
    %1889 = vmatpush1.msra.mxu0 %v1850
    %1890 = vmatprep.subr.mxu0 0.0
    %1891 = vmatpush1.msra.mxu0 0.0
    %1892 = vmatprep.subr.mxu0 0.0
    %1893 = vmatpush1.msra.mxu0 0.0
    %1894 = vmatprep.subr.mxu0 0.0
    %1895 = vmatpush1.msra.mxu0 0.0
    %1896 = vmatprep.subr.mxu0 0.0
    %1897 = vmatpush1.msra.mxu0 0.0
    %1898 = vmatprep.subr.mxu0 0.0
    %1899 = vmatpush1.msra.mxu0 0.0
    %1900 = vmatprep.subr.mxu0 0.0
    %1901 = vmatpush1.msra.mxu0 0.0
    %1902 = vmatprep.subr.mxu0 0.0
    %1903 = vmatpush1.msra.mxu0 0.0
    %1904 = vmatprep.subr.mxu0 0.0
    %1905 = vmatpush1.msra.mxu0 0.0
    %1906 = vmatprep.subr.mxu0 0.0
    %1907 = vmatpush1.msra.mxu0 0.0
    %1908 = vmatprep.subr.mxu0 0.0
    %1909 = vmatpush1.msra.mxu0 0.0
    %1910 = vmatprep.subr.mxu0 0.0
    %1911 = vmatpush1.msra.mxu0 0.0
    %1912 = vmatprep.subr.mxu0 0.0
    %1913 = vmatpush1.msra.mxu0 0.0
    %1914 = vmatprep.subr.mxu0 0.0
    %1915 = vmatpush1.msra.mxu0 0.0
    %1916 = vmatprep.subr.mxu0 0.0
    %1917 = vmatpush1.msra.mxu0 0.0
    %1918 = vmatprep.subr.mxu0 0.0
    %1919 = vmatpush1.msra.mxu0 0.0
    %1920 = vmatprep.subr.mxu0 0.0
    %1921 = vmatpush1.msra.mxu0 0.0
    %1922 = vmatprep.mubr.f32.mxu0 0.0
    %1923 = vmatmul.mubr.f32.gmra.mrb[0].mxu0 %v1833
    %v1924 = vpop.f32.mrb[0].mxu0
    %v1925 = vadd.f32 %v1856, %v1924
    %v1926 = vpop.f32.mrb[0].mxu0
    %1927 = vmatprep.mubr.f32.mxu0 0.0
    %1928 = vmatmul.mubr.f32.gmra.mrb[0].mxu0 %v1834
    %v1929 = vpop.f32.mrb[0].mxu0
    %v1930 = vadd.f32 %v1856, %v1929
    %v1931 = vpop.f32.mrb[0].mxu0
    %1932 = vdwg.mxu0
    %v1933 = vadd.f32 %v1679, %v1925
    %v1934 = vadd.f32 %v1680, %v1930
    %s1935 = scalar_lea.vmem %s2, 1
    %v1936 = vld [vmem:[%s1935] sm:$0x1]
    %s1937 = scalar_lea.vmem %s3, 1
    %v1938 = vld [vmem:[%s1937] sm:$0x1]
    %v1939 = vsel %vm84, %v1933, 0.0
    %1940 = vadd.xlane.f32.xlu0 %v1939
    %v1941 = vpop.xlane.xlu0 %1940
    %v1942 = vsel %vm84, %v1934, 0.0
    %1943 = vadd.xlane.f32.xlu0 %v1942
    %v1944 = vpop.xlane.xlu0 %1943
    %v1945 = vmul.f32 %v1941, %v91
    %v1946 = vmul.f32 %v1944, %v91
    %v1947 = vsub.f32 %v1933, %v1945
    %v1948 = vsub.f32 %v1934, %v1946
    %v1949 = vmul.f32 %v1947, %v1947
    %v1950 = vmul.f32 %v1948, %v1948
    %v1951 = vsel %vm84, %v1949, 0.0
    %1952 = vadd.xlane.f32.xlu0 %v1951
    %v1953 = vpop.xlane.xlu0 %1952
    %v1954 = vsel %vm84, %v1950, 0.0
    %1955 = vadd.xlane.f32.xlu0 %v1954
    %v1956 = vpop.xlane.xlu0 %1955
    %v1957 = vmul.f32 %v1953, %v91
    %v1958 = vmul.f32 %v1956, %v91
    %v1959 = vadd.f32 %v1957, 1e-05
    %v1960 = vadd.f32 %v1958, 1e-05
    %v1961 = vrsqrt.pop %v1959
    %v1962 = vrsqrt.pop %v1960
    %v1963 = vmul.f32 %v1947, %v1961
    %v1964 = vmul.f32 %v1948, %v1962
    %v1966 = vlaneseq
    %v1967 = vshrl.u32 %v1966, 7
    %v1968 = vsub.s32 0, %v1967
    %v1969 = vrot.slane %v1936, %v1968
    %v1971 = vmul.f32 %v1963, %v1969
    %v1972 = vmul.f32 %v1964, %v1969
    %v1974 = vlaneseq
    %v1975 = vshrl.u32 %v1974, 7
    %v1976 = vsub.s32 0, %v1975
    %v1977 = vrot.slane %v1938, %v1976
    %v1979 = vadd.f32 %v1971, %v1977
    %v1980 = vadd.f32 %v1972, %v1977
    %s1981 = scalar_lea.vmem %s4, 32
    %v1982 = vld [vmem:[%s1981] sm:$0xff]
    %v1983 = vld [vmem:[%s1981 + $0x8] sm:$0xff]
    %v1984 = vld [vmem:[%s1981 + $0x10] sm:$0xff]
    %v1985 = vld [vmem:[%s1981 + $0x18] sm:$0xff]
    %s1986 = scalar_lea.vmem %s5, 1
    %v1987 = vld [vmem:[%s1986] sm:$0x1]
    %v1989 = vlaneseq
    %v1990 = vshrl.u32 %v1989, 7
    %v1991 = vsub.s32 0, %v1990
    %v1992 = vrot.slane %v1987, %v1991
    %v1995 = vsel %vm84, %v1979, 0
    %v1998 = vsel %vm84, %v1980, 0
    %2000 = vmatprep.subr.mxu0 0.0
    %2001 = vmatpush1.msra.mxu0 %v1982
    %2002 = vmatprep.subr.mxu0 0.0
    %2003 = vmatpush1.msra.mxu0 %v1983
    %2004 = vmatprep.subr.mxu0 0.0
    %2005 = vmatpush1.msra.mxu0 %v1984
    %2006 = vmatprep.subr.mxu0 0.0
    %2007 = vmatpush1.msra.mxu0 %v1985
    %2008 = vmatprep.subr.mxu0 0.0
    %2009 = vmatpush1.msra.mxu0 0.0
    %2010 = vmatprep.subr.mxu0 0.0
    %2011 = vmatpush1.msra.mxu0 0.0
    %2012 = vmatprep.subr.mxu0 0.0
    %2013 = vmatpush1.msra.mxu0 0.0
    %2014 = vmatprep.subr.mxu0 0.0
    %2015 = vmatpush1.msra.mxu0 0.0
    %2016 = vmatprep.subr.mxu0 0.0
    %2017 = vmatpush1.msra.mxu0 0.0
    %2018 = vmatprep.subr.mxu0 0.0
    %2019 = vmatpush1.msra.mxu0 0.0
    %2020 = vmatprep.subr.mxu0 0.0
    %2021 = vmatpush1.msra.mxu0 0.0
    %2022 = vmatprep.subr.mxu0 0.0
    %2023 = vmatpush1.msra.mxu0 0.0
    %2024 = vmatprep.subr.mxu0 0.0
    %2025 = vmatpush1.msra.mxu0 0.0
    %2026 = vmatprep.subr.mxu0 0.0
    %2027 = vmatpush1.msra.mxu0 0.0
    %2028 = vmatprep.subr.mxu0 0.0
    %2029 = vmatpush1.msra.mxu0 0.0
    %2030 = vmatprep.subr.mxu0 0.0
    %2031 = vmatpush1.msra.mxu0 0.0
    %2032 = vmatprep.subr.mxu0 0.0
    %2033 = vmatpush1.msra.mxu0 0.0
    %2034 = vmatprep.subr.mxu0 0.0
    %2035 = vmatpush1.msra.mxu0 0.0
    %2036 = vmatprep.subr.mxu0 0.0
    %2037 = vmatpush1.msra.mxu0 0.0
    %2038 = vmatprep.subr.mxu0 0.0
    %2039 = vmatpush1.msra.mxu0 0.0
    %2040 = vmatprep.subr.mxu0 0.0
    %2041 = vmatpush1.msra.mxu0 0.0
    %2042 = vmatprep.subr.mxu0 0.0
    %2043 = vmatpush1.msra.mxu0 0.0
    %2044 = vmatprep.subr.mxu0 0.0
    %2045 = vmatpush1.msra.mxu0 0.0
    %2046 = vmatprep.subr.mxu0 0.0
    %2047 = vmatpush1.msra.mxu0 0.0
    %2048 = vmatprep.subr.mxu0 0.0
    %2049 = vmatpush1.msra.mxu0 0.0
    %2050 = vmatprep.subr.mxu0 0.0
    %2051 = vmatpush1.msra.mxu0 0.0
    %2052 = vmatprep.subr.mxu0 0.0
    %2053 = vmatpush1.msra.mxu0 0.0
    %2054 = vmatprep.subr.mxu0 0.0
    %2055 = vmatpush1.msra.mxu0 0.0
    %2056 = vmatprep.subr.mxu0 0.0
    %2057 = vmatpush1.msra.mxu0 0.0
    %2058 = vmatprep.subr.mxu0 0.0
    %2059 = vmatpush1.msra.mxu0 0.0
    %2060 = vmatprep.subr.mxu0 0.0
    %2061 = vmatpush1.msra.mxu0 0.0
    %2062 = vmatprep.subr.mxu0 0.0
    %2063 = vmatpush1.msra.mxu0 0.0
    %2064 = vmatprep.mubr.f32.mxu0 0.0
    %2065 = vmatmul.mubr.f32.gmra.mrb[0].mxu0 %v1995
    %v2066 = vpop.f32.mrb[0].mxu0
    %v2067 = vadd.f32 %v1992, %v2066
    %v2068 = vpop.f32.mrb[0].mxu0
    %2069 = vmatprep.mubr.f32.mxu0 0.0
    %2070 = vmatmul.mubr.f32.gmra.mrb[0].mxu0 %v1998
    %v2071 = vpop.f32.mrb[0].mxu0
    %v2072 = vadd.f32 %v1992, %v2071
    %v2073 = vpop.f32.mrb[0].mxu0
    %2074 = vdwg.mxu0
    %2076 = vrot.lane.b32.xlu0 %v2067, 120
    %v2077 = vpop.permute.xlu0 %2076
    %2078 = vrot.lane.b32.xlu0 %v2067, 112
    %v2079 = vpop.permute.xlu0 %2078
    %2080 = vrot.lane.b32.xlu0 %v2067, 104
    %v2081 = vpop.permute.xlu0 %2080
    %2083 = vrot.lane.b32.xlu0 %v2072, 120
    %v2084 = vpop.permute.xlu0 %2083
    %2085 = vrot.lane.b32.xlu0 %v2072, 112
    %v2086 = vpop.permute.xlu0 %2085
    %2087 = vrot.lane.b32.xlu0 %v2072, 104
    %v2088 = vpop.permute.xlu0 %2087
    %2089 = vrot.lane.b32.xlu0 %v2067, 96
    %v2090 = vpop.permute.xlu0 %2089
    %v2091 = vsel %vm236, %v2067, 0
    %v2093 = vsel %vm236, %v2090, 0
    %2095 = vmatprep.subr.mxu0 0.0
    %2096 = vmatpush1.xpose.msra.mxu0 %v2093
    %2097 = vmatprep.subr.mxu0 0.0
    %2098 = vmatpush1.xpose.msra.mxu0 0.0
    %2099 = vmatprep.subr.mxu0 0.0
    %2100 = vmatpush1.xpose.msra.mxu0 0.0
    %2101 = vmatprep.subr.mxu0 0.0
    %2102 = vmatpush1.xpose.msra.mxu0 0.0
    %2103 = vmatprep.subr.mxu0 0.0
    %2104 = vmatpush1.xpose.msra.mxu0 0.0
    %2105 = vmatprep.subr.mxu0 0.0
    %2106 = vmatpush1.xpose.msra.mxu0 0.0
    %2107 = vmatprep.subr.mxu0 0.0
    %2108 = vmatpush1.xpose.msra.mxu0 0.0
    %2109 = vmatprep.subr.mxu0 0.0
    %2110 = vmatpush1.xpose.msra.mxu0 0.0
    %2111 = vmatprep.subr.mxu0 0.0
    %2112 = vmatpush1.xpose.msra.mxu0 0.0
    %2113 = vmatprep.subr.mxu0 0.0
    %2114 = vmatpush1.xpose.msra.mxu0 0.0
    %2115 = vmatprep.subr.mxu0 0.0
    %2116 = vmatpush1.xpose.msra.mxu0 0.0
    %2117 = vmatprep.subr.mxu0 0.0
    %2118 = vmatpush1.xpose.msra.mxu0 0.0
    %2119 = vmatprep.subr.mxu0 0.0
    %2120 = vmatpush1.xpose.msra.mxu0 0.0
    %2121 = vmatprep.subr.mxu0 0.0
    %2122 = vmatpush1.xpose.msra.mxu0 0.0
    %2123 = vmatprep.subr.mxu0 0.0
    %2124 = vmatpush1.xpose.msra.mxu0 0.0
    %2125 = vmatprep.subr.mxu0 0.0
    %2126 = vmatpush1.xpose.msra.mxu0 0.0
    %2127 = vmatprep.subr.mxu0 0.0
    %2128 = vmatpush1.xpose.msra.mxu0 0.0
    %2129 = vmatprep.subr.mxu0 0.0
    %2130 = vmatpush1.xpose.msra.mxu0 0.0
    %2131 = vmatprep.subr.mxu0 0.0
    %2132 = vmatpush1.xpose.msra.mxu0 0.0
    %2133 = vmatprep.subr.mxu0 0.0
    %2134 = vmatpush1.xpose.msra.mxu0 0.0
    %2135 = vmatprep.subr.mxu0 0.0
    %2136 = vmatpush1.xpose.msra.mxu0 0.0
    %2137 = vmatprep.subr.mxu0 0.0
    %2138 = vmatpush1.xpose.msra.mxu0 0.0
    %2139 = vmatprep.subr.mxu0 0.0
    %2140 = vmatpush1.xpose.msra.mxu0 0.0
    %2141 = vmatprep.subr.mxu0 0.0
    %2142 = vmatpush1.xpose.msra.mxu0 0.0
    %2143 = vmatprep.subr.mxu0 0.0
    %2144 = vmatpush1.xpose.msra.mxu0 0.0
    %2145 = vmatprep.subr.mxu0 0.0
    %2146 = vmatpush1.xpose.msra.mxu0 0.0
    %2147 = vmatprep.subr.mxu0 0.0
    %2148 = vmatpush1.xpose.msra.mxu0 0.0
    %2149 = vmatprep.subr.mxu0 0.0
    %2150 = vmatpush1.xpose.msra.mxu0 0.0
    %2151 = vmatprep.subr.mxu0 0.0
    %2152 = vmatpush1.xpose.msra.mxu0 0.0
    %2153 = vmatprep.subr.mxu0 0.0
    %2154 = vmatpush1.xpose.msra.mxu0 0.0
    %2155 = vmatprep.subr.mxu0 0.0
    %2156 = vmatpush1.xpose.msra.mxu0 0.0
    %2157 = vmatprep.subr.mxu0 0.0
    %2158 = vmatpush1.xpose.msra.mxu0 0.0
    %2159 = vmatprep.mubr.f32.mxu0 0.0
    %2160 = vmatmul.mubr.f32.gmra.mrb[0].mxu0 %v2091
    %v2161 = vpop.f32.mrb[0].mxu0
    %v2162 = vadd.f32 0.0, %v2161
    %v2163 = vpop.f32.mrb[0].mxu0
    %2164 = vdwg.mxu0
    %2165 = vrot.lane.b32.xlu0 %v2077, 96
    %v2166 = vpop.permute.xlu0 %2165
    %v2167 = vsel %vm236, %v2077, 0
    %v2169 = vsel %vm236, %v2166, 0
    %2171 = vmatprep.subr.mxu0 0.0
    %2172 = vmatpush1.xpose.msra.mxu0 %v2169
    %2173 = vmatprep.subr.mxu0 0.0
    %2174 = vmatpush1.xpose.msra.mxu0 0.0
    %2175 = vmatprep.subr.mxu0 0.0
    %2176 = vmatpush1.xpose.msra.mxu0 0.0
    %2177 = vmatprep.subr.mxu0 0.0
    %2178 = vmatpush1.xpose.msra.mxu0 0.0
    %2179 = vmatprep.subr.mxu0 0.0
    %2180 = vmatpush1.xpose.msra.mxu0 0.0
    %2181 = vmatprep.subr.mxu0 0.0
    %2182 = vmatpush1.xpose.msra.mxu0 0.0
    %2183 = vmatprep.subr.mxu0 0.0
    %2184 = vmatpush1.xpose.msra.mxu0 0.0
    %2185 = vmatprep.subr.mxu0 0.0
    %2186 = vmatpush1.xpose.msra.mxu0 0.0
    %2187 = vmatprep.subr.mxu0 0.0
    %2188 = vmatpush1.xpose.msra.mxu0 0.0
    %2189 = vmatprep.subr.mxu0 0.0
    %2190 = vmatpush1.xpose.msra.mxu0 0.0
    %2191 = vmatprep.subr.mxu0 0.0
    %2192 = vmatpush1.xpose.msra.mxu0 0.0
    %2193 = vmatprep.subr.mxu0 0.0
    %2194 = vmatpush1.xpose.msra.mxu0 0.0
    %2195 = vmatprep.subr.mxu0 0.0
    %2196 = vmatpush1.xpose.msra.mxu0 0.0
    %2197 = vmatprep.subr.mxu0 0.0
    %2198 = vmatpush1.xpose.msra.mxu0 0.0
    %2199 = vmatprep.subr.mxu0 0.0
    %2200 = vmatpush1.xpose.msra.mxu0 0.0
    %2201 = vmatprep.subr.mxu0 0.0
    %2202 = vmatpush1.xpose.msra.mxu0 0.0
    %2203 = vmatprep.subr.mxu0 0.0
    %2204 = vmatpush1.xpose.msra.mxu0 0.0
    %2205 = vmatprep.subr.mxu0 0.0
    %2206 = vmatpush1.xpose.msra.mxu0 0.0
    %2207 = vmatprep.subr.mxu0 0.0
    %2208 = vmatpush1.xpose.msra.mxu0 0.0
    %2209 = vmatprep.subr.mxu0 0.0
    %2210 = vmatpush1.xpose.msra.mxu0 0.0
    %2211 = vmatprep.subr.mxu0 0.0
    %2212 = vmatpush1.xpose.msra.mxu0 0.0
    %2213 = vmatprep.subr.mxu0 0.0
    %2214 = vmatpush1.xpose.msra.mxu0 0.0
    %2215 = vmatprep.subr.mxu0 0.0
    %2216 = vmatpush1.xpose.msra.mxu0 0.0
    %2217 = vmatprep.subr.mxu0 0.0
    %2218 = vmatpush1.xpose.msra.mxu0 0.0
    %2219 = vmatprep.subr.mxu0 0.0
    %2220 = vmatpush1.xpose.msra.mxu0 0.0
    %2221 = vmatprep.subr.mxu0 0.0
    %2222 = vmatpush1.xpose.msra.mxu0 0.0
    %2223 = vmatprep.subr.mxu0 0.0
    %2224 = vmatpush1.xpose.msra.mxu0 0.0
    %2225 = vmatprep.subr.mxu0 0.0
    %2226 = vmatpush1.xpose.msra.mxu0 0.0
    %2227 = vmatprep.subr.mxu0 0.0
    %2228 = vmatpush1.xpose.msra.mxu0 0.0
    %2229 = vmatprep.subr.mxu0 0.0
    %2230 = vmatpush1.xpose.msra.mxu0 0.0
    %2231 = vmatprep.subr.mxu0 0.0
    %2232 = vmatpush1.xpose.msra.mxu0 0.0
    %2233 = vmatprep.subr.mxu0 0.0
    %2234 = vmatpush1.xpose.msra.mxu0 0.0
    %2235 = vmatprep.mubr.f32.mxu0 0.0
    %2236 = vmatmul.mubr.f32.gmra.mrb[0].mxu0 %v2167
    %v2237 = vpop.f32.mrb[0].mxu0
    %v2238 = vadd.f32 0.0, %v2237
    %v2239 = vpop.f32.mrb[0].mxu0
    %2240 = vdwg.mxu0
    %2241 = vrot.lane.b32.xlu0 %v2079, 96
    %v2242 = vpop.permute.xlu0 %2241
    %v2243 = vsel %vm236, %v2079, 0
    %v2245 = vsel %vm236, %v2242, 0
    %2247 = vmatprep.subr.mxu0 0.0
    %2248 = vmatpush1.xpose.msra.mxu0 %v2245
    %2249 = vmatprep.subr.mxu0 0.0
    %2250 = vmatpush1.xpose.msra.mxu0 0.0
    %2251 = vmatprep.subr.mxu0 0.0
    %2252 = vmatpush1.xpose.msra.mxu0 0.0
    %2253 = vmatprep.subr.mxu0 0.0
    %2254 = vmatpush1.xpose.msra.mxu0 0.0
    %2255 = vmatprep.subr.mxu0 0.0
    %2256 = vmatpush1.xpose.msra.mxu0 0.0
    %2257 = vmatprep.subr.mxu0 0.0
    %2258 = vmatpush1.xpose.msra.mxu0 0.0
    %2259 = vmatprep.subr.mxu0 0.0
    %2260 = vmatpush1.xpose.msra.mxu0 0.0
    %2261 = vmatprep.subr.mxu0 0.0
    %2262 = vmatpush1.xpose.msra.mxu0 0.0
    %2263 = vmatprep.subr.mxu0 0.0
    %2264 = vmatpush1.xpose.msra.mxu0 0.0
    %2265 = vmatprep.subr.mxu0 0.0
    %2266 = vmatpush1.xpose.msra.mxu0 0.0
    %2267 = vmatprep.subr.mxu0 0.0
    %2268 = vmatpush1.xpose.msra.mxu0 0.0
    %2269 = vmatprep.subr.mxu0 0.0
    %2270 = vmatpush1.xpose.msra.mxu0 0.0
    %2271 = vmatprep.subr.mxu0 0.0
    %2272 = vmatpush1.xpose.msra.mxu0 0.0
    %2273 = vmatprep.subr.mxu0 0.0
    %2274 = vmatpush1.xpose.msra.mxu0 0.0
    %2275 = vmatprep.subr.mxu0 0.0
    %2276 = vmatpush1.xpose.msra.mxu0 0.0
    %2277 = vmatprep.subr.mxu0 0.0
    %2278 = vmatpush1.xpose.msra.mxu0 0.0
    %2279 = vmatprep.subr.mxu0 0.0
    %2280 = vmatpush1.xpose.msra.mxu0 0.0
    %2281 = vmatprep.subr.mxu0 0.0
    %2282 = vmatpush1.xpose.msra.mxu0 0.0
    %2283 = vmatprep.subr.mxu0 0.0
    %2284 = vmatpush1.xpose.msra.mxu0 0.0
    %2285 = vmatprep.subr.mxu0 0.0
    %2286 = vmatpush1.xpose.msra.mxu0 0.0
    %2287 = vmatprep.subr.mxu0 0.0
    %2288 = vmatpush1.xpose.msra.mxu0 0.0
    %2289 = vmatprep.subr.mxu0 0.0
    %2290 = vmatpush1.xpose.msra.mxu0 0.0
    %2291 = vmatprep.subr.mxu0 0.0
    %2292 = vmatpush1.xpose.msra.mxu0 0.0
    %2293 = vmatprep.subr.mxu0 0.0
    %2294 = vmatpush1.xpose.msra.mxu0 0.0
    %2295 = vmatprep.subr.mxu0 0.0
    %2296 = vmatpush1.xpose.msra.mxu0 0.0
    %2297 = vmatprep.subr.mxu0 0.0
    %2298 = vmatpush1.xpose.msra.mxu0 0.0
    %2299 = vmatprep.subr.mxu0 0.0
    %2300 = vmatpush1.xpose.msra.mxu0 0.0
    %2301 = vmatprep.subr.mxu0 0.0
    %2302 = vmatpush1.xpose.msra.mxu0 0.0
    %2303 = vmatprep.subr.mxu0 0.0
    %2304 = vmatpush1.xpose.msra.mxu0 0.0
    %2305 = vmatprep.subr.mxu0 0.0
    %2306 = vmatpush1.xpose.msra.mxu0 0.0
    %2307 = vmatprep.subr.mxu0 0.0
    %2308 = vmatpush1.xpose.msra.mxu0 0.0
    %2309 = vmatprep.subr.mxu0 0.0
    %2310 = vmatpush1.xpose.msra.mxu0 0.0
    %2311 = vmatprep.mubr.f32.mxu0 0.0
    %2312 = vmatmul.mubr.f32.gmra.mrb[0].mxu0 %v2243
    %v2313 = vpop.f32.mrb[0].mxu0
    %v2314 = vadd.f32 0.0, %v2313
    %v2315 = vpop.f32.mrb[0].mxu0
    %2316 = vdwg.mxu0
    %2317 = vrot.lane.b32.xlu0 %v2081, 96
    %v2318 = vpop.permute.xlu0 %2317
    %v2319 = vsel %vm236, %v2081, 0
    %v2321 = vsel %vm236, %v2318, 0
    %2323 = vmatprep.subr.mxu0 0.0
    %2324 = vmatpush1.xpose.msra.mxu0 %v2321
    %2325 = vmatprep.subr.mxu0 0.0
    %2326 = vmatpush1.xpose.msra.mxu0 0.0
    %2327 = vmatprep.subr.mxu0 0.0
    %2328 = vmatpush1.xpose.msra.mxu0 0.0
    %2329 = vmatprep.subr.mxu0 0.0
    %2330 = vmatpush1.xpose.msra.mxu0 0.0
    %2331 = vmatprep.subr.mxu0 0.0
    %2332 = vmatpush1.xpose.msra.mxu0 0.0
    %2333 = vmatprep.subr.mxu0 0.0
    %2334 = vmatpush1.xpose.msra.mxu0 0.0
    %2335 = vmatprep.subr.mxu0 0.0
    %2336 = vmatpush1.xpose.msra.mxu0 0.0
    %2337 = vmatprep.subr.mxu0 0.0
    %2338 = vmatpush1.xpose.msra.mxu0 0.0
    %2339 = vmatprep.subr.mxu0 0.0
    %2340 = vmatpush1.xpose.msra.mxu0 0.0
    %2341 = vmatprep.subr.mxu0 0.0
    %2342 = vmatpush1.xpose.msra.mxu0 0.0
    %2343 = vmatprep.subr.mxu0 0.0
    %2344 = vmatpush1.xpose.msra.mxu0 0.0
    %2345 = vmatprep.subr.mxu0 0.0
    %2346 = vmatpush1.xpose.msra.mxu0 0.0
    %2347 = vmatprep.subr.mxu0 0.0
    %2348 = vmatpush1.xpose.msra.mxu0 0.0
    %2349 = vmatprep.subr.mxu0 0.0
    %2350 = vmatpush1.xpose.msra.mxu0 0.0
    %2351 = vmatprep.subr.mxu0 0.0
    %2352 = vmatpush1.xpose.msra.mxu0 0.0
    %2353 = vmatprep.subr.mxu0 0.0
    %2354 = vmatpush1.xpose.msra.mxu0 0.0
    %2355 = vmatprep.subr.mxu0 0.0
    %2356 = vmatpush1.xpose.msra.mxu0 0.0
    %2357 = vmatprep.subr.mxu0 0.0
    %2358 = vmatpush1.xpose.msra.mxu0 0.0
    %2359 = vmatprep.subr.mxu0 0.0
    %2360 = vmatpush1.xpose.msra.mxu0 0.0
    %2361 = vmatprep.subr.mxu0 0.0
    %2362 = vmatpush1.xpose.msra.mxu0 0.0
    %2363 = vmatprep.subr.mxu0 0.0
    %2364 = vmatpush1.xpose.msra.mxu0 0.0
    %2365 = vmatprep.subr.mxu0 0.0
    %2366 = vmatpush1.xpose.msra.mxu0 0.0
    %2367 = vmatprep.subr.mxu0 0.0
    %2368 = vmatpush1.xpose.msra.mxu0 0.0
    %2369 = vmatprep.subr.mxu0 0.0
    %2370 = vmatpush1.xpose.msra.mxu0 0.0
    %2371 = vmatprep.subr.mxu0 0.0
    %2372 = vmatpush1.xpose.msra.mxu0 0.0
    %2373 = vmatprep.subr.mxu0 0.0
    %2374 = vmatpush1.xpose.msra.mxu0 0.0
    %2375 = vmatprep.subr.mxu0 0.0
    %2376 = vmatpush1.xpose.msra.mxu0 0.0
    %2377 = vmatprep.subr.mxu0 0.0
    %2378 = vmatpush1.xpose.msra.mxu0 0.0
    %2379 = vmatprep.subr.mxu0 0.0
    %2380 = vmatpush1.xpose.msra.mxu0 0.0
    %2381 = vmatprep.subr.mxu0 0.0
    %2382 = vmatpush1.xpose.msra.mxu0 0.0
    %2383 = vmatprep.subr.mxu0 0.0
    %2384 = vmatpush1.xpose.msra.mxu0 0.0
    %2385 = vmatprep.subr.mxu0 0.0
    %2386 = vmatpush1.xpose.msra.mxu0 0.0
    %2387 = vmatprep.mubr.f32.mxu0 0.0
    %2388 = vmatmul.mubr.f32.gmra.mrb[0].mxu0 %v2319
    %v2389 = vpop.f32.mrb[0].mxu0
    %v2390 = vadd.f32 0.0, %v2389
    %v2391 = vpop.f32.mrb[0].mxu0
    %2392 = vdwg.mxu0
    %2393 = vrot.lane.b32.xlu0 %v2072, 96
    %v2394 = vpop.permute.xlu0 %2393
    %v2395 = vsel %vm236, %v2072, 0
    %v2397 = vsel %vm236, %v2394, 0
    %2399 = vmatprep.subr.mxu0 0.0
    %2400 = vmatpush1.xpose.msra.mxu0 %v2397
    %2401 = vmatprep.subr.mxu0 0.0
    %2402 = vmatpush1.xpose.msra.mxu0 0.0
    %2403 = vmatprep.subr.mxu0 0.0
    %2404 = vmatpush1.xpose.msra.mxu0 0.0
    %2405 = vmatprep.subr.mxu0 0.0
    %2406 = vmatpush1.xpose.msra.mxu0 0.0
    %2407 = vmatprep.subr.mxu0 0.0
    %2408 = vmatpush1.xpose.msra.mxu0 0.0
    %2409 = vmatprep.subr.mxu0 0.0
    %2410 = vmatpush1.xpose.msra.mxu0 0.0
    %2411 = vmatprep.subr.mxu0 0.0
    %2412 = vmatpush1.xpose.msra.mxu0 0.0
    %2413 = vmatprep.subr.mxu0 0.0
    %2414 = vmatpush1.xpose.msra.mxu0 0.0
    %2415 = vmatprep.subr.mxu0 0.0
    %2416 = vmatpush1.xpose.msra.mxu0 0.0
    %2417 = vmatprep.subr.mxu0 0.0
    %2418 = vmatpush1.xpose.msra.mxu0 0.0
    %2419 = vmatprep.subr.mxu0 0.0
    %2420 = vmatpush1.xpose.msra.mxu0 0.0
    %2421 = vmatprep.subr.mxu0 0.0
    %2422 = vmatpush1.xpose.msra.mxu0 0.0
    %2423 = vmatprep.subr.mxu0 0.0
    %2424 = vmatpush1.xpose.msra.mxu0 0.0
    %2425 = vmatprep.subr.mxu0 0.0
    %2426 = vmatpush1.xpose.msra.mxu0 0.0
    %2427 = vmatprep.subr.mxu0 0.0
    %2428 = vmatpush1.xpose.msra.mxu0 0.0
    %2429 = vmatprep.subr.mxu0 0.0
    %2430 = vmatpush1.xpose.msra.mxu0 0.0
    %2431 = vmatprep.subr.mxu0 0.0
    %2432 = vmatpush1.xpose.msra.mxu0 0.0
    %2433 = vmatprep.subr.mxu0 0.0
    %2434 = vmatpush1.xpose.msra.mxu0 0.0
    %2435 = vmatprep.subr.mxu0 0.0
    %2436 = vmatpush1.xpose.msra.mxu0 0.0
    %2437 = vmatprep.subr.mxu0 0.0
    %2438 = vmatpush1.xpose.msra.mxu0 0.0
    %2439 = vmatprep.subr.mxu0 0.0
    %2440 = vmatpush1.xpose.msra.mxu0 0.0
    %2441 = vmatprep.subr.mxu0 0.0
    %2442 = vmatpush1.xpose.msra.mxu0 0.0
    %2443 = vmatprep.subr.mxu0 0.0
    %2444 = vmatpush1.xpose.msra.mxu0 0.0
    %2445 = vmatprep.subr.mxu0 0.0
    %2446 = vmatpush1.xpose.msra.mxu0 0.0
    %2447 = vmatprep.subr.mxu0 0.0
    %2448 = vmatpush1.xpose.msra.mxu0 0.0
    %2449 = vmatprep.subr.mxu0 0.0
    %2450 = vmatpush1.xpose.msra.mxu0 0.0
    %2451 = vmatprep.subr.mxu0 0.0
    %2452 = vmatpush1.xpose.msra.mxu0 0.0
    %2453 = vmatprep.subr.mxu0 0.0
    %2454 = vmatpush1.xpose.msra.mxu0 0.0
    %2455 = vmatprep.subr.mxu0 0.0
    %2456 = vmatpush1.xpose.msra.mxu0 0.0
    %2457 = vmatprep.subr.mxu0 0.0
    %2458 = vmatpush1.xpose.msra.mxu0 0.0
    %2459 = vmatprep.subr.mxu0 0.0
    %2460 = vmatpush1.xpose.msra.mxu0 0.0
    %2461 = vmatprep.subr.mxu0 0.0
    %2462 = vmatpush1.xpose.msra.mxu0 0.0
    %2463 = vmatprep.mubr.f32.mxu0 0.0
    %2464 = vmatmul.mubr.f32.gmra.mrb[0].mxu0 %v2395
    %v2465 = vpop.f32.mrb[0].mxu0
    %v2466 = vadd.f32 0.0, %v2465
    %v2467 = vpop.f32.mrb[0].mxu0
    %2468 = vdwg.mxu0
    %2469 = vrot.lane.b32.xlu0 %v2084, 96
    %v2470 = vpop.permute.xlu0 %2469
    %v2471 = vsel %vm236, %v2084, 0
    %v2473 = vsel %vm236, %v2470, 0
    %2475 = vmatprep.subr.mxu0 0.0
    %2476 = vmatpush1.xpose.msra.mxu0 %v2473
    %2477 = vmatprep.subr.mxu0 0.0
    %2478 = vmatpush1.xpose.msra.mxu0 0.0
    %2479 = vmatprep.subr.mxu0 0.0
    %2480 = vmatpush1.xpose.msra.mxu0 0.0
    %2481 = vmatprep.subr.mxu0 0.0
    %2482 = vmatpush1.xpose.msra.mxu0 0.0
    %2483 = vmatprep.subr.mxu0 0.0
    %2484 = vmatpush1.xpose.msra.mxu0 0.0
    %2485 = vmatprep.subr.mxu0 0.0
    %2486 = vmatpush1.xpose.msra.mxu0 0.0
    %2487 = vmatprep.subr.mxu0 0.0
    %2488 = vmatpush1.xpose.msra.mxu0 0.0
    %2489 = vmatprep.subr.mxu0 0.0
    %2490 = vmatpush1.xpose.msra.mxu0 0.0
    %2491 = vmatprep.subr.mxu0 0.0
    %2492 = vmatpush1.xpose.msra.mxu0 0.0
    %2493 = vmatprep.subr.mxu0 0.0
    %2494 = vmatpush1.xpose.msra.mxu0 0.0
    %2495 = vmatprep.subr.mxu0 0.0
    %2496 = vmatpush1.xpose.msra.mxu0 0.0
    %2497 = vmatprep.subr.mxu0 0.0
    %2498 = vmatpush1.xpose.msra.mxu0 0.0
    %2499 = vmatprep.subr.mxu0 0.0
    %2500 = vmatpush1.xpose.msra.mxu0 0.0
    %2501 = vmatprep.subr.mxu0 0.0
    %2502 = vmatpush1.xpose.msra.mxu0 0.0
    %2503 = vmatprep.subr.mxu0 0.0
    %2504 = vmatpush1.xpose.msra.mxu0 0.0
    %2505 = vmatprep.subr.mxu0 0.0
    %2506 = vmatpush1.xpose.msra.mxu0 0.0
    %2507 = vmatprep.subr.mxu0 0.0
    %2508 = vmatpush1.xpose.msra.mxu0 0.0
    %2509 = vmatprep.subr.mxu0 0.0
    %2510 = vmatpush1.xpose.msra.mxu0 0.0
    %2511 = vmatprep.subr.mxu0 0.0
    %2512 = vmatpush1.xpose.msra.mxu0 0.0
    %2513 = vmatprep.subr.mxu0 0.0
    %2514 = vmatpush1.xpose.msra.mxu0 0.0
    %2515 = vmatprep.subr.mxu0 0.0
    %2516 = vmatpush1.xpose.msra.mxu0 0.0
    %2517 = vmatprep.subr.mxu0 0.0
    %2518 = vmatpush1.xpose.msra.mxu0 0.0
    %2519 = vmatprep.subr.mxu0 0.0
    %2520 = vmatpush1.xpose.msra.mxu0 0.0
    %2521 = vmatprep.subr.mxu0 0.0
    %2522 = vmatpush1.xpose.msra.mxu0 0.0
    %2523 = vmatprep.subr.mxu0 0.0
    %2524 = vmatpush1.xpose.msra.mxu0 0.0
    %2525 = vmatprep.subr.mxu0 0.0
    %2526 = vmatpush1.xpose.msra.mxu0 0.0
    %2527 = vmatprep.subr.mxu0 0.0
    %2528 = vmatpush1.xpose.msra.mxu0 0.0
    %2529 = vmatprep.subr.mxu0 0.0
    %2530 = vmatpush1.xpose.msra.mxu0 0.0
    %2531 = vmatprep.subr.mxu0 0.0
    %2532 = vmatpush1.xpose.msra.mxu0 0.0
    %2533 = vmatprep.subr.mxu0 0.0
    %2534 = vmatpush1.xpose.msra.mxu0 0.0
    %2535 = vmatprep.subr.mxu0 0.0
    %2536 = vmatpush1.xpose.msra.mxu0 0.0
    %2537 = vmatprep.subr.mxu0 0.0
    %2538 = vmatpush1.xpose.msra.mxu0 0.0
    %2539 = vmatprep.mubr.f32.mxu0 0.0
    %2540 = vmatmul.mubr.f32.gmra.mrb[0].mxu0 %v2471
    %v2541 = vpop.f32.mrb[0].mxu0
    %v2542 = vadd.f32 0.0, %v2541
    %v2543 = vpop.f32.mrb[0].mxu0
    %2544 = vdwg.mxu0
    %2545 = vrot.lane.b32.xlu0 %v2086, 96
    %v2546 = vpop.permute.xlu0 %2545
    %v2547 = vsel %vm236, %v2086, 0
    %v2549 = vsel %vm236, %v2546, 0
    %2551 = vmatprep.subr.mxu0 0.0
    %2552 = vmatpush1.xpose.msra.mxu0 %v2549
    %2553 = vmatprep.subr.mxu0 0.0
    %2554 = vmatpush1.xpose.msra.mxu0 0.0
    %2555 = vmatprep.subr.mxu0 0.0
    %2556 = vmatpush1.xpose.msra.mxu0 0.0
    %2557 = vmatprep.subr.mxu0 0.0
    %2558 = vmatpush1.xpose.msra.mxu0 0.0
    %2559 = vmatprep.subr.mxu0 0.0
    %2560 = vmatpush1.xpose.msra.mxu0 0.0
    %2561 = vmatprep.subr.mxu0 0.0
    %2562 = vmatpush1.xpose.msra.mxu0 0.0
    %2563 = vmatprep.subr.mxu0 0.0
    %2564 = vmatpush1.xpose.msra.mxu0 0.0
    %2565 = vmatprep.subr.mxu0 0.0
    %2566 = vmatpush1.xpose.msra.mxu0 0.0
    %2567 = vmatprep.subr.mxu0 0.0
    %2568 = vmatpush1.xpose.msra.mxu0 0.0
    %2569 = vmatprep.subr.mxu0 0.0
    %2570 = vmatpush1.xpose.msra.mxu0 0.0
    %2571 = vmatprep.subr.mxu0 0.0
    %2572 = vmatpush1.xpose.msra.mxu0 0.0
    %2573 = vmatprep.subr.mxu0 0.0
    %2574 = vmatpush1.xpose.msra.mxu0 0.0
    %2575 = vmatprep.subr.mxu0 0.0
    %2576 = vmatpush1.xpose.msra.mxu0 0.0
    %2577 = vmatprep.subr.mxu0 0.0
    %2578 = vmatpush1.xpose.msra.mxu0 0.0
    %2579 = vmatprep.subr.mxu0 0.0
    %2580 = vmatpush1.xpose.msra.mxu0 0.0
    %2581 = vmatprep.subr.mxu0 0.0
    %2582 = vmatpush1.xpose.msra.mxu0 0.0
    %2583 = vmatprep.subr.mxu0 0.0
    %2584 = vmatpush1.xpose.msra.mxu0 0.0
    %2585 = vmatprep.subr.mxu0 0.0
    %2586 = vmatpush1.xpose.msra.mxu0 0.0
    %2587 = vmatprep.subr.mxu0 0.0
    %2588 = vmatpush1.xpose.msra.mxu0 0.0
    %2589 = vmatprep.subr.mxu0 0.0
    %2590 = vmatpush1.xpose.msra.mxu0 0.0
    %2591 = vmatprep.subr.mxu0 0.0
    %2592 = vmatpush1.xpose.msra.mxu0 0.0
    %2593 = vmatprep.subr.mxu0 0.0
    %2594 = vmatpush1.xpose.msra.mxu0 0.0
    %2595 = vmatprep.subr.mxu0 0.0
    %2596 = vmatpush1.xpose.msra.mxu0 0.0
    %2597 = vmatprep.subr.mxu0 0.0
    %2598 = vmatpush1.xpose.msra.mxu0 0.0
    %2599 = vmatprep.subr.mxu0 0.0
    %2600 = vmatpush1.xpose.msra.mxu0 0.0
    %2601 = vmatprep.subr.mxu0 0.0
    %2602 = vmatpush1.xpose.msra.mxu0 0.0
    %2603 = vmatprep.subr.mxu0 0.0
    %2604 = vmatpush1.xpose.msra.mxu0 0.0
    %2605 = vmatprep.subr.mxu0 0.0
    %2606 = vmatpush1.xpose.msra.mxu0 0.0
    %2607 = vmatprep.subr.mxu0 0.0
    %2608 = vmatpush1.xpose.msra.mxu0 0.0
    %2609 = vmatprep.subr.mxu0 0.0
    %2610 = vmatpush1.xpose.msra.mxu0 0.0
    %2611 = vmatprep.subr.mxu0 0.0
    %2612 = vmatpush1.xpose.msra.mxu0 0.0
    %2613 = vmatprep.subr.mxu0 0.0
    %2614 = vmatpush1.xpose.msra.mxu0 0.0
    %2615 = vmatprep.mubr.f32.mxu0 0.0
    %2616 = vmatmul.mubr.f32.gmra.mrb[0].mxu0 %v2547
    %v2617 = vpop.f32.mrb[0].mxu0
    %v2618 = vadd.f32 0.0, %v2617
    %v2619 = vpop.f32.mrb[0].mxu0
    %2620 = vdwg.mxu0
    %2621 = vrot.lane.b32.xlu0 %v2088, 96
    %v2622 = vpop.permute.xlu0 %2621
    %v2623 = vsel %vm236, %v2088, 0
    %v2625 = vsel %vm236, %v2622, 0
    %2627 = vmatprep.subr.mxu0 0.0
    %2628 = vmatpush1.xpose.msra.mxu0 %v2625
    %2629 = vmatprep.subr.mxu0 0.0
    %2630 = vmatpush1.xpose.msra.mxu0 0.0
    %2631 = vmatprep.subr.mxu0 0.0
    %2632 = vmatpush1.xpose.msra.mxu0 0.0
    %2633 = vmatprep.subr.mxu0 0.0
    %2634 = vmatpush1.xpose.msra.mxu0 0.0
    %2635 = vmatprep.subr.mxu0 0.0
    %2636 = vmatpush1.xpose.msra.mxu0 0.0
    %2637 = vmatprep.subr.mxu0 0.0
    %2638 = vmatpush1.xpose.msra.mxu0 0.0
    %2639 = vmatprep.subr.mxu0 0.0
    %2640 = vmatpush1.xpose.msra.mxu0 0.0
    %2641 = vmatprep.subr.mxu0 0.0
    %2642 = vmatpush1.xpose.msra.mxu0 0.0
    %2643 = vmatprep.subr.mxu0 0.0
    %2644 = vmatpush1.xpose.msra.mxu0 0.0
    %2645 = vmatprep.subr.mxu0 0.0
    %2646 = vmatpush1.xpose.msra.mxu0 0.0
    %2647 = vmatprep.subr.mxu0 0.0
    %2648 = vmatpush1.xpose.msra.mxu0 0.0
    %2649 = vmatprep.subr.mxu0 0.0
    %2650 = vmatpush1.xpose.msra.mxu0 0.0
    %2651 = vmatprep.subr.mxu0 0.0
    %2652 = vmatpush1.xpose.msra.mxu0 0.0
    %2653 = vmatprep.subr.mxu0 0.0
    %2654 = vmatpush1.xpose.msra.mxu0 0.0
    %2655 = vmatprep.subr.mxu0 0.0
    %2656 = vmatpush1.xpose.msra.mxu0 0.0
    %2657 = vmatprep.subr.mxu0 0.0
    %2658 = vmatpush1.xpose.msra.mxu0 0.0
    %2659 = vmatprep.subr.mxu0 0.0
    %2660 = vmatpush1.xpose.msra.mxu0 0.0
    %2661 = vmatprep.subr.mxu0 0.0
    %2662 = vmatpush1.xpose.msra.mxu0 0.0
    %2663 = vmatprep.subr.mxu0 0.0
    %2664 = vmatpush1.xpose.msra.mxu0 0.0
    %2665 = vmatprep.subr.mxu0 0.0
    %2666 = vmatpush1.xpose.msra.mxu0 0.0
    %2667 = vmatprep.subr.mxu0 0.0
    %2668 = vmatpush1.xpose.msra.mxu0 0.0
    %2669 = vmatprep.subr.mxu0 0.0
    %2670 = vmatpush1.xpose.msra.mxu0 0.0
    %2671 = vmatprep.subr.mxu0 0.0
    %2672 = vmatpush1.xpose.msra.mxu0 0.0
    %2673 = vmatprep.subr.mxu0 0.0
    %2674 = vmatpush1.xpose.msra.mxu0 0.0
    %2675 = vmatprep.subr.mxu0 0.0
    %2676 = vmatpush1.xpose.msra.mxu0 0.0
    %2677 = vmatprep.subr.mxu0 0.0
    %2678 = vmatpush1.xpose.msra.mxu0 0.0
    %2679 = vmatprep.subr.mxu0 0.0
    %2680 = vmatpush1.xpose.msra.mxu0 0.0
    %2681 = vmatprep.subr.mxu0 0.0
    %2682 = vmatpush1.xpose.msra.mxu0 0.0
    %2683 = vmatprep.subr.mxu0 0.0
    %2684 = vmatpush1.xpose.msra.mxu0 0.0
    %2685 = vmatprep.subr.mxu0 0.0
    %2686 = vmatpush1.xpose.msra.mxu0 0.0
    %2687 = vmatprep.subr.mxu0 0.0
    %2688 = vmatpush1.xpose.msra.mxu0 0.0
    %2689 = vmatprep.subr.mxu0 0.0
    %2690 = vmatpush1.xpose.msra.mxu0 0.0
    %2691 = vmatprep.mubr.f32.mxu0 0.0
    %2692 = vmatmul.mubr.f32.gmra.mrb[0].mxu0 %v2623
    %v2693 = vpop.f32.mrb[0].mxu0
    %v2694 = vadd.f32 0.0, %v2693
    %v2695 = vpop.f32.mrb[0].mxu0
    %2696 = vdwg.mxu0
    %v2697 = vmul.f32 %v2162, 0.35355338
    %v2698 = vmul.f32 %v2238, 0.35355338
    %v2699 = vmul.f32 %v2314, 0.35355338
    %v2700 = vmul.f32 %v2390, 0.35355338
    %v2701 = vmul.f32 %v2466, 0.35355338
    %v2702 = vmul.f32 %v2542, 0.35355338
    %v2703 = vmul.f32 %v2618, 0.35355338
    %v2704 = vmul.f32 %v2694, 0.35355338
    %v2705 = vsel %vm75, %v2697, -1e+30
    %v2706 = vsel %vm75, %v2698, -1e+30
    %v2707 = vsel %vm75, %v2699, -1e+30
    %v2708 = vsel %vm75, %v2700, -1e+30
    %v2709 = vsel %vm81, %v2701, -1e+30
    %v2710 = vsel %vm81, %v2702, -1e+30
    %v2711 = vsel %vm81, %v2703, -1e+30
    %v2712 = vsel %vm81, %v2704, -1e+30
    %v2713 = vsel %vm236, %v2705, -inf
    %2714 = vmax.xlane.f32.xlu0 %v2713
    %v2715 = vpop.xlane.xlu0 %2714
    %v2716 = vsel %vm236, %v2706, -inf
    %2717 = vmax.xlane.f32.xlu0 %v2716
    %v2718 = vpop.xlane.xlu0 %2717
    %v2719 = vsel %vm236, %v2707, -inf
    %2720 = vmax.xlane.f32.xlu0 %v2719
    %v2721 = vpop.xlane.xlu0 %2720
    %v2722 = vsel %vm236, %v2708, -inf
    %2723 = vmax.xlane.f32.xlu0 %v2722
    %v2724 = vpop.xlane.xlu0 %2723
    %v2725 = vsel %vm236, %v2709, -inf
    %2726 = vmax.xlane.f32.xlu0 %v2725
    %v2727 = vpop.xlane.xlu0 %2726
    %v2728 = vsel %vm236, %v2710, -inf
    %2729 = vmax.xlane.f32.xlu0 %v2728
    %v2730 = vpop.xlane.xlu0 %2729
    %v2731 = vsel %vm236, %v2711, -inf
    %2732 = vmax.xlane.f32.xlu0 %v2731
    %v2733 = vpop.xlane.xlu0 %2732
    %v2734 = vsel %vm236, %v2712, -inf
    %2735 = vmax.xlane.f32.xlu0 %v2734
    %v2736 = vpop.xlane.xlu0 %2735
    %v2737 = vsub.f32 %v2705, %v2715
    %v2738 = vsub.f32 %v2706, %v2718
    %v2739 = vsub.f32 %v2707, %v2721
    %v2740 = vsub.f32 %v2708, %v2724
    %v2741 = vsub.f32 %v2709, %v2727
    %v2742 = vsub.f32 %v2710, %v2730
    %v2743 = vsub.f32 %v2711, %v2733
    %v2744 = vsub.f32 %v2712, %v2736
    %v2745 = vmul.f32 %v2737, 1.442695
    %v2746 = vpow.pop %v2745
    %v2747 = vmul.f32 %v2738, 1.442695
    %v2748 = vpow.pop %v2747
    %v2749 = vmul.f32 %v2739, 1.442695
    %v2750 = vpow.pop %v2749
    %v2751 = vmul.f32 %v2740, 1.442695
    %v2752 = vpow.pop %v2751
    %v2753 = vmul.f32 %v2741, 1.442695
    %v2754 = vpow.pop %v2753
    %v2755 = vmul.f32 %v2742, 1.442695
    %v2756 = vpow.pop %v2755
    %v2757 = vmul.f32 %v2743, 1.442695
    %v2758 = vpow.pop %v2757
    %v2759 = vmul.f32 %v2744, 1.442695
    %v2760 = vpow.pop %v2759
    %v2761 = vsel %vm236, %v2746, 0.0
    %2762 = vadd.xlane.f32.xlu0 %v2761
    %v2763 = vpop.xlane.xlu0 %2762
    %v2764 = vsel %vm236, %v2748, 0.0
    %2765 = vadd.xlane.f32.xlu0 %v2764
    %v2766 = vpop.xlane.xlu0 %2765
    %v2767 = vsel %vm236, %v2750, 0.0
    %2768 = vadd.xlane.f32.xlu0 %v2767
    %v2769 = vpop.xlane.xlu0 %2768
    %v2770 = vsel %vm236, %v2752, 0.0
    %2771 = vadd.xlane.f32.xlu0 %v2770
    %v2772 = vpop.xlane.xlu0 %2771
    %v2773 = vsel %vm236, %v2754, 0.0
    %2774 = vadd.xlane.f32.xlu0 %v2773
    %v2775 = vpop.xlane.xlu0 %2774
    %v2776 = vsel %vm236, %v2756, 0.0
    %2777 = vadd.xlane.f32.xlu0 %v2776
    %v2778 = vpop.xlane.xlu0 %2777
    %v2779 = vsel %vm236, %v2758, 0.0
    %2780 = vadd.xlane.f32.xlu0 %v2779
    %v2781 = vpop.xlane.xlu0 %2780
    %v2782 = vsel %vm236, %v2760, 0.0
    %2783 = vadd.xlane.f32.xlu0 %v2782
    %v2784 = vpop.xlane.xlu0 %2783
    %v2785 = vrcp.pop %v2763
    %v2786 = vrcp.pop %v2766
    %v2787 = vrcp.pop %v2769
    %v2788 = vrcp.pop %v2772
    %v2789 = vrcp.pop %v2775
    %v2790 = vrcp.pop %v2778
    %v2791 = vrcp.pop %v2781
    %v2792 = vrcp.pop %v2784
    %v2793 = vmul.f32 %v2746, %v2785
    %v2794 = vmul.f32 %v2748, %v2786
    %v2795 = vmul.f32 %v2750, %v2787
    %v2796 = vmul.f32 %v2752, %v2788
    %v2797 = vmul.f32 %v2754, %v2789
    %v2798 = vmul.f32 %v2756, %v2790
    %v2799 = vmul.f32 %v2758, %v2791
    %v2800 = vmul.f32 %v2760, %v2792
    %2801 = vrot.lane.b32.xlu0 %v2067, 64
    %v2802 = vpop.permute.xlu0 %2801
    %v2805 = vsel %vm236, %v2793, 0
    %2807 = vmatprep.subr.mxu0 0.0
    %2808 = vmatpush1.msra.mxu0 %v2802
    %2809 = vmatprep.subr.mxu0 0.0
    %2810 = vmatpush1.msra.mxu0 0.0
    %2811 = vmatprep.subr.mxu0 0.0
    %2812 = vmatpush1.msra.mxu0 0.0
    %2813 = vmatprep.subr.mxu0 0.0
    %2814 = vmatpush1.msra.mxu0 0.0
    %2815 = vmatprep.subr.mxu0 0.0
    %2816 = vmatpush1.msra.mxu0 0.0
    %2817 = vmatprep.subr.mxu0 0.0
    %2818 = vmatpush1.msra.mxu0 0.0
    %2819 = vmatprep.subr.mxu0 0.0
    %2820 = vmatpush1.msra.mxu0 0.0
    %2821 = vmatprep.subr.mxu0 0.0
    %2822 = vmatpush1.msra.mxu0 0.0
    %2823 = vmatprep.subr.mxu0 0.0
    %2824 = vmatpush1.msra.mxu0 0.0
    %2825 = vmatprep.subr.mxu0 0.0
    %2826 = vmatpush1.msra.mxu0 0.0
    %2827 = vmatprep.subr.mxu0 0.0
    %2828 = vmatpush1.msra.mxu0 0.0
    %2829 = vmatprep.subr.mxu0 0.0
    %2830 = vmatpush1.msra.mxu0 0.0
    %2831 = vmatprep.subr.mxu0 0.0
    %2832 = vmatpush1.msra.mxu0 0.0
    %2833 = vmatprep.subr.mxu0 0.0
    %2834 = vmatpush1.msra.mxu0 0.0
    %2835 = vmatprep.subr.mxu0 0.0
    %2836 = vmatpush1.msra.mxu0 0.0
    %2837 = vmatprep.subr.mxu0 0.0
    %2838 = vmatpush1.msra.mxu0 0.0
    %2839 = vmatprep.subr.mxu0 0.0
    %2840 = vmatpush1.msra.mxu0 0.0
    %2841 = vmatprep.subr.mxu0 0.0
    %2842 = vmatpush1.msra.mxu0 0.0
    %2843 = vmatprep.subr.mxu0 0.0
    %2844 = vmatpush1.msra.mxu0 0.0
    %2845 = vmatprep.subr.mxu0 0.0
    %2846 = vmatpush1.msra.mxu0 0.0
    %2847 = vmatprep.subr.mxu0 0.0
    %2848 = vmatpush1.msra.mxu0 0.0
    %2849 = vmatprep.subr.mxu0 0.0
    %2850 = vmatpush1.msra.mxu0 0.0
    %2851 = vmatprep.subr.mxu0 0.0
    %2852 = vmatpush1.msra.mxu0 0.0
    %2853 = vmatprep.subr.mxu0 0.0
    %2854 = vmatpush1.msra.mxu0 0.0
    %2855 = vmatprep.subr.mxu0 0.0
    %2856 = vmatpush1.msra.mxu0 0.0
    %2857 = vmatprep.subr.mxu0 0.0
    %2858 = vmatpush1.msra.mxu0 0.0
    %2859 = vmatprep.subr.mxu0 0.0
    %2860 = vmatpush1.msra.mxu0 0.0
    %2861 = vmatprep.subr.mxu0 0.0
    %2862 = vmatpush1.msra.mxu0 0.0
    %2863 = vmatprep.subr.mxu0 0.0
    %2864 = vmatpush1.msra.mxu0 0.0
    %2865 = vmatprep.subr.mxu0 0.0
    %2866 = vmatpush1.msra.mxu0 0.0
    %2867 = vmatprep.subr.mxu0 0.0
    %2868 = vmatpush1.msra.mxu0 0.0
    %2869 = vmatprep.subr.mxu0 0.0
    %2870 = vmatpush1.msra.mxu0 0.0
    %2871 = vmatprep.mubr.f32.mxu0 0.0
    %2872 = vmatmul.mubr.f32.gmra.mrb[0].mxu0 %v2805
    %v2873 = vpop.f32.mrb[0].mxu0
    %v2874 = vadd.f32 0.0, %v2873
    %v2875 = vpop.f32.mrb[0].mxu0
    %2876 = vdwg.mxu0
    %2877 = vrot.lane.b32.xlu0 %v2077, 64
    %v2878 = vpop.permute.xlu0 %2877
    %v2881 = vsel %vm236, %v2794, 0
    %2883 = vmatprep.subr.mxu0 0.0
    %2884 = vmatpush1.msra.mxu0 %v2878
    %2885 = vmatprep.subr.mxu0 0.0
    %2886 = vmatpush1.msra.mxu0 0.0
    %2887 = vmatprep.subr.mxu0 0.0
    %2888 = vmatpush1.msra.mxu0 0.0
    %2889 = vmatprep.subr.mxu0 0.0
    %2890 = vmatpush1.msra.mxu0 0.0
    %2891 = vmatprep.subr.mxu0 0.0
    %2892 = vmatpush1.msra.mxu0 0.0
    %2893 = vmatprep.subr.mxu0 0.0
    %2894 = vmatpush1.msra.mxu0 0.0
    %2895 = vmatprep.subr.mxu0 0.0
    %2896 = vmatpush1.msra.mxu0 0.0
    %2897 = vmatprep.subr.mxu0 0.0
    %2898 = vmatpush1.msra.mxu0 0.0
    %2899 = vmatprep.subr.mxu0 0.0
    %2900 = vmatpush1.msra.mxu0 0.0
    %2901 = vmatprep.subr.mxu0 0.0
    %2902 = vmatpush1.msra.mxu0 0.0
    %2903 = vmatprep.subr.mxu0 0.0
    %2904 = vmatpush1.msra.mxu0 0.0
    %2905 = vmatprep.subr.mxu0 0.0
    %2906 = vmatpush1.msra.mxu0 0.0
    %2907 = vmatprep.subr.mxu0 0.0
    %2908 = vmatpush1.msra.mxu0 0.0
    %2909 = vmatprep.subr.mxu0 0.0
    %2910 = vmatpush1.msra.mxu0 0.0
    %2911 = vmatprep.subr.mxu0 0.0
    %2912 = vmatpush1.msra.mxu0 0.0
    %2913 = vmatprep.subr.mxu0 0.0
    %2914 = vmatpush1.msra.mxu0 0.0
    %2915 = vmatprep.subr.mxu0 0.0
    %2916 = vmatpush1.msra.mxu0 0.0
    %2917 = vmatprep.subr.mxu0 0.0
    %2918 = vmatpush1.msra.mxu0 0.0
    %2919 = vmatprep.subr.mxu0 0.0
    %2920 = vmatpush1.msra.mxu0 0.0
    %2921 = vmatprep.subr.mxu0 0.0
    %2922 = vmatpush1.msra.mxu0 0.0
    %2923 = vmatprep.subr.mxu0 0.0
    %2924 = vmatpush1.msra.mxu0 0.0
    %2925 = vmatprep.subr.mxu0 0.0
    %2926 = vmatpush1.msra.mxu0 0.0
    %2927 = vmatprep.subr.mxu0 0.0
    %2928 = vmatpush1.msra.mxu0 0.0
    %2929 = vmatprep.subr.mxu0 0.0
    %2930 = vmatpush1.msra.mxu0 0.0
    %2931 = vmatprep.subr.mxu0 0.0
    %2932 = vmatpush1.msra.mxu0 0.0
    %2933 = vmatprep.subr.mxu0 0.0
    %2934 = vmatpush1.msra.mxu0 0.0
    %2935 = vmatprep.subr.mxu0 0.0
    %2936 = vmatpush1.msra.mxu0 0.0
    %2937 = vmatprep.subr.mxu0 0.0
    %2938 = vmatpush1.msra.mxu0 0.0
    %2939 = vmatprep.subr.mxu0 0.0
    %2940 = vmatpush1.msra.mxu0 0.0
    %2941 = vmatprep.subr.mxu0 0.0
    %2942 = vmatpush1.msra.mxu0 0.0
    %2943 = vmatprep.subr.mxu0 0.0
    %2944 = vmatpush1.msra.mxu0 0.0
    %2945 = vmatprep.subr.mxu0 0.0
    %2946 = vmatpush1.msra.mxu0 0.0
    %2947 = vmatprep.mubr.f32.mxu0 0.0
    %2948 = vmatmul.mubr.f32.gmra.mrb[0].mxu0 %v2881
    %v2949 = vpop.f32.mrb[0].mxu0
    %v2950 = vadd.f32 0.0, %v2949
    %v2951 = vpop.f32.mrb[0].mxu0
    %2952 = vdwg.mxu0
    %2953 = vrot.lane.b32.xlu0 %v2079, 64
    %v2954 = vpop.permute.xlu0 %2953
    %v2957 = vsel %vm236, %v2795, 0
    %2959 = vmatprep.subr.mxu0 0.0
    %2960 = vmatpush1.msra.mxu0 %v2954
    %2961 = vmatprep.subr.mxu0 0.0
    %2962 = vmatpush1.msra.mxu0 0.0
    %2963 = vmatprep.subr.mxu0 0.0
    %2964 = vmatpush1.msra.mxu0 0.0
    %2965 = vmatprep.subr.mxu0 0.0
    %2966 = vmatpush1.msra.mxu0 0.0
    %2967 = vmatprep.subr.mxu0 0.0
    %2968 = vmatpush1.msra.mxu0 0.0
    %2969 = vmatprep.subr.mxu0 0.0
    %2970 = vmatpush1.msra.mxu0 0.0
    %2971 = vmatprep.subr.mxu0 0.0
    %2972 = vmatpush1.msra.mxu0 0.0
    %2973 = vmatprep.subr.mxu0 0.0
    %2974 = vmatpush1.msra.mxu0 0.0
    %2975 = vmatprep.subr.mxu0 0.0
    %2976 = vmatpush1.msra.mxu0 0.0
    %2977 = vmatprep.subr.mxu0 0.0
    %2978 = vmatpush1.msra.mxu0 0.0
    %2979 = vmatprep.subr.mxu0 0.0
    %2980 = vmatpush1.msra.mxu0 0.0
    %2981 = vmatprep.subr.mxu0 0.0
    %2982 = vmatpush1.msra.mxu0 0.0
    %2983 = vmatprep.subr.mxu0 0.0
    %2984 = vmatpush1.msra.mxu0 0.0
    %2985 = vmatprep.subr.mxu0 0.0
    %2986 = vmatpush1.msra.mxu0 0.0
    %2987 = vmatprep.subr.mxu0 0.0
    %2988 = vmatpush1.msra.mxu0 0.0
    %2989 = vmatprep.subr.mxu0 0.0
    %2990 = vmatpush1.msra.mxu0 0.0
    %2991 = vmatprep.subr.mxu0 0.0
    %2992 = vmatpush1.msra.mxu0 0.0
    %2993 = vmatprep.subr.mxu0 0.0
    %2994 = vmatpush1.msra.mxu0 0.0
    %2995 = vmatprep.subr.mxu0 0.0
    %2996 = vmatpush1.msra.mxu0 0.0
    %2997 = vmatprep.subr.mxu0 0.0
    %2998 = vmatpush1.msra.mxu0 0.0
    %2999 = vmatprep.subr.mxu0 0.0
    %3000 = vmatpush1.msra.mxu0 0.0
    %3001 = vmatprep.subr.mxu0 0.0
    %3002 = vmatpush1.msra.mxu0 0.0
    %3003 = vmatprep.subr.mxu0 0.0
    %3004 = vmatpush1.msra.mxu0 0.0
    %3005 = vmatprep.subr.mxu0 0.0
    %3006 = vmatpush1.msra.mxu0 0.0
    %3007 = vmatprep.subr.mxu0 0.0
    %3008 = vmatpush1.msra.mxu0 0.0
    %3009 = vmatprep.subr.mxu0 0.0
    %3010 = vmatpush1.msra.mxu0 0.0
    %3011 = vmatprep.subr.mxu0 0.0
    %3012 = vmatpush1.msra.mxu0 0.0
    %3013 = vmatprep.subr.mxu0 0.0
    %3014 = vmatpush1.msra.mxu0 0.0
    %3015 = vmatprep.subr.mxu0 0.0
    %3016 = vmatpush1.msra.mxu0 0.0
    %3017 = vmatprep.subr.mxu0 0.0
    %3018 = vmatpush1.msra.mxu0 0.0
    %3019 = vmatprep.subr.mxu0 0.0
    %3020 = vmatpush1.msra.mxu0 0.0
    %3021 = vmatprep.subr.mxu0 0.0
    %3022 = vmatpush1.msra.mxu0 0.0
    %3023 = vmatprep.mubr.f32.mxu0 0.0
    %3024 = vmatmul.mubr.f32.gmra.mrb[0].mxu0 %v2957
    %v3025 = vpop.f32.mrb[0].mxu0
    %v3026 = vadd.f32 0.0, %v3025
    %v3027 = vpop.f32.mrb[0].mxu0
    %3028 = vdwg.mxu0
    %3029 = vrot.lane.b32.xlu0 %v2081, 64
    %v3030 = vpop.permute.xlu0 %3029
    %v3033 = vsel %vm236, %v2796, 0
    %3035 = vmatprep.subr.mxu0 0.0
    %3036 = vmatpush1.msra.mxu0 %v3030
    %3037 = vmatprep.subr.mxu0 0.0
    %3038 = vmatpush1.msra.mxu0 0.0
    %3039 = vmatprep.subr.mxu0 0.0
    %3040 = vmatpush1.msra.mxu0 0.0
    %3041 = vmatprep.subr.mxu0 0.0
    %3042 = vmatpush1.msra.mxu0 0.0
    %3043 = vmatprep.subr.mxu0 0.0
    %3044 = vmatpush1.msra.mxu0 0.0
    %3045 = vmatprep.subr.mxu0 0.0
    %3046 = vmatpush1.msra.mxu0 0.0
    %3047 = vmatprep.subr.mxu0 0.0
    %3048 = vmatpush1.msra.mxu0 0.0
    %3049 = vmatprep.subr.mxu0 0.0
    %3050 = vmatpush1.msra.mxu0 0.0
    %3051 = vmatprep.subr.mxu0 0.0
    %3052 = vmatpush1.msra.mxu0 0.0
    %3053 = vmatprep.subr.mxu0 0.0
    %3054 = vmatpush1.msra.mxu0 0.0
    %3055 = vmatprep.subr.mxu0 0.0
    %3056 = vmatpush1.msra.mxu0 0.0
    %3057 = vmatprep.subr.mxu0 0.0
    %3058 = vmatpush1.msra.mxu0 0.0
    %3059 = vmatprep.subr.mxu0 0.0
    %3060 = vmatpush1.msra.mxu0 0.0
    %3061 = vmatprep.subr.mxu0 0.0
    %3062 = vmatpush1.msra.mxu0 0.0
    %3063 = vmatprep.subr.mxu0 0.0
    %3064 = vmatpush1.msra.mxu0 0.0
    %3065 = vmatprep.subr.mxu0 0.0
    %3066 = vmatpush1.msra.mxu0 0.0
    %3067 = vmatprep.subr.mxu0 0.0
    %3068 = vmatpush1.msra.mxu0 0.0
    %3069 = vmatprep.subr.mxu0 0.0
    %3070 = vmatpush1.msra.mxu0 0.0
    %3071 = vmatprep.subr.mxu0 0.0
    %3072 = vmatpush1.msra.mxu0 0.0
    %3073 = vmatprep.subr.mxu0 0.0
    %3074 = vmatpush1.msra.mxu0 0.0
    %3075 = vmatprep.subr.mxu0 0.0
    %3076 = vmatpush1.msra.mxu0 0.0
    %3077 = vmatprep.subr.mxu0 0.0
    %3078 = vmatpush1.msra.mxu0 0.0
    %3079 = vmatprep.subr.mxu0 0.0
    %3080 = vmatpush1.msra.mxu0 0.0
    %3081 = vmatprep.subr.mxu0 0.0
    %3082 = vmatpush1.msra.mxu0 0.0
    %3083 = vmatprep.subr.mxu0 0.0
    %3084 = vmatpush1.msra.mxu0 0.0
    %3085 = vmatprep.subr.mxu0 0.0
    %3086 = vmatpush1.msra.mxu0 0.0
    %3087 = vmatprep.subr.mxu0 0.0
    %3088 = vmatpush1.msra.mxu0 0.0
    %3089 = vmatprep.subr.mxu0 0.0
    %3090 = vmatpush1.msra.mxu0 0.0
    %3091 = vmatprep.subr.mxu0 0.0
    %3092 = vmatpush1.msra.mxu0 0.0
    %3093 = vmatprep.subr.mxu0 0.0
    %3094 = vmatpush1.msra.mxu0 0.0
    %3095 = vmatprep.subr.mxu0 0.0
    %3096 = vmatpush1.msra.mxu0 0.0
    %3097 = vmatprep.subr.mxu0 0.0
    %3098 = vmatpush1.msra.mxu0 0.0
    %3099 = vmatprep.mubr.f32.mxu0 0.0
    %3100 = vmatmul.mubr.f32.gmra.mrb[0].mxu0 %v3033
    %v3101 = vpop.f32.mrb[0].mxu0
    %v3102 = vadd.f32 0.0, %v3101
    %v3103 = vpop.f32.mrb[0].mxu0
    %3104 = vdwg.mxu0
    %3105 = vrot.lane.b32.xlu0 %v2072, 64
    %v3106 = vpop.permute.xlu0 %3105
    %v3109 = vsel %vm236, %v2797, 0
    %3111 = vmatprep.subr.mxu0 0.0
    %3112 = vmatpush1.msra.mxu0 %v3106
    %3113 = vmatprep.subr.mxu0 0.0
    %3114 = vmatpush1.msra.mxu0 0.0
    %3115 = vmatprep.subr.mxu0 0.0
    %3116 = vmatpush1.msra.mxu0 0.0
    %3117 = vmatprep.subr.mxu0 0.0
    %3118 = vmatpush1.msra.mxu0 0.0
    %3119 = vmatprep.subr.mxu0 0.0
    %3120 = vmatpush1.msra.mxu0 0.0
    %3121 = vmatprep.subr.mxu0 0.0
    %3122 = vmatpush1.msra.mxu0 0.0
    %3123 = vmatprep.subr.mxu0 0.0
    %3124 = vmatpush1.msra.mxu0 0.0
    %3125 = vmatprep.subr.mxu0 0.0
    %3126 = vmatpush1.msra.mxu0 0.0
    %3127 = vmatprep.subr.mxu0 0.0
    %3128 = vmatpush1.msra.mxu0 0.0
    %3129 = vmatprep.subr.mxu0 0.0
    %3130 = vmatpush1.msra.mxu0 0.0
    %3131 = vmatprep.subr.mxu0 0.0
    %3132 = vmatpush1.msra.mxu0 0.0
    %3133 = vmatprep.subr.mxu0 0.0
    %3134 = vmatpush1.msra.mxu0 0.0
    %3135 = vmatprep.subr.mxu0 0.0
    %3136 = vmatpush1.msra.mxu0 0.0
    %3137 = vmatprep.subr.mxu0 0.0
    %3138 = vmatpush1.msra.mxu0 0.0
    %3139 = vmatprep.subr.mxu0 0.0
    %3140 = vmatpush1.msra.mxu0 0.0
    %3141 = vmatprep.subr.mxu0 0.0
    %3142 = vmatpush1.msra.mxu0 0.0
    %3143 = vmatprep.subr.mxu0 0.0
    %3144 = vmatpush1.msra.mxu0 0.0
    %3145 = vmatprep.subr.mxu0 0.0
    %3146 = vmatpush1.msra.mxu0 0.0
    %3147 = vmatprep.subr.mxu0 0.0
    %3148 = vmatpush1.msra.mxu0 0.0
    %3149 = vmatprep.subr.mxu0 0.0
    %3150 = vmatpush1.msra.mxu0 0.0
    %3151 = vmatprep.subr.mxu0 0.0
    %3152 = vmatpush1.msra.mxu0 0.0
    %3153 = vmatprep.subr.mxu0 0.0
    %3154 = vmatpush1.msra.mxu0 0.0
    %3155 = vmatprep.subr.mxu0 0.0
    %3156 = vmatpush1.msra.mxu0 0.0
    %3157 = vmatprep.subr.mxu0 0.0
    %3158 = vmatpush1.msra.mxu0 0.0
    %3159 = vmatprep.subr.mxu0 0.0
    %3160 = vmatpush1.msra.mxu0 0.0
    %3161 = vmatprep.subr.mxu0 0.0
    %3162 = vmatpush1.msra.mxu0 0.0
    %3163 = vmatprep.subr.mxu0 0.0
    %3164 = vmatpush1.msra.mxu0 0.0
    %3165 = vmatprep.subr.mxu0 0.0
    %3166 = vmatpush1.msra.mxu0 0.0
    %3167 = vmatprep.subr.mxu0 0.0
    %3168 = vmatpush1.msra.mxu0 0.0
    %3169 = vmatprep.subr.mxu0 0.0
    %3170 = vmatpush1.msra.mxu0 0.0
    %3171 = vmatprep.subr.mxu0 0.0
    %3172 = vmatpush1.msra.mxu0 0.0
    %3173 = vmatprep.subr.mxu0 0.0
    %3174 = vmatpush1.msra.mxu0 0.0
    %3175 = vmatprep.mubr.f32.mxu0 0.0
    %3176 = vmatmul.mubr.f32.gmra.mrb[0].mxu0 %v3109
    %v3177 = vpop.f32.mrb[0].mxu0
    %v3178 = vadd.f32 0.0, %v3177
    %v3179 = vpop.f32.mrb[0].mxu0
    %3180 = vdwg.mxu0
    %3181 = vrot.lane.b32.xlu0 %v2084, 64
    %v3182 = vpop.permute.xlu0 %3181
    %v3185 = vsel %vm236, %v2798, 0
    %3187 = vmatprep.subr.mxu0 0.0
    %3188 = vmatpush1.msra.mxu0 %v3182
    %3189 = vmatprep.subr.mxu0 0.0
    %3190 = vmatpush1.msra.mxu0 0.0
    %3191 = vmatprep.subr.mxu0 0.0
    %3192 = vmatpush1.msra.mxu0 0.0
    %3193 = vmatprep.subr.mxu0 0.0
    %3194 = vmatpush1.msra.mxu0 0.0
    %3195 = vmatprep.subr.mxu0 0.0
    %3196 = vmatpush1.msra.mxu0 0.0
    %3197 = vmatprep.subr.mxu0 0.0
    %3198 = vmatpush1.msra.mxu0 0.0
    %3199 = vmatprep.subr.mxu0 0.0
    %3200 = vmatpush1.msra.mxu0 0.0
    %3201 = vmatprep.subr.mxu0 0.0
    %3202 = vmatpush1.msra.mxu0 0.0
    %3203 = vmatprep.subr.mxu0 0.0
    %3204 = vmatpush1.msra.mxu0 0.0
    %3205 = vmatprep.subr.mxu0 0.0
    %3206 = vmatpush1.msra.mxu0 0.0
    %3207 = vmatprep.subr.mxu0 0.0
    %3208 = vmatpush1.msra.mxu0 0.0
    %3209 = vmatprep.subr.mxu0 0.0
    %3210 = vmatpush1.msra.mxu0 0.0
    %3211 = vmatprep.subr.mxu0 0.0
    %3212 = vmatpush1.msra.mxu0 0.0
    %3213 = vmatprep.subr.mxu0 0.0
    %3214 = vmatpush1.msra.mxu0 0.0
    %3215 = vmatprep.subr.mxu0 0.0
    %3216 = vmatpush1.msra.mxu0 0.0
    %3217 = vmatprep.subr.mxu0 0.0
    %3218 = vmatpush1.msra.mxu0 0.0
    %3219 = vmatprep.subr.mxu0 0.0
    %3220 = vmatpush1.msra.mxu0 0.0
    %3221 = vmatprep.subr.mxu0 0.0
    %3222 = vmatpush1.msra.mxu0 0.0
    %3223 = vmatprep.subr.mxu0 0.0
    %3224 = vmatpush1.msra.mxu0 0.0
    %3225 = vmatprep.subr.mxu0 0.0
    %3226 = vmatpush1.msra.mxu0 0.0
    %3227 = vmatprep.subr.mxu0 0.0
    %3228 = vmatpush1.msra.mxu0 0.0
    %3229 = vmatprep.subr.mxu0 0.0
    %3230 = vmatpush1.msra.mxu0 0.0
    %3231 = vmatprep.subr.mxu0 0.0
    %3232 = vmatpush1.msra.mxu0 0.0
    %3233 = vmatprep.subr.mxu0 0.0
    %3234 = vmatpush1.msra.mxu0 0.0
    %3235 = vmatprep.subr.mxu0 0.0
    %3236 = vmatpush1.msra.mxu0 0.0
    %3237 = vmatprep.subr.mxu0 0.0
    %3238 = vmatpush1.msra.mxu0 0.0
    %3239 = vmatprep.subr.mxu0 0.0
    %3240 = vmatpush1.msra.mxu0 0.0
    %3241 = vmatprep.subr.mxu0 0.0
    %3242 = vmatpush1.msra.mxu0 0.0
    %3243 = vmatprep.subr.mxu0 0.0
    %3244 = vmatpush1.msra.mxu0 0.0
    %3245 = vmatprep.subr.mxu0 0.0
    %3246 = vmatpush1.msra.mxu0 0.0
    %3247 = vmatprep.subr.mxu0 0.0
    %3248 = vmatpush1.msra.mxu0 0.0
    %3249 = vmatprep.subr.mxu0 0.0
    %3250 = vmatpush1.msra.mxu0 0.0
    %3251 = vmatprep.mubr.f32.mxu0 0.0
    %3252 = vmatmul.mubr.f32.gmra.mrb[0].mxu0 %v3185
    %v3253 = vpop.f32.mrb[0].mxu0
    %v3254 = vadd.f32 0.0, %v3253
    %v3255 = vpop.f32.mrb[0].mxu0
    %3256 = vdwg.mxu0
    %3257 = vrot.lane.b32.xlu0 %v2086, 64
    %v3258 = vpop.permute.xlu0 %3257
    %v3261 = vsel %vm236, %v2799, 0
    %3263 = vmatprep.subr.mxu0 0.0
    %3264 = vmatpush1.msra.mxu0 %v3258
    %3265 = vmatprep.subr.mxu0 0.0
    %3266 = vmatpush1.msra.mxu0 0.0
    %3267 = vmatprep.subr.mxu0 0.0
    %3268 = vmatpush1.msra.mxu0 0.0
    %3269 = vmatprep.subr.mxu0 0.0
    %3270 = vmatpush1.msra.mxu0 0.0
    %3271 = vmatprep.subr.mxu0 0.0
    %3272 = vmatpush1.msra.mxu0 0.0
    %3273 = vmatprep.subr.mxu0 0.0
    %3274 = vmatpush1.msra.mxu0 0.0
    %3275 = vmatprep.subr.mxu0 0.0
    %3276 = vmatpush1.msra.mxu0 0.0
    %3277 = vmatprep.subr.mxu0 0.0
    %3278 = vmatpush1.msra.mxu0 0.0
    %3279 = vmatprep.subr.mxu0 0.0
    %3280 = vmatpush1.msra.mxu0 0.0
    %3281 = vmatprep.subr.mxu0 0.0
    %3282 = vmatpush1.msra.mxu0 0.0
    %3283 = vmatprep.subr.mxu0 0.0
    %3284 = vmatpush1.msra.mxu0 0.0
    %3285 = vmatprep.subr.mxu0 0.0
    %3286 = vmatpush1.msra.mxu0 0.0
    %3287 = vmatprep.subr.mxu0 0.0
    %3288 = vmatpush1.msra.mxu0 0.0
    %3289 = vmatprep.subr.mxu0 0.0
    %3290 = vmatpush1.msra.mxu0 0.0
    %3291 = vmatprep.subr.mxu0 0.0
    %3292 = vmatpush1.msra.mxu0 0.0
    %3293 = vmatprep.subr.mxu0 0.0
    %3294 = vmatpush1.msra.mxu0 0.0
    %3295 = vmatprep.subr.mxu0 0.0
    %3296 = vmatpush1.msra.mxu0 0.0
    %3297 = vmatprep.subr.mxu0 0.0
    %3298 = vmatpush1.msra.mxu0 0.0
    %3299 = vmatprep.subr.mxu0 0.0
    %3300 = vmatpush1.msra.mxu0 0.0
    %3301 = vmatprep.subr.mxu0 0.0
    %3302 = vmatpush1.msra.mxu0 0.0
    %3303 = vmatprep.subr.mxu0 0.0
    %3304 = vmatpush1.msra.mxu0 0.0
    %3305 = vmatprep.subr.mxu0 0.0
    %3306 = vmatpush1.msra.mxu0 0.0
    %3307 = vmatprep.subr.mxu0 0.0
    %3308 = vmatpush1.msra.mxu0 0.0
    %3309 = vmatprep.subr.mxu0 0.0
    %3310 = vmatpush1.msra.mxu0 0.0
    %3311 = vmatprep.subr.mxu0 0.0
    %3312 = vmatpush1.msra.mxu0 0.0
    %3313 = vmatprep.subr.mxu0 0.0
    %3314 = vmatpush1.msra.mxu0 0.0
    %3315 = vmatprep.subr.mxu0 0.0
    %3316 = vmatpush1.msra.mxu0 0.0
    %3317 = vmatprep.subr.mxu0 0.0
    %3318 = vmatpush1.msra.mxu0 0.0
    %3319 = vmatprep.subr.mxu0 0.0
    %3320 = vmatpush1.msra.mxu0 0.0
    %3321 = vmatprep.subr.mxu0 0.0
    %3322 = vmatpush1.msra.mxu0 0.0
    %3323 = vmatprep.subr.mxu0 0.0
    %3324 = vmatpush1.msra.mxu0 0.0
    %3325 = vmatprep.subr.mxu0 0.0
    %3326 = vmatpush1.msra.mxu0 0.0
    %3327 = vmatprep.mubr.f32.mxu0 0.0
    %3328 = vmatmul.mubr.f32.gmra.mrb[0].mxu0 %v3261
    %v3329 = vpop.f32.mrb[0].mxu0
    %v3330 = vadd.f32 0.0, %v3329
    %v3331 = vpop.f32.mrb[0].mxu0
    %3332 = vdwg.mxu0
    %3333 = vrot.lane.b32.xlu0 %v2088, 64
    %v3334 = vpop.permute.xlu0 %3333
    %v3337 = vsel %vm236, %v2800, 0
    %3339 = vmatprep.subr.mxu0 0.0
    %3340 = vmatpush1.msra.mxu0 %v3334
    %3341 = vmatprep.subr.mxu0 0.0
    %3342 = vmatpush1.msra.mxu0 0.0
    %3343 = vmatprep.subr.mxu0 0.0
    %3344 = vmatpush1.msra.mxu0 0.0
    %3345 = vmatprep.subr.mxu0 0.0
    %3346 = vmatpush1.msra.mxu0 0.0
    %3347 = vmatprep.subr.mxu0 0.0
    %3348 = vmatpush1.msra.mxu0 0.0
    %3349 = vmatprep.subr.mxu0 0.0
    %3350 = vmatpush1.msra.mxu0 0.0
    %3351 = vmatprep.subr.mxu0 0.0
    %3352 = vmatpush1.msra.mxu0 0.0
    %3353 = vmatprep.subr.mxu0 0.0
    %3354 = vmatpush1.msra.mxu0 0.0
    %3355 = vmatprep.subr.mxu0 0.0
    %3356 = vmatpush1.msra.mxu0 0.0
    %3357 = vmatprep.subr.mxu0 0.0
    %3358 = vmatpush1.msra.mxu0 0.0
    %3359 = vmatprep.subr.mxu0 0.0
    %3360 = vmatpush1.msra.mxu0 0.0
    %3361 = vmatprep.subr.mxu0 0.0
    %3362 = vmatpush1.msra.mxu0 0.0
    %3363 = vmatprep.subr.mxu0 0.0
    %3364 = vmatpush1.msra.mxu0 0.0
    %3365 = vmatprep.subr.mxu0 0.0
    %3366 = vmatpush1.msra.mxu0 0.0
    %3367 = vmatprep.subr.mxu0 0.0
    %3368 = vmatpush1.msra.mxu0 0.0
    %3369 = vmatprep.subr.mxu0 0.0
    %3370 = vmatpush1.msra.mxu0 0.0
    %3371 = vmatprep.subr.mxu0 0.0
    %3372 = vmatpush1.msra.mxu0 0.0
    %3373 = vmatprep.subr.mxu0 0.0
    %3374 = vmatpush1.msra.mxu0 0.0
    %3375 = vmatprep.subr.mxu0 0.0
    %3376 = vmatpush1.msra.mxu0 0.0
    %3377 = vmatprep.subr.mxu0 0.0
    %3378 = vmatpush1.msra.mxu0 0.0
    %3379 = vmatprep.subr.mxu0 0.0
    %3380 = vmatpush1.msra.mxu0 0.0
    %3381 = vmatprep.subr.mxu0 0.0
    %3382 = vmatpush1.msra.mxu0 0.0
    %3383 = vmatprep.subr.mxu0 0.0
    %3384 = vmatpush1.msra.mxu0 0.0
    %3385 = vmatprep.subr.mxu0 0.0
    %3386 = vmatpush1.msra.mxu0 0.0
    %3387 = vmatprep.subr.mxu0 0.0
    %3388 = vmatpush1.msra.mxu0 0.0
    %3389 = vmatprep.subr.mxu0 0.0
    %3390 = vmatpush1.msra.mxu0 0.0
    %3391 = vmatprep.subr.mxu0 0.0
    %3392 = vmatpush1.msra.mxu0 0.0
    %3393 = vmatprep.subr.mxu0 0.0
    %3394 = vmatpush1.msra.mxu0 0.0
    %3395 = vmatprep.subr.mxu0 0.0
    %3396 = vmatpush1.msra.mxu0 0.0
    %3397 = vmatprep.subr.mxu0 0.0
    %3398 = vmatpush1.msra.mxu0 0.0
    %3399 = vmatprep.subr.mxu0 0.0
    %3400 = vmatpush1.msra.mxu0 0.0
    %3401 = vmatprep.subr.mxu0 0.0
    %3402 = vmatpush1.msra.mxu0 0.0
    %3403 = vmatprep.mubr.f32.mxu0 0.0
    %3404 = vmatmul.mubr.f32.gmra.mrb[0].mxu0 %v3337
    %v3405 = vpop.f32.mrb[0].mxu0
    %v3406 = vadd.f32 0.0, %v3405
    %v3407 = vpop.f32.mrb[0].mxu0
    %3408 = vdwg.mxu0
    %3410 = vrot.lane.b32.xlu0 %v2950, 8
    %v3411 = vpop.permute.xlu0 %3410
    %3414 = vrot.lane.b32.xlu0 %v3026, 16
    %v3415 = vpop.permute.xlu0 %3414
    %3418 = vrot.lane.b32.xlu0 %v3102, 24
    %v3419 = vpop.permute.xlu0 %3418
    %v3421 = vsel %vm236, %v2874, %v3411
    %v3422 = vsel %vm1568, %v3421, %v3415
    %v3423 = vsel %vm1570, %v3422, %v3419
    %3425 = vrot.lane.b32.xlu0 %v3254, 8
    %v3426 = vpop.permute.xlu0 %3425
    %3429 = vrot.lane.b32.xlu0 %v3330, 16
    %v3430 = vpop.permute.xlu0 %3429
    %3433 = vrot.lane.b32.xlu0 %v3406, 24
    %v3434 = vpop.permute.xlu0 %3433
    %v3436 = vsel %vm236, %v3178, %v3426
    %v3437 = vsel %vm1568, %v3436, %v3430
    %v3438 = vsel %vm1570, %v3437, %v3434
    %s3439 = scalar_lea.vmem %s6, 32
    %v3440 = vld [vmem:[%s3439] sm:$0xff]
    %v3441 = vld [vmem:[%s3439 + $0x8] sm:$0xff]
    %v3442 = vld [vmem:[%s3439 + $0x10] sm:$0xff]
    %v3443 = vld [vmem:[%s3439 + $0x18] sm:$0xff]
    %s3444 = scalar_lea.vmem %s7, 1
    %v3445 = vld [vmem:[%s3444] sm:$0x1]
    %v3447 = vlaneseq
    %v3448 = vshrl.u32 %v3447, 7
    %v3449 = vsub.s32 0, %v3448
    %v3450 = vrot.slane %v3445, %v3449
    %v3453 = vsel %vm84, %v3423, 0
    %v3456 = vsel %vm84, %v3438, 0
    %3458 = vmatprep.subr.mxu0 0.0
    %3459 = vmatpush1.msra.mxu0 %v3440
    %3460 = vmatprep.subr.mxu0 0.0
    %3461 = vmatpush1.msra.mxu0 %v3441
    %3462 = vmatprep.subr.mxu0 0.0
    %3463 = vmatpush1.msra.mxu0 %v3442
    %3464 = vmatprep.subr.mxu0 0.0
    %3465 = vmatpush1.msra.mxu0 %v3443
    %3466 = vmatprep.subr.mxu0 0.0
    %3467 = vmatpush1.msra.mxu0 0.0
    %3468 = vmatprep.subr.mxu0 0.0
    %3469 = vmatpush1.msra.mxu0 0.0
    %3470 = vmatprep.subr.mxu0 0.0
    %3471 = vmatpush1.msra.mxu0 0.0
    %3472 = vmatprep.subr.mxu0 0.0
    %3473 = vmatpush1.msra.mxu0 0.0
    %3474 = vmatprep.subr.mxu0 0.0
    %3475 = vmatpush1.msra.mxu0 0.0
    %3476 = vmatprep.subr.mxu0 0.0
    %3477 = vmatpush1.msra.mxu0 0.0
    %3478 = vmatprep.subr.mxu0 0.0
    %3479 = vmatpush1.msra.mxu0 0.0
    %3480 = vmatprep.subr.mxu0 0.0
    %3481 = vmatpush1.msra.mxu0 0.0
    %3482 = vmatprep.subr.mxu0 0.0
    %3483 = vmatpush1.msra.mxu0 0.0
    %3484 = vmatprep.subr.mxu0 0.0
    %3485 = vmatpush1.msra.mxu0 0.0
    %3486 = vmatprep.subr.mxu0 0.0
    %3487 = vmatpush1.msra.mxu0 0.0
    %3488 = vmatprep.subr.mxu0 0.0
    %3489 = vmatpush1.msra.mxu0 0.0
    %3490 = vmatprep.subr.mxu0 0.0
    %3491 = vmatpush1.msra.mxu0 0.0
    %3492 = vmatprep.subr.mxu0 0.0
    %3493 = vmatpush1.msra.mxu0 0.0
    %3494 = vmatprep.subr.mxu0 0.0
    %3495 = vmatpush1.msra.mxu0 0.0
    %3496 = vmatprep.subr.mxu0 0.0
    %3497 = vmatpush1.msra.mxu0 0.0
    %3498 = vmatprep.subr.mxu0 0.0
    %3499 = vmatpush1.msra.mxu0 0.0
    %3500 = vmatprep.subr.mxu0 0.0
    %3501 = vmatpush1.msra.mxu0 0.0
    %3502 = vmatprep.subr.mxu0 0.0
    %3503 = vmatpush1.msra.mxu0 0.0
    %3504 = vmatprep.subr.mxu0 0.0
    %3505 = vmatpush1.msra.mxu0 0.0
    %3506 = vmatprep.subr.mxu0 0.0
    %3507 = vmatpush1.msra.mxu0 0.0
    %3508 = vmatprep.subr.mxu0 0.0
    %3509 = vmatpush1.msra.mxu0 0.0
    %3510 = vmatprep.subr.mxu0 0.0
    %3511 = vmatpush1.msra.mxu0 0.0
    %3512 = vmatprep.subr.mxu0 0.0
    %3513 = vmatpush1.msra.mxu0 0.0
    %3514 = vmatprep.subr.mxu0 0.0
    %3515 = vmatpush1.msra.mxu0 0.0
    %3516 = vmatprep.subr.mxu0 0.0
    %3517 = vmatpush1.msra.mxu0 0.0
    %3518 = vmatprep.subr.mxu0 0.0
    %3519 = vmatpush1.msra.mxu0 0.0
    %3520 = vmatprep.subr.mxu0 0.0
    %3521 = vmatpush1.msra.mxu0 0.0
    %3522 = vmatprep.mubr.f32.mxu0 0.0
    %3523 = vmatmul.mubr.f32.gmra.mrb[0].mxu0 %v3453
    %v3524 = vpop.f32.mrb[0].mxu0
    %v3525 = vadd.f32 %v3450, %v3524
    %v3526 = vpop.f32.mrb[0].mxu0
    %3527 = vmatprep.mubr.f32.mxu0 0.0
    %3528 = vmatmul.mubr.f32.gmra.mrb[0].mxu0 %v3456
    %v3529 = vpop.f32.mrb[0].mxu0
    %v3530 = vadd.f32 %v3450, %v3529
    %v3531 = vpop.f32.mrb[0].mxu0
    %3532 = vdwg.mxu0
    %v3533 = vadd.f32 %v1933, %v3525
    %v3534 = vadd.f32 %v1934, %v3530
    %s3535 = scalar_lea.vmem %s8, 1
    %v3536 = vld [vmem:[%s3535] sm:$0x1]
    %s3537 = scalar_lea.vmem %s9, 1
    %v3538 = vld [vmem:[%s3537] sm:$0x1]
    %v3539 = vsel %vm84, %v3533, 0.0
    %3540 = vadd.xlane.f32.xlu0 %v3539
    %v3541 = vpop.xlane.xlu0 %3540
    %v3542 = vsel %vm84, %v3534, 0.0
    %3543 = vadd.xlane.f32.xlu0 %v3542
    %v3544 = vpop.xlane.xlu0 %3543
    %v3545 = vmul.f32 %v3541, %v91
    %v3546 = vmul.f32 %v3544, %v91
    %v3547 = vsub.f32 %v3533, %v3545
    %v3548 = vsub.f32 %v3534, %v3546
    %v3549 = vmul.f32 %v3547, %v3547
    %v3550 = vmul.f32 %v3548, %v3548
    %v3551 = vsel %vm84, %v3549, 0.0
    %3552 = vadd.xlane.f32.xlu0 %v3551
    %v3553 = vpop.xlane.xlu0 %3552
    %v3554 = vsel %vm84, %v3550, 0.0
    %3555 = vadd.xlane.f32.xlu0 %v3554
    %v3556 = vpop.xlane.xlu0 %3555
    %v3557 = vmul.f32 %v3553, %v91
    %v3558 = vmul.f32 %v3556, %v91
    %v3559 = vadd.f32 %v3557, 1e-05
    %v3560 = vadd.f32 %v3558, 1e-05
    %v3561 = vrsqrt.pop %v3559
    %v3562 = vrsqrt.pop %v3560
    %v3563 = vmul.f32 %v3547, %v3561
    %v3564 = vmul.f32 %v3548, %v3562
    %v3566 = vlaneseq
    %v3567 = vshrl.u32 %v3566, 7
    %v3568 = vsub.s32 0, %v3567
    %v3569 = vrot.slane %v3536, %v3568
    %v3571 = vmul.f32 %v3563, %v3569
    %v3572 = vmul.f32 %v3564, %v3569
    %v3574 = vlaneseq
    %v3575 = vshrl.u32 %v3574, 7
    %v3576 = vsub.s32 0, %v3575
    %v3577 = vrot.slane %v3538, %v3576
    %v3579 = vadd.f32 %v3571, %v3577
    %v3580 = vadd.f32 %v3572, %v3577
    %s3581 = scalar_lea.vmem %s10, 32
    %v3582 = vld [vmem:[%s3581] sm:$0xff]
    %v3583 = vld [vmem:[%s3581 + $0x8] sm:$0xff]
    %v3584 = vld [vmem:[%s3581 + $0x10] sm:$0xff]
    %v3585 = vld [vmem:[%s3581 + $0x18] sm:$0xff]
    %s3586 = scalar_lea.vmem %s11, 1
    %v3587 = vld [vmem:[%s3586] sm:$0x1]
    %v3589 = vlaneseq
    %v3590 = vshrl.u32 %v3589, 7
    %v3591 = vsub.s32 0, %v3590
    %v3592 = vrot.slane %v3587, %v3591
    %v3595 = vsel %vm84, %v3579, 0
    %v3598 = vsel %vm84, %v3580, 0
    %3600 = vmatprep.subr.mxu0 0.0
    %3601 = vmatpush1.msra.mxu0 %v3582
    %3602 = vmatprep.subr.mxu0 0.0
    %3603 = vmatpush1.msra.mxu0 %v3583
    %3604 = vmatprep.subr.mxu0 0.0
    %3605 = vmatpush1.msra.mxu0 %v3584
    %3606 = vmatprep.subr.mxu0 0.0
    %3607 = vmatpush1.msra.mxu0 %v3585
    %3608 = vmatprep.subr.mxu0 0.0
    %3609 = vmatpush1.msra.mxu0 0.0
    %3610 = vmatprep.subr.mxu0 0.0
    %3611 = vmatpush1.msra.mxu0 0.0
    %3612 = vmatprep.subr.mxu0 0.0
    %3613 = vmatpush1.msra.mxu0 0.0
    %3614 = vmatprep.subr.mxu0 0.0
    %3615 = vmatpush1.msra.mxu0 0.0
    %3616 = vmatprep.subr.mxu0 0.0
    %3617 = vmatpush1.msra.mxu0 0.0
    %3618 = vmatprep.subr.mxu0 0.0
    %3619 = vmatpush1.msra.mxu0 0.0
    %3620 = vmatprep.subr.mxu0 0.0
    %3621 = vmatpush1.msra.mxu0 0.0
    %3622 = vmatprep.subr.mxu0 0.0
    %3623 = vmatpush1.msra.mxu0 0.0
    %3624 = vmatprep.subr.mxu0 0.0
    %3625 = vmatpush1.msra.mxu0 0.0
    %3626 = vmatprep.subr.mxu0 0.0
    %3627 = vmatpush1.msra.mxu0 0.0
    %3628 = vmatprep.subr.mxu0 0.0
    %3629 = vmatpush1.msra.mxu0 0.0
    %3630 = vmatprep.subr.mxu0 0.0
    %3631 = vmatpush1.msra.mxu0 0.0
    %3632 = vmatprep.subr.mxu0 0.0
    %3633 = vmatpush1.msra.mxu0 0.0
    %3634 = vmatprep.subr.mxu0 0.0
    %3635 = vmatpush1.msra.mxu0 0.0
    %3636 = vmatprep.subr.mxu0 0.0
    %3637 = vmatpush1.msra.mxu0 0.0
    %3638 = vmatprep.subr.mxu0 0.0
    %3639 = vmatpush1.msra.mxu0 0.0
    %3640 = vmatprep.subr.mxu0 0.0
    %3641 = vmatpush1.msra.mxu0 0.0
    %3642 = vmatprep.subr.mxu0 0.0
    %3643 = vmatpush1.msra.mxu0 0.0
    %3644 = vmatprep.subr.mxu0 0.0
    %3645 = vmatpush1.msra.mxu0 0.0
    %3646 = vmatprep.subr.mxu0 0.0
    %3647 = vmatpush1.msra.mxu0 0.0
    %3648 = vmatprep.subr.mxu0 0.0
    %3649 = vmatpush1.msra.mxu0 0.0
    %3650 = vmatprep.subr.mxu0 0.0
    %3651 = vmatpush1.msra.mxu0 0.0
    %3652 = vmatprep.subr.mxu0 0.0
    %3653 = vmatpush1.msra.mxu0 0.0
    %3654 = vmatprep.subr.mxu0 0.0
    %3655 = vmatpush1.msra.mxu0 0.0
    %3656 = vmatprep.subr.mxu0 0.0
    %3657 = vmatpush1.msra.mxu0 0.0
    %3658 = vmatprep.subr.mxu0 0.0
    %3659 = vmatpush1.msra.mxu0 0.0
    %3660 = vmatprep.subr.mxu0 0.0
    %3661 = vmatpush1.msra.mxu0 0.0
    %3662 = vmatprep.subr.mxu0 0.0
    %3663 = vmatpush1.msra.mxu0 0.0
    %3664 = vmatprep.mubr.f32.mxu0 0.0
    %3665 = vmatmul.mubr.f32.gmra.mrb[0].mxu0 %v3595
    %v3666 = vpop.f32.mrb[0].mxu0
    %v3667 = vadd.f32 %v3592, %v3666
    %v3668 = vpop.f32.mrb[0].mxu0
    %3669 = vmatprep.mubr.f32.mxu0 0.0
    %3670 = vmatmul.mubr.f32.gmra.mrb[0].mxu0 %v3598
    %v3671 = vpop.f32.mrb[0].mxu0
    %v3672 = vadd.f32 %v3592, %v3671
    %v3673 = vpop.f32.mrb[0].mxu0
    %3674 = vdwg.mxu0
    %v3675 = vmul.f32 %v3667, 0.5
    %v3676 = vmul.f32 %v3672, 0.5
    %v3677 = vmul.f32 %v3667, 0.044715
    %v3678 = vmul.f32 %v3672, 0.044715
    %v3679 = vmul.f32 %v3677, %v3667
    %v3680 = vmul.f32 %v3678, %v3672
    %v3681 = vmul.f32 %v3679, %v3667
    %v3682 = vmul.f32 %v3680, %v3672
    %v3683 = vadd.f32 %v3667, %v3681
    %v3684 = vadd.f32 %v3672, %v3682
    %v3685 = vmul.f32 %v3683, 0.7978846
    %v3686 = vmul.f32 %v3684, 0.7978846
    %v3687 = vtanh.pop %v3685
    %v3688 = vtanh.pop %v3686
    %v3689 = vadd.f32 %v3687, 1.0
    %v3690 = vadd.f32 %v3688, 1.0
    %v3691 = vmul.f32 %v3675, %v3689
    %v3692 = vmul.f32 %v3676, %v3690
    %s3693 = scalar_lea.vmem %s12, 128
    %v3694 = vld [vmem:[%s3693] sm:$0xff]
    %v3695 = vld [vmem:[%s3693 + $0x8] sm:$0xff]
    %v3696 = vld [vmem:[%s3693 + $0x10] sm:$0xff]
    %v3697 = vld [vmem:[%s3693 + $0x18] sm:$0xff]
    %v3698 = vld [vmem:[%s3693 + $0x20] sm:$0xff]
    %v3699 = vld [vmem:[%s3693 + $0x28] sm:$0xff]
    %v3700 = vld [vmem:[%s3693 + $0x30] sm:$0xff]
    %v3701 = vld [vmem:[%s3693 + $0x38] sm:$0xff]
    %v3702 = vld [vmem:[%s3693 + $0x40] sm:$0xff]
    %v3703 = vld [vmem:[%s3693 + $0x48] sm:$0xff]
    %v3704 = vld [vmem:[%s3693 + $0x50] sm:$0xff]
    %v3705 = vld [vmem:[%s3693 + $0x58] sm:$0xff]
    %v3706 = vld [vmem:[%s3693 + $0x60] sm:$0xff]
    %v3707 = vld [vmem:[%s3693 + $0x68] sm:$0xff]
    %v3708 = vld [vmem:[%s3693 + $0x70] sm:$0xff]
    %v3709 = vld [vmem:[%s3693 + $0x78] sm:$0xff]
    %s3710 = scalar_lea.vmem %s13, 1
    %v3711 = vld [vmem:[%s3710] sm:$0x1]
    %v3713 = vlaneseq
    %v3714 = vshrl.u32 %v3713, 7
    %v3715 = vsub.s32 0, %v3714
    %v3716 = vrot.slane %v3711, %v3715
    %3718 = vmatprep.subr.mxu0 0.0
    %3719 = vmatpush1.msra.mxu0 %v3694
    %3720 = vmatprep.subr.mxu0 0.0
    %3721 = vmatpush1.msra.mxu0 %v3695
    %3722 = vmatprep.subr.mxu0 0.0
    %3723 = vmatpush1.msra.mxu0 %v3696
    %3724 = vmatprep.subr.mxu0 0.0
    %3725 = vmatpush1.msra.mxu0 %v3697
    %3726 = vmatprep.subr.mxu0 0.0
    %3727 = vmatpush1.msra.mxu0 %v3698
    %3728 = vmatprep.subr.mxu0 0.0
    %3729 = vmatpush1.msra.mxu0 %v3699
    %3730 = vmatprep.subr.mxu0 0.0
    %3731 = vmatpush1.msra.mxu0 %v3700
    %3732 = vmatprep.subr.mxu0 0.0
    %3733 = vmatpush1.msra.mxu0 %v3701
    %3734 = vmatprep.subr.mxu0 0.0
    %3735 = vmatpush1.msra.mxu0 %v3702
    %3736 = vmatprep.subr.mxu0 0.0
    %3737 = vmatpush1.msra.mxu0 %v3703
    %3738 = vmatprep.subr.mxu0 0.0
    %3739 = vmatpush1.msra.mxu0 %v3704
    %3740 = vmatprep.subr.mxu0 0.0
    %3741 = vmatpush1.msra.mxu0 %v3705
    %3742 = vmatprep.subr.mxu0 0.0
    %3743 = vmatpush1.msra.mxu0 %v3706
    %3744 = vmatprep.subr.mxu0 0.0
    %3745 = vmatpush1.msra.mxu0 %v3707
    %3746 = vmatprep.subr.mxu0 0.0
    %3747 = vmatpush1.msra.mxu0 %v3708
    %3748 = vmatprep.subr.mxu0 0.0
    %3749 = vmatpush1.msra.mxu0 %v3709
    %3750 = vmatprep.subr.mxu0 0.0
    %3751 = vmatpush1.msra.mxu0 0.0
    %3752 = vmatprep.subr.mxu0 0.0
    %3753 = vmatpush1.msra.mxu0 0.0
    %3754 = vmatprep.subr.mxu0 0.0
    %3755 = vmatpush1.msra.mxu0 0.0
    %3756 = vmatprep.subr.mxu0 0.0
    %3757 = vmatpush1.msra.mxu0 0.0
    %3758 = vmatprep.subr.mxu0 0.0
    %3759 = vmatpush1.msra.mxu0 0.0
    %3760 = vmatprep.subr.mxu0 0.0
    %3761 = vmatpush1.msra.mxu0 0.0
    %3762 = vmatprep.subr.mxu0 0.0
    %3763 = vmatpush1.msra.mxu0 0.0
    %3764 = vmatprep.subr.mxu0 0.0
    %3765 = vmatpush1.msra.mxu0 0.0
    %3766 = vmatprep.subr.mxu0 0.0
    %3767 = vmatpush1.msra.mxu0 0.0
    %3768 = vmatprep.subr.mxu0 0.0
    %3769 = vmatpush1.msra.mxu0 0.0
    %3770 = vmatprep.subr.mxu0 0.0
    %3771 = vmatpush1.msra.mxu0 0.0
    %3772 = vmatprep.subr.mxu0 0.0
    %3773 = vmatpush1.msra.mxu0 0.0
    %3774 = vmatprep.subr.mxu0 0.0
    %3775 = vmatpush1.msra.mxu0 0.0
    %3776 = vmatprep.subr.mxu0 0.0
    %3777 = vmatpush1.msra.mxu0 0.0
    %3778 = vmatprep.subr.mxu0 0.0
    %3779 = vmatpush1.msra.mxu0 0.0
    %3780 = vmatprep.subr.mxu0 0.0
    %3781 = vmatpush1.msra.mxu0 0.0
    %3782 = vmatprep.mubr.f32.mxu0 0.0
    %3783 = vmatmul.mubr.f32.gmra.mrb[0].mxu0 %v3691
    %v3784 = vpop.f32.mrb[0].mxu0
    %v3785 = vadd.f32 %v3716, %v3784
    %v3786 = vpop.f32.mrb[0].mxu0
    %3787 = vmatprep.mubr.f32.mxu0 0.0
    %3788 = vmatmul.mubr.f32.gmra.mrb[0].mxu0 %v3692
    %v3789 = vpop.f32.mrb[0].mxu0
    %v3790 = vadd.f32 %v3716, %v3789
    %v3791 = vpop.f32.mrb[0].mxu0
    %3792 = vdwg.mxu0
    %v3793 = vadd.f32 %v3533, %v3785
    %v3794 = vadd.f32 %v3534, %v3790
    %v3795 = vld [vmem:[%s14] sm:$0x1]
    %v3796 = vld [vmem:[%s15] sm:$0x1]
    %v3797 = vsel %vm84, %v3793, 0.0
    %3798 = vadd.xlane.f32.xlu0 %v3797
    %v3799 = vpop.xlane.xlu0 %3798
    %v3800 = vsel %vm84, %v3794, 0.0
    %3801 = vadd.xlane.f32.xlu0 %v3800
    %v3802 = vpop.xlane.xlu0 %3801
    %v3803 = vmul.f32 %v3799, %v91
    %v3804 = vmul.f32 %v3802, %v91
    %v3805 = vsub.f32 %v3793, %v3803
    %v3806 = vsub.f32 %v3794, %v3804
    %v3807 = vmul.f32 %v3805, %v3805
    %v3808 = vmul.f32 %v3806, %v3806
    %v3809 = vsel %vm84, %v3807, 0.0
    %3810 = vadd.xlane.f32.xlu0 %v3809
    %v3811 = vpop.xlane.xlu0 %3810
    %v3812 = vsel %vm84, %v3808, 0.0
    %3813 = vadd.xlane.f32.xlu0 %v3812
    %v3814 = vpop.xlane.xlu0 %3813
    %v3815 = vmul.f32 %v3811, %v91
    %v3816 = vmul.f32 %v3814, %v91
    %v3817 = vadd.f32 %v3815, 1e-05
    %v3818 = vadd.f32 %v3816, 1e-05
    %v3819 = vrsqrt.pop %v3817
    %v3820 = vrsqrt.pop %v3818
    %v3821 = vmul.f32 %v3805, %v3819
    %v3822 = vmul.f32 %v3806, %v3820
    %v3824 = vlaneseq
    %v3825 = vshrl.u32 %v3824, 7
    %v3826 = vsub.s32 0, %v3825
    %v3827 = vrot.slane %v3795, %v3826
    %v3829 = vmul.f32 %v3821, %v3827
    %v3830 = vmul.f32 %v3822, %v3827
    %v3832 = vlaneseq
    %v3833 = vshrl.u32 %v3832, 7
    %v3834 = vsub.s32 0, %v3833
    %v3835 = vrot.slane %v3796, %v3834
    %v3837 = vadd.f32 %v3829, %v3835
    %v3838 = vadd.f32 %v3830, %v3835
    %3839 = vst.msk [vmem:[#allocation2] sm:$0xff] %vm84, %v3837
    %3840 = vst.msk [vmem:[#allocation2 + $0x8] sm:$0xff] %vm84, %v3838
    %v3841 = vld [vmem:[%s16] sm:$0xff]
    %v3842 = vld [vmem:[%s16 + $0x8] sm:$0xff]
    %v3843 = vld [vmem:[%s16 + $0x10] sm:$0xff]
    %v3844 = vld [vmem:[%s16 + $0x18] sm:$0xff]
    %v3846 = vsel %vm84, %v3837, 0
    %v3849 = vsel %vm84, %v3838, 0
    %3851 = vmatprep.subr.mxu0 0.0
    %3852 = vmatpush1.msra.mxu0 %v3841
    %3853 = vmatprep.subr.mxu0 0.0
    %3854 = vmatpush1.msra.mxu0 %v3842
    %3855 = vmatprep.subr.mxu0 0.0
    %3856 = vmatpush1.msra.mxu0 %v3843
    %3857 = vmatprep.subr.mxu0 0.0
    %3858 = vmatpush1.msra.mxu0 %v3844
    %3859 = vmatprep.subr.mxu0 0.0
    %3860 = vmatpush1.msra.mxu0 0.0
    %3861 = vmatprep.subr.mxu0 0.0
    %3862 = vmatpush1.msra.mxu0 0.0
    %3863 = vmatprep.subr.mxu0 0.0
    %3864 = vmatpush1.msra.mxu0 0.0
    %3865 = vmatprep.subr.mxu0 0.0
    %3866 = vmatpush1.msra.mxu0 0.0
    %3867 = vmatprep.subr.mxu0 0.0
    %3868 = vmatpush1.msra.mxu0 0.0
    %3869 = vmatprep.subr.mxu0 0.0
    %3870 = vmatpush1.msra.mxu0 0.0
    %3871 = vmatprep.subr.mxu0 0.0
    %3872 = vmatpush1.msra.mxu0 0.0
    %3873 = vmatprep.subr.mxu0 0.0
    %3874 = vmatpush1.msra.mxu0 0.0
    %3875 = vmatprep.subr.mxu0 0.0
    %3876 = vmatpush1.msra.mxu0 0.0
    %3877 = vmatprep.subr.mxu0 0.0
    %3878 = vmatpush1.msra.mxu0 0.0
    %3879 = vmatprep.subr.mxu0 0.0
    %3880 = vmatpush1.msra.mxu0 0.0
    %3881 = vmatprep.subr.mxu0 0.0
    %3882 = vmatpush1.msra.mxu0 0.0
    %3883 = vmatprep.subr.mxu0 0.0
    %3884 = vmatpush1.msra.mxu0 0.0
    %3885 = vmatprep.subr.mxu0 0.0
    %3886 = vmatpush1.msra.mxu0 0.0
    %3887 = vmatprep.subr.mxu0 0.0
    %3888 = vmatpush1.msra.mxu0 0.0
    %3889 = vmatprep.subr.mxu0 0.0
    %3890 = vmatpush1.msra.mxu0 0.0
    %3891 = vmatprep.subr.mxu0 0.0
    %3892 = vmatpush1.msra.mxu0 0.0
    %3893 = vmatprep.subr.mxu0 0.0
    %3894 = vmatpush1.msra.mxu0 0.0
    %3895 = vmatprep.subr.mxu0 0.0
    %3896 = vmatpush1.msra.mxu0 0.0
    %3897 = vmatprep.subr.mxu0 0.0
    %3898 = vmatpush1.msra.mxu0 0.0
    %3899 = vmatprep.subr.mxu0 0.0
    %3900 = vmatpush1.msra.mxu0 0.0
    %3901 = vmatprep.subr.mxu0 0.0
    %3902 = vmatpush1.msra.mxu0 0.0
    %3903 = vmatprep.subr.mxu0 0.0
    %3904 = vmatpush1.msra.mxu0 0.0
    %3905 = vmatprep.subr.mxu0 0.0
    %3906 = vmatpush1.msra.mxu0 0.0
    %3907 = vmatprep.subr.mxu0 0.0
    %3908 = vmatpush1.msra.mxu0 0.0
    %3909 = vmatprep.subr.mxu0 0.0
    %3910 = vmatpush1.msra.mxu0 0.0
    %3911 = vmatprep.subr.mxu0 0.0
    %3912 = vmatpush1.msra.mxu0 0.0
    %3913 = vmatprep.subr.mxu0 0.0
    %3914 = vmatpush1.msra.mxu0 0.0
    %3915 = vmatprep.mubr.f32.mxu0 0.0
    %3916 = vmatmul.mubr.f32.gmra.mrb[0].mxu0 %v3846
    %v3917 = vpop.f32.mrb[0].mxu0
    %v3918 = vadd.f32 0.0, %v3917
    %v3919 = vpop.f32.mrb[0].mxu0
    %3920 = vmatprep.mubr.f32.mxu0 0.0
    %3921 = vmatmul.mubr.f32.gmra.mrb[0].mxu0 %v3849
    %v3922 = vpop.f32.mrb[0].mxu0
    %v3923 = vadd.f32 0.0, %v3922
    %v3924 = vpop.f32.mrb[0].mxu0
    %3925 = vdwg.mxu0
    %3926 = vst [vmem:[#allocation4] sm:$0xff] %v3918
    %3927 = vst [vmem:[#allocation4 + $0x8] sm:$0xff] %v3923
    // Predicated region
    $region70: #{custom_gpt2_forward.1} parent=1 // pred_check
      _
    $region71: #{custom_gpt2_forward.1} parent=1 // pred_check_branch
      %3929 = sbr.rel (0) target = $region73
    $region72: #{custom_gpt2_forward.1} parent=1 // pred_region
      %s3931 = ssub.s32 256, 256
      %3932 = vsyncadd [#allocation3], %s3931
      %s3933 = sshll.u32 [#allocation2], 4
      %s3934 = int_to_ptr.vmem [resolvable:$true] %s3933
      %3939 = dma.vmem_to_hbm [thread:$0]  %s3934, 256, %s17, [#allocation3], 128, 128, 8
    $region73: #{custom_gpt2_forward.1} parent=1 // pred_fallthru
      _
    // Predicated region
    $region74: #{custom_gpt2_forward.1} parent=1 // pred_check
      _
    $region75: #{custom_gpt2_forward.1} parent=1 // pred_check_branch
      %3941 = sbr.rel (0) target = $region77
    $region76: #{custom_gpt2_forward.1} parent=1 // pred_region
      %s3943 = ssub.s32 256, 256
      %3944 = vsyncadd [#allocation5], %s3943
      %s3945 = sshll.u32 [#allocation4], 4
      %s3946 = int_to_ptr.vmem [resolvable:$true] %s3945
      %3951 = dma.vmem_to_hbm [thread:$0]  %s3946, 256, %s18, [#allocation5], 128, 128, 8
    $region77: #{custom_gpt2_forward.1} parent=1 // pred_fallthru
      _
    // Predicated region
    $region78: #{custom_gpt2_forward.1} parent=1 // pred_check
      _
    $region79: #{custom_gpt2_forward.1} parent=1 // pred_check_branch
      %3953 = sbr.rel (0) target = $region81
    $region80: #{custom_gpt2_forward.1} parent=1 // pred_region
      %3954 = dma.done [#allocation3], 256
    $region81: #{custom_gpt2_forward.1} parent=1 // pred_fallthru
      _
    // Predicated region
    $region82: #{custom_gpt2_forward.1} parent=1 // pred_check
      _
    $region83: #{custom_gpt2_forward.1} parent=1 // pred_check_branch
      %3956 = sbr.rel (0) target = $region85
    $region84: #{custom_gpt2_forward.1} parent=1 // pred_region
      %3957 = dma.done [#allocation5], 256
    $region85: #{custom_gpt2_forward.1} parent=1 // pred_fallthru
      _
    %3958 = vsyncpa [#allocation3], 1
    %3959 = vsyncpa [#allocation5], 1

</llo_original>
